<compile_context>
chip_gen: v7x
topology: tpu7x:2x2x1
jax: 0.10.0
libtpu: 0.0.40
codegen_flags: <defaults>
</compile_context>

<pallas_src>
import functools

import jax
import jax.numpy as jnp
from jax.experimental import pallas as pl
from jax.experimental.pallas import tpu as pltpu

_VMEM = pl.BlockSpec(memory_space=pltpu.MemorySpace.VMEM)


# ----------------------------------------------------------------------------
# The single fused kernel (no grid: everything VMEM/vreg resident)
# ----------------------------------------------------------------------------
def _fused_forward_kernel(
    x_ref,                      # (B*H, W*Cin)            compute dtype
    t1_ref, pw1_ref, ph1_ref,   # banded conv1 / col-pool / row-pool(+boundary)
    t2_ref, pw2_ref, ph2_ref,
    t3_ref,
    rsum_ref,                   # (B, B*Hp2-2)  f32   per-image valid-row sum
    w1c_ref,                    # (Wo3*c3, hidden+c3) f32  [w_l1 tiled | chan mean]
    w2_ref,                     # (hidden, n_out) f32
    vec_ref,                    # (7, max_w) f32  packed small vectors
    out_ref,                    # (B, out_pad) f32  [pi | mu | sigma | feats | 0]
    pool1_ref, pool2_ref,       # VMEM scratch, compute dtype
    *, n_mixtures, out_dim, eps):
  f32 = jnp.float32
  cdt = t1_ref.dtype            # MXU operand dtype (bf16 fast path / f32 check path)
  cols1, cols2, cols3 = t1_ref.shape[2], t2_ref.shape[2], t3_ref.shape[2]
  hidden = w2_ref.shape[0]
  n_out = w2_ref.shape[1]
  c3 = w1c_ref.shape[1] - hidden
  B = out_ref.shape[0]

  def conv3x3(src_ref, t_ref, bias, relu):
    # valid 3x3 conv on the batch-stacked (rows, W*Cin) slab: 3 banded matmuls,
    # f32 accumulation.  Output rows that straddle an image boundary are garbage
    # and get dropped by the selection matmuls downstream.
    rows = src_ref.shape[0] - 2
    acc = jnp.dot(src_ref[pl.ds(0, rows), :], t_ref[0], preferred_element_type=f32)
    acc = acc + jnp.dot(src_ref[pl.ds(1, rows), :], t_ref[1], preferred_element_type=f32)
    acc = acc + jnp.dot(src_ref[pl.ds(2, rows), :], t_ref[2], preferred_element_type=f32)
    y = acc + bias
    return jnp.maximum(y, 0.0) if relu else y

  def maxpool2x2(y, pw_ref, ph_ref):
    # 2x2 / stride-2 max pool as constant 0/1 selection matmuls; the row stage
    # also compacts the batch-stacked layout (drops cross-image garbage rows).
    yc = y.astype(cdt)
    yw = jnp.maximum(
        jnp.dot(yc, pw_ref[0], preferred_element_type=f32),
        jnp.dot(yc, pw_ref[1], preferred_element_type=f32))
    ywc = yw.astype(cdt)
    return jnp.maximum(
        jnp.dot(ph_ref[0], ywc, preferred_element_type=f32),
        jnp.dot(ph_ref[1], ywc, preferred_element_type=f32))

  # ---- conv trunk: one batch-wide matmul chain ----
  y1 = conv3x3(x_ref, t1_ref, vec_ref[0:1, :cols1], relu=True)
  pool1_ref[...] = maxpool2x2(y1, pw1_ref, ph1_ref).astype(pool1_ref.dtype)
  y2 = conv3x3(pool1_ref, t2_ref, vec_ref[1:2, :cols2], relu=True)
  pool2_ref[...] = maxpool2x2(y2, pw2_ref, ph2_ref).astype(pool2_ref.dtype)
  y3 = conv3x3(pool2_ref, t3_ref, vec_ref[2:3, :cols3], relu=False)  # (B*Hp2-2, Wo3*c3) f32

  # ---- global spatial mean + first Linear folded into constant matrices ----
  s = jnp.dot(rsum_ref[...], y3, preferred_element_type=f32)      # (B, Wo3*c3)
  hf = jnp.dot(s, w1c_ref[...], preferred_element_type=f32)       # (B, hidden + c3)
  feats = hf[:, hidden:]                                          # trunk features (mean)
  h = hf[:, :hidden] + vec_ref[3:4, :hidden]

  # BatchNorm1d with batch statistics (training-mode semantics), f32
  mean = jnp.mean(h, axis=0, keepdims=True)
  var = jnp.mean(jnp.square(h - mean), axis=0, keepdims=True)     # biased, like torch
  h = (h - mean) * jax.lax.rsqrt(var + eps)
  h = h * vec_ref[4:5, :hidden] + vec_ref[5:6, :hidden]
  h = jnp.maximum(h, 0.0)
  y = jnp.dot(h, w2_ref[...], preferred_element_type=f32) + vec_ref[6:7, :n_out]

  # MDN head: [pi | mu | sigma], softmax(pi), exp(sigma)   (see TODO above)
  k = n_mixtures
  pi_logits = y[:, :k]
  m = jnp.max(pi_logits, axis=-1, keepdims=True)
  e = jnp.exp(pi_logits - m)
  pi = e / jnp.sum(e, axis=-1, keepdims=True)
  mu = y[:, k:k + k * out_dim]
  sigma = jnp.exp(y[:, k + k * out_dim:k * (2 + out_dim)])

  # single lane-dense packed output
  parts = [pi, mu, sigma, feats]
  used = 2 * k + k * out_dim + c3
  pad = out_ref.shape[1] - used
  if pad > 0:
    parts.append(jnp.zeros((B, pad), f32))
  out_ref[...] = jnp.concatenate(parts, axis=1)


# ----------------------------------------------------------------------------
# Weight preprocessing (done once, outside the hot path)
# ----------------------------------------------------------------------------
def prepare_params(params, c_in, hw, batch_size, compute_dtype=jnp.bfloat16):
  del c_in  # implied by the conv1 weight shape
  H, W = hw
  B = batch_size
  f32 = jnp.float32
  c1 = params["w_c1"].shape[3]
  c2 = params["w_c2"].shape[3]
  c3 = params["w_c3"].shape[3]
  hidden = params["w_l1"].shape[1]
  n_out = params["w_l2"].shape[1]
  Ho1, Wo1 = H - 2, W - 2
  Hp1, Wp1 = Ho1 // 2, Wo1 // 2
  Ho2, Wo2 = Hp1 - 2, Wp1 - 2
  Hp2, Wp2 = Ho2 // 2, Wo2 // 2
  Ho3, Wo3 = Hp2 - 2, Wp2 - 2
  assert Ho3 >= 1 and Wo3 >= 1, "input spatial size too small for the conv trunk"

  def banded(w, width):
    # w: (3, 3, Cin, Cout) -> (3, width*Cin, (width-2)*Cout) banded weight so that
    #   Y += X[kh:kh+rows, :] @ T[kh]   equals the valid 3x3 conv on the
    # (rows, width*Cin)-flattened image (output columns ordered (j, cout)).
    _, _, cin, cout = w.shape
    wo = width - 2
    t = jnp.zeros((3, width * cin, wo * cout), f32)
    for kh in range(3):
      wk = w[kh].reshape(3 * cin, cout)          # rows ordered (kw, cin)
      for j in range(wo):
        t = t.at[kh, j * cin:(j + 3) * cin, j * cout:(j + 1) * cout].set(wk)
    return t.astype(compute_dtype)

  def pool_w(wo, c):
    # column-pair selection: (X @ P[0])[:, j*c+ch] = X[:, 2j*c+ch], P[1] -> 2j+1
    wp = wo // 2
    idx = jnp.arange(wp * c)
    j, ch = idx // c, idx % c
    pe = jnp.zeros((wo * c, wp * c), f32).at[2 * j * c + ch, idx].set(1.0)
    po = jnp.zeros((wo * c, wp * c), f32).at[(2 * j + 1) * c + ch, idx].set(1.0)
    return jnp.stack([pe, po]).astype(compute_dtype)

  def pool_h(h_block, hp):
    # even/odd row-pair selectors over the batch-stacked conv output; they pick
    # only valid in-image pairs, so cross-image garbage rows are dropped here.
    rows_in = B * h_block - 2
    out = jnp.arange(B * hp)
    b, i = out // hp, out % hp
    pe = jnp.zeros((B * hp, rows_in), f32).at[out, b * h_block + 2 * i].set(1.0)
    po = jnp.zeros((B * hp, rows_in), f32).at[out, b * h_block + 2 * i + 1].set(1.0)
    return jnp.stack([pe, po]).astype(compute_dtype)

  # per-image row sum over the Ho3 valid conv3 output rows (f32: head precision)
  rows_in3 = B * Hp2 - 2
  bi = jnp.repeat(jnp.arange(B), Ho3)
  ci = (jnp.arange(B)[:, None] * Hp2 + jnp.arange(Ho3)[None, :]).reshape(-1)
  rsum = jnp.zeros((B, rows_in3), f32).at[bi, ci].set(1.0)

  # spatial mean + first Linear folded into one (Wo3*c3, hidden+c3) matrix:
  #   columns [:hidden] -> pre-BN hidden activations (== mean(conv3) @ w_l1)
  #   columns [hidden:] -> trunk features (== mean(conv3)), kept for inspection
  scale = 1.0 / (Ho3 * Wo3)
  w1_eff = jnp.tile(params["w_l1"].astype(f32), (Wo3, 1)) * scale
  c_feat = jnp.tile(jnp.eye(c3, dtype=f32), (Wo3, 1)) * scale
  w1c = jnp.concatenate([w1_eff, c_feat], axis=1)

  # all small per-channel / per-feature vectors packed into one (7, max_w) slab
  vw = max(Wo1 * c1, Wo2 * c2, Wo3 * c3, hidden, n_out)

  def row(v):
    v = v.astype(f32)
    return jnp.pad(v, (0, vw - v.shape[0]))

  vecs = jnp.stack([row(jnp.tile(params["b_c1"], Wo1)),
                    row(jnp.tile(params["b_c2"], Wo2)),
                    row(jnp.tile(params["b_c3"], Wo3)),
                    row(params["b_l1"]),
                    row(params["bn_gamma"]),
                    row(params["bn_beta"]),
                    row(params["b_l2"])])

  return {
      "t1": banded(params["w_c1"], W),
      "pw1": pool_w(Wo1, c1), "ph1": pool_h(H, Hp1),
      "t2": banded(params["w_c2"], Wp1),
      "pw2": pool_w(Wo2, c2), "ph2": pool_h(Hp1, Hp2),
      "t3": banded(params["w_c3"], Wp2),
      "rsum": rsum, "w1c": w1c,
      "w_l2": params["w_l2"].astype(f32),
      "vecs": vecs,
  }


# ----------------------------------------------------------------------------
# Full forward: one pallas_call
# ----------------------------------------------------------------------------
@functools.partial(jax.jit, static_argnames=("out_dim", "n_mixtures"))
def convolutional_mdn_forward(x_nchw, prep, *, out_dim, n_mixtures):
  B, Cin, H, W = x_nchw.shape
  assert prep["rsum"].shape[0] == B, "prepare_params batch_size must match x"
  cdt = prep["t1"].dtype
  # boundary relayout only: NCHW -> batch-stacked flattened NHWC slab
  x2 = jnp.transpose(x_nchw, (0, 2, 3, 1)).reshape(B * H, W * Cin).astype(cdt)

  hidden = prep["w_l2"].shape[0]
  c3 = prep["w1c"].shape[1] - hidden
  bhp1, wp1c1 = prep["ph1"].shape[1], prep["pw1"].shape[2]
  bhp2, wp2c2 = prep["ph2"].shape[1], prep["pw2"].shape[2]
  head_w = 2 * n_mixtures + n_mixtures * out_dim + c3
  out_pad = max(128, ((head_w + 127) // 128) * 128)

  kernel = functools.partial(_fused_forward_kernel, n_mixtures=n_mixtures,
                             out_dim=out_dim, eps=1e-5)
  packed = pl.pallas_call(
      kernel,
      out_shape=jax.ShapeDtypeStruct((B, out_pad), jnp.float32),
      in_specs=[_VMEM] * 12,
      out_specs=_VMEM,
      scratch_shapes=[
          pltpu.VMEM((bhp1, wp1c1), cdt),   # pooled activation 1 (batch-stacked)
          pltpu.VMEM((bhp2, wp2c2), cdt),   # pooled activation 2 (batch-stacked)
      ],
      compiler_params=pltpu.CompilerParams(vmem_limit_bytes=32 * 1024 * 1024),
  )(x2, prep["t1"], prep["pw1"], prep["ph1"], prep["t2"], prep["pw2"],
    prep["ph2"], prep["t3"], prep["rsum"], prep["w1c"], prep["w_l2"],
    prep["vecs"])

  k = n_mixtures
  pi = packed[:, :k]
  mu = packed[:, k:k + k * out_dim].reshape(B, k, out_dim)
  sigma = packed[:, k + k * out_dim:k * (2 + out_dim)]
  feats = packed[:, k * (2 + out_dim):k * (2 + out_dim) + c3]
  return pi, mu, sigma, feats


# ----------------------------------------------------------------------------
# Parameters (already in (kh, kw, Cin, Cout) / (in, out) layout)
# ----------------------------------------------------------------------------
def init_params(key, c_in, out_dim, n_mixtures):
  ks = jax.random.split(key, 10)
  n_out = (out_dim + 2) * n_mixtures
  return {
      "w_c1": 0.1 * jax.random.normal(ks[0], (3, 3, c_in, 16), jnp.float32),
      "b_c1": 0.1 * jax.random.normal(ks[1], (16,), jnp.float32),
      "w_c2": 0.1 * jax.random.normal(ks[2], (3, 3, 16, 32), jnp.float32),
      "b_c2": 0.1 * jax.random.normal(ks[3], (32,), jnp.float32),
      "w_c3": 0.1 * jax.random.normal(ks[4], (3, 3, 32, 64), jnp.float32),
      "b_c3": 0.1 * jax.random.normal(ks[5], (64,), jnp.float32),
      "w_l1": 0.1 * jax.random.normal(ks[6], (64, 32), jnp.float32),
      "b_l1": 0.1 * jax.random.normal(ks[7], (32,), jnp.float32),
      "bn_gamma": jnp.ones((32,), jnp.float32),
      "bn_beta": jnp.zeros((32,), jnp.float32),
      "w_l2": 0.1 * jax.random.normal(ks[8], (32, n_out), jnp.float32),
      "b_l2": 0.1 * jax.random.normal(ks[9], (n_out,), jnp.float32),
  }


# ----------------------------------------------------------------------------
# Pure-JAX reference (test glue only)
# ----------------------------------------------------------------------------
def _reference_forward(x_nchw, params, out_dim, n_mixtures):
  x = jnp.transpose(x_nchw, (0, 2, 3, 1))

  def conv(a, w, b):
    B, H, W, _ = a.shape
    Ho, Wo = H - 2, W - 2
    y = jnp.zeros((B, Ho, Wo, w.shape[3]), jnp.float32)
    for kh in range(3):
      for kw in range(3):
        y = y + jnp.einsum("bhwc,co->bhwo", a[:, kh:kh + Ho, kw:kw + Wo, :], w[kh, kw])
    return y + b

  def pool(a):
    B, H, W, C = a.shape
    Hp, Wp = H // 2, W // 2
    return jnp.max(a[:, :2 * Hp, :2 * Wp, :].reshape(B, Hp, 2, Wp, 2, C), axis=(2, 4))

  a = pool(jax.nn.relu(conv(x, params["w_c1"], params["b_c1"])))
  a = pool(jax.nn.relu(conv(a, params["w_c2"], params["b_c2"])))
  a = conv(a, params["w_c3"], params["b_c3"])
  f = jnp.mean(a, axis=(1, 2))
  h = f @ params["w_l1"] + params["b_l1"]
  mean = jnp.mean(h, axis=0, keepdims=True)
  var = jnp.mean((h - mean) ** 2, axis=0, keepdims=True)
  h = (h - mean) / jnp.sqrt(var + 1e-5) * params["bn_gamma"] + params["bn_beta"]
  h = jax.nn.relu(h)
  y = h @ params["w_l2"] + params["b_l2"]
  k = n_mixtures
  pi = jax.nn.softmax(y[:, :k], axis=-1)
  mu = y[:, k:k + k * out_dim].reshape(-1, k, out_dim)
  sigma = jnp.exp(y[:, k + k * out_dim:])
  return pi, mu, sigma, f


if __name__ == "__main__":
  key = jax.random.PRNGKey(0)
  B, C_in, H, W = 2, 4, 24, 24       # 24 -> conv 22 -> pool 11 -> conv 9 -> pool 4 -> conv 2
  out_dim, n_mixtures = 2, 3

  k_x, k_p = jax.random.split(key)
  x = jax.random.normal(k_x, (B, C_in, H, W), jnp.float32)   # NCHW like PyTorch
  params = init_params(k_p, C_in, out_dim, n_mixtures)

  # --- f32 compute path: validate trunk features and head outputs against a
  #     pure-JAX reference run at highest matmul precision.
  prep_f32 = prepare_params(params, C_in, (H, W), B, compute_dtype=jnp.float32)
  pi32, mu32, sg32, feats32 = jax.block_until_ready(
      convolutional_mdn_forward(x, prep_f32, out_dim=out_dim, n_mixtures=n_mixtures))
  with jax.default_matmul_precision("highest"):
    pi_r, mu_r, sg_r, feats_r = jax.block_until_ready(
        _reference_forward(x, params, out_dim, n_mixtures))
  assert bool(jnp.allclose(feats32, feats_r, atol=1e-2, rtol=1e-2))
  # head checks are loose: BatchNorm over a batch of 2 amplifies tiny differences
  assert bool(jnp.allclose(pi32, pi_r, atol=5e-2, rtol=5e-2))
  assert bool(jnp.allclose(mu32, mu_r, atol=5e-2, rtol=5e-2))
  assert bool(jnp.allclose(sg32, sg_r, atol=5e-2, rtol=5e-2))

  # --- bf16 compute path (MXU-native operands, f32 accumulation): the fast path.
  prep = prepare_params(params, C_in, (H, W), B, compute_dtype=jnp.bfloat16)
  pi, mu, sigma, feats = jax.block_until_ready(
      convolutional_mdn_forward(x, prep, out_dim=out_dim, n_mixtures=n_mixtures))

  assert pi.shape == (B, n_mixtures)
  assert mu.shape == (B, n_mixtures, out_dim)
  assert sigma.shape == (B, n_mixtures)
  assert feats.shape == (B, 64)
  assert bool(jnp.all(jnp.isfinite(pi)) & jnp.all(jnp.isfinite(mu))
              & jnp.all(jnp.isfinite(sigma)) & jnp.all(jnp.isfinite(feats)))
  assert bool(jnp.all(jnp.abs(jnp.sum(pi, axis=-1) - 1.0) < 1e-5))
  assert bool(jnp.all(sigma > 0.0))
  print("KERNEL_OK")
</pallas_src>

<mosaic_0001>
module attributes {stable_mosaic.version = 11 : i64} {
  func.func @_fused_forward_kernel(%arg0: memref<48x96xf32, #tpu.memory_space<vmem>>, %arg1: memref<3x96x352xf32, #tpu.memory_space<vmem>>, %arg2: memref<2x352x176xf32, #tpu.memory_space<vmem>>, %arg3: memref<2x22x46xf32, #tpu.memory_space<vmem>>, %arg4: memref<3x176x288xf32, #tpu.memory_space<vmem>>, %arg5: memref<2x288x128xf32, #tpu.memory_space<vmem>>, %arg6: memref<2x8x20xf32, #tpu.memory_space<vmem>>, %arg7: memref<3x128x128xf32, #tpu.memory_space<vmem>>, %arg8: memref<2x6xf32, #tpu.memory_space<vmem>>, %arg9: memref<128x96xf32, #tpu.memory_space<vmem>>, %arg10: memref<32x12xf32, #tpu.memory_space<vmem>>, %arg11: memref<7x352xf32, #tpu.memory_space<vmem>>, %arg12: memref<2x128xf32, #tpu.memory_space<vmem>>, %arg13: memref<22x176xf32, #tpu.memory_space<vmem>>, %arg14: memref<8x128xf32, #tpu.memory_space<vmem>>) attributes {dimension_semantics = [], scalar_prefetch = 0 : i64, scratch_operands = 2 : i64, tpu.core_type = #tpu.core_type<tc>} {
    %c0 = arith.constant 0 : index
    %c0_0 = arith.constant 0 : index
    %0 = vector.load %arg11[%c0, %c0_0] : memref<7x352xf32, #tpu.memory_space<vmem>>, vector<1x352xf32>
    %c0_1 = arith.constant 0 : index
    %c0_2 = arith.constant 0 : index
    %1 = vector.load %arg0[%c0_1, %c0_2] : memref<48x96xf32, #tpu.memory_space<vmem>>, vector<46x96xf32>
    %c0_3 = arith.constant 0 : index
    %c0_4 = arith.constant 0 : index
    %c0_5 = arith.constant 0 : index
    %2 = vector.load %arg1[%c0_3, %c0_4, %c0_5] : memref<3x96x352xf32, #tpu.memory_space<vmem>>, vector<1x96x352xf32>
    %3 = vector.shape_cast %2 : vector<1x96x352xf32> to vector<96x352xf32>
    %cst = arith.constant dense<0.000000e+00> : vector<46x352xf32>
    %4 = tpu.matmul %1, %3, %cst {dimension_numbers = #tpu.dot_dimension_numbers<[1], [0], [0], [1], [0, 0, 1, 1], [], []>} : vector<46x96xf32>, vector<96x352xf32>, vector<46x352xf32> -> vector<46x352xf32>
    %c1 = arith.constant 1 : index
    %c0_6 = arith.constant 0 : index
    %5 = vector.load %arg0[%c1, %c0_6] : memref<48x96xf32, #tpu.memory_space<vmem>>, vector<46x96xf32>
    %c1_7 = arith.constant 1 : index
    %c0_8 = arith.constant 0 : index
    %c0_9 = arith.constant 0 : index
    %6 = vector.load %arg1[%c1_7, %c0_8, %c0_9] : memref<3x96x352xf32, #tpu.memory_space<vmem>>, vector<1x96x352xf32>
    %7 = vector.shape_cast %6 : vector<1x96x352xf32> to vector<96x352xf32>
    %cst_10 = arith.constant dense<0.000000e+00> : vector<46x352xf32>
    %8 = tpu.matmul %5, %7, %cst_10 {dimension_numbers = #tpu.dot_dimension_numbers<[1], [0], [0], [1], [0, 0, 1, 1], [], []>} : vector<46x96xf32>, vector<96x352xf32>, vector<46x352xf32> -> vector<46x352xf32>
    %9 = arith.addf %4, %8 : vector<46x352xf32>
    %c2 = arith.constant 2 : index
    %c0_11 = arith.constant 0 : index
    %10 = vector.load %arg0[%c2, %c0_11] : memref<48x96xf32, #tpu.memory_space<vmem>>, vector<46x96xf32>
    %c2_12 = arith.constant 2 : index
    %c0_13 = arith.constant 0 : index
    %c0_14 = arith.constant 0 : index
    %11 = vector.load %arg1[%c2_12, %c0_13, %c0_14] : memref<3x96x352xf32, #tpu.memory_space<vmem>>, vector<1x96x352xf32>
    %12 = vector.shape_cast %11 : vector<1x96x352xf32> to vector<96x352xf32>
    %cst_15 = arith.constant dense<0.000000e+00> : vector<46x352xf32>
    %13 = tpu.matmul %10, %12, %cst_15 {dimension_numbers = #tpu.dot_dimension_numbers<[1], [0], [0], [1], [0, 0, 1, 1], [], []>} : vector<46x96xf32>, vector<96x352xf32>, vector<46x352xf32> -> vector<46x352xf32>
    %14 = arith.addf %9, %13 : vector<46x352xf32>
    %15 = vector.broadcast %0 : vector<1x352xf32> to vector<46x352xf32>
    %16 = arith.addf %14, %15 : vector<46x352xf32>
    %cst_16 = arith.constant 0.000000e+00 : f32
    %17 = vector.broadcast %cst_16 : f32 to vector<46x352xf32>
    %18 = arith.maximumf %16, %17 : vector<46x352xf32>
    %c0_17 = arith.constant 0 : index
    %c0_18 = arith.constant 0 : index
    %c0_19 = arith.constant 0 : index
    %19 = vector.load %arg2[%c0_17, %c0_18, %c0_19] : memref<2x352x176xf32, #tpu.memory_space<vmem>>, vector<1x352x176xf32>
    %20 = vector.shape_cast %19 : vector<1x352x176xf32> to vector<352x176xf32>
    %cst_20 = arith.constant dense<0.000000e+00> : vector<46x176xf32>
    %21 = tpu.matmul %18, %20, %cst_20 {dimension_numbers = #tpu.dot_dimension_numbers<[1], [0], [0], [1], [0, 0, 1, 1], [], []>} : vector<46x352xf32>, vector<352x176xf32>, vector<46x176xf32> -> vector<46x176xf32>
    %c1_21 = arith.constant 1 : index
    %c0_22 = arith.constant 0 : index
    %c0_23 = arith.constant 0 : index
    %22 = vector.load %arg2[%c1_21, %c0_22, %c0_23] : memref<2x352x176xf32, #tpu.memory_space<vmem>>, vector<1x352x176xf32>
    %23 = vector.shape_cast %22 : vector<1x352x176xf32> to vector<352x176xf32>
    %cst_24 = arith.constant dense<0.000000e+00> : vector<46x176xf32>
    %24 = tpu.matmul %18, %23, %cst_24 {dimension_numbers = #tpu.dot_dimension_numbers<[1], [0], [0], [1], [0, 0, 1, 1], [], []>} : vector<46x352xf32>, vector<352x176xf32>, vector<46x176xf32> -> vector<46x176xf32>
    %25 = arith.maximumf %21, %24 : vector<46x176xf32>
    %c0_25 = arith.constant 0 : index
    %c0_26 = arith.constant 0 : index
    %c0_27 = arith.constant 0 : index
    %26 = vector.load %arg3[%c0_25, %c0_26, %c0_27] : memref<2x22x46xf32, #tpu.memory_space<vmem>>, vector<1x22x46xf32>
    %27 = vector.shape_cast %26 : vector<1x22x46xf32> to vector<22x46xf32>
    %cst_28 = arith.constant dense<0.000000e+00> : vector<22x176xf32>
    %28 = tpu.matmul %27, %25, %cst_28 {dimension_numbers = #tpu.dot_dimension_numbers<[1], [0], [0], [1], [0, 0, 1, 1], [], []>} : vector<22x46xf32>, vector<46x176xf32>, vector<22x176xf32> -> vector<22x176xf32>
    %c1_29 = arith.constant 1 : index
    %c0_30 = arith.constant 0 : index
    %c0_31 = arith.constant 0 : index
    %29 = vector.load %arg3[%c1_29, %c0_30, %c0_31] : memref<2x22x46xf32, #tpu.memory_space<vmem>>, vector<1x22x46xf32>
    %30 = vector.shape_cast %29 : vector<1x22x46xf32> to vector<22x46xf32>
    %cst_32 = arith.constant dense<0.000000e+00> : vector<22x176xf32>
    %31 = tpu.matmul %30, %25, %cst_32 {dimension_numbers = #tpu.dot_dimension_numbers<[1], [0], [0], [1], [0, 0, 1, 1], [], []>} : vector<22x46xf32>, vector<46x176xf32>, vector<22x176xf32> -> vector<22x176xf32>
    %32 = arith.maximumf %28, %31 : vector<22x176xf32>
    %c0_33 = arith.constant 0 : index
    %c0_34 = arith.constant 0 : index
    %33 = vector.load %arg13[%c0_33, %c0_34] : memref<22x176xf32, #tpu.memory_space<vmem>>, vector<22x176xf32>
    tpu.vector_store %arg13[%c0_33, %c0_34], %32 {strides = array<i32>} : memref<22x176xf32, #tpu.memory_space<vmem>>, vector<22x176xf32>,
    %c1_35 = arith.constant 1 : index
    %c0_36 = arith.constant 0 : index
    %34 = vector.load %arg11[%c1_35, %c0_36] : memref<7x352xf32, #tpu.memory_space<vmem>>, vector<1x288xf32>
    %c0_37 = arith.constant 0 : index
    %c0_38 = arith.constant 0 : index
    %35 = vector.load %arg13[%c0_37, %c0_38] : memref<22x176xf32, #tpu.memory_space<vmem>>, vector<20x176xf32>
    %c0_39 = arith.constant 0 : index
    %c0_40 = arith.constant 0 : index
    %c0_41 = arith.constant 0 : index
    %36 = vector.load %arg4[%c0_39, %c0_40, %c0_41] : memref<3x176x288xf32, #tpu.memory_space<vmem>>, vector<1x176x288xf32>
    %37 = vector.shape_cast %36 : vector<1x176x288xf32> to vector<176x288xf32>
    %cst_42 = arith.constant dense<0.000000e+00> : vector<20x288xf32>
    %38 = tpu.matmul %35, %37, %cst_42 {dimension_numbers = #tpu.dot_dimension_numbers<[1], [0], [0], [1], [0, 0, 1, 1], [], []>} : vector<20x176xf32>, vector<176x288xf32>, vector<20x288xf32> -> vector<20x288xf32>
    %c1_43 = arith.constant 1 : index
    %c0_44 = arith.constant 0 : index
    %39 = vector.load %arg13[%c1_43, %c0_44] : memref<22x176xf32, #tpu.memory_space<vmem>>, vector<20x176xf32>
    %c1_45 = arith.constant 1 : index
    %c0_46 = arith.constant 0 : index
    %c0_47 = arith.constant 0 : index
    %40 = vector.load %arg4[%c1_45, %c0_46, %c0_47] : memref<3x176x288xf32, #tpu.memory_space<vmem>>, vector<1x176x288xf32>
    %41 = vector.shape_cast %40 : vector<1x176x288xf32> to vector<176x288xf32>
    %cst_48 = arith.constant dense<0.000000e+00> : vector<20x288xf32>
    %42 = tpu.matmul %39, %41, %cst_48 {dimension_numbers = #tpu.dot_dimension_numbers<[1], [0], [0], [1], [0, 0, 1, 1], [], []>} : vector<20x176xf32>, vector<176x288xf32>, vector<20x288xf32> -> vector<20x288xf32>
    %43 = arith.addf %38, %42 : vector<20x288xf32>
    %c2_49 = arith.constant 2 : index
    %c0_50 = arith.constant 0 : index
    %44 = vector.load %arg13[%c2_49, %c0_50] : memref<22x176xf32, #tpu.memory_space<vmem>>, vector<20x176xf32>
    %c2_51 = arith.constant 2 : index
    %c0_52 = arith.constant 0 : index
    %c0_53 = arith.constant 0 : index
    %45 = vector.load %arg4[%c2_51, %c0_52, %c0_53] : memref<3x176x288xf32, #tpu.memory_space<vmem>>, vector<1x176x288xf32>
    %46 = vector.shape_cast %45 : vector<1x176x288xf32> to vector<176x288xf32>
    %cst_54 = arith.constant dense<0.000000e+00> : vector<20x288xf32>
    %47 = tpu.matmul %44, %46, %cst_54 {dimension_numbers = #tpu.dot_dimension_numbers<[1], [0], [0], [1], [0, 0, 1, 1], [], []>} : vector<20x176xf32>, vector<176x288xf32>, vector<20x288xf32> -> vector<20x288xf32>
    %48 = arith.addf %43, %47 : vector<20x288xf32>
    %49 = vector.broadcast %34 : vector<1x288xf32> to vector<20x288xf32>
    %50 = arith.addf %48, %49 : vector<20x288xf32>
    %cst_55 = arith.constant 0.000000e+00 : f32
    %51 = vector.broadcast %cst_55 : f32 to vector<20x288xf32>
    %52 = arith.maximumf %50, %51 : vector<20x288xf32>
    %c0_56 = arith.constant 0 : index
    %c0_57 = arith.constant 0 : index
    %c0_58 = arith.constant 0 : index
    %53 = vector.load %arg5[%c0_56, %c0_57, %c0_58] : memref<2x288x128xf32, #tpu.memory_space<vmem>>, vector<1x288x128xf32>
    %54 = vector.shape_cast %53 : vector<1x288x128xf32> to vector<288x128xf32>
    %cst_59 = arith.constant dense<0.000000e+00> : vector<20x128xf32>
    %55 = tpu.matmul %52, %54, %cst_59 {dimension_numbers = #tpu.dot_dimension_numbers<[1], [0], [0], [1], [0, 0, 1, 1], [], []>} : vector<20x288xf32>, vector<288x128xf32>, vector<20x128xf32> -> vector<20x128xf32>
    %c1_60 = arith.constant 1 : index
    %c0_61 = arith.constant 0 : index
    %c0_62 = arith.constant 0 : index
    %56 = vector.load %arg5[%c1_60, %c0_61, %c0_62] : memref<2x288x128xf32, #tpu.memory_space<vmem>>, vector<1x288x128xf32>
    %57 = vector.shape_cast %56 : vector<1x288x128xf32> to vector<288x128xf32>
    %cst_63 = arith.constant dense<0.000000e+00> : vector<20x128xf32>
    %58 = tpu.matmul %52, %57, %cst_63 {dimension_numbers = #tpu.dot_dimension_numbers<[1], [0], [0], [1], [0, 0, 1, 1], [], []>} : vector<20x288xf32>, vector<288x128xf32>, vector<20x128xf32> -> vector<20x128xf32>
    %59 = arith.maximumf %55, %58 : vector<20x128xf32>
    %c0_64 = arith.constant 0 : index
    %c0_65 = arith.constant 0 : index
    %c0_66 = arith.constant 0 : index
    %60 = vector.load %arg6[%c0_64, %c0_65, %c0_66] : memref<2x8x20xf32, #tpu.memory_space<vmem>>, vector<1x8x20xf32>
    %61 = vector.shape_cast %60 : vector<1x8x20xf32> to vector<8x20xf32>
    %cst_67 = arith.constant dense<0.000000e+00> : vector<8x128xf32>
    %62 = tpu.matmul %61, %59, %cst_67 {dimension_numbers = #tpu.dot_dimension_numbers<[1], [0], [0], [1], [0, 0, 1, 1], [], []>} : vector<8x20xf32>, vector<20x128xf32>, vector<8x128xf32> -> vector<8x128xf32>
    %c1_68 = arith.constant 1 : index
    %c0_69 = arith.constant 0 : index
    %c0_70 = arith.constant 0 : index
    %63 = vector.load %arg6[%c1_68, %c0_69, %c0_70] : memref<2x8x20xf32, #tpu.memory_space<vmem>>, vector<1x8x20xf32>
    %64 = vector.shape_cast %63 : vector<1x8x20xf32> to vector<8x20xf32>
    %cst_71 = arith.constant dense<0.000000e+00> : vector<8x128xf32>
    %65 = tpu.matmul %64, %59, %cst_71 {dimension_numbers = #tpu.dot_dimension_numbers<[1], [0], [0], [1], [0, 0, 1, 1], [], []>} : vector<8x20xf32>, vector<20x128xf32>, vector<8x128xf32> -> vector<8x128xf32>
    %66 = arith.maximumf %62, %65 : vector<8x128xf32>
    %c0_72 = arith.constant 0 : index
    %c0_73 = arith.constant 0 : index
    %67 = vector.load %arg14[%c0_72, %c0_73] : memref<8x128xf32, #tpu.memory_space<vmem>>, vector<8x128xf32>
    tpu.vector_store %arg14[%c0_72, %c0_73], %66 {strides = array<i32>} : memref<8x128xf32, #tpu.memory_space<vmem>>, vector<8x128xf32>,
    %c2_74 = arith.constant 2 : index
    %c0_75 = arith.constant 0 : index
    %68 = vector.load %arg11[%c2_74, %c0_75] : memref<7x352xf32, #tpu.memory_space<vmem>>, vector<1x128xf32>
    %c0_76 = arith.constant 0 : index
    %c0_77 = arith.constant 0 : index
    %69 = vector.load %arg14[%c0_76, %c0_77] : memref<8x128xf32, #tpu.memory_space<vmem>>, vector<6x128xf32>
    %c0_78 = arith.constant 0 : index
    %c0_79 = arith.constant 0 : index
    %c0_80 = arith.constant 0 : index
    %70 = vector.load %arg7[%c0_78, %c0_79, %c0_80] : memref<3x128x128xf32, #tpu.memory_space<vmem>>, vector<1x128x128xf32>
    %71 = vector.shape_cast %70 : vector<1x128x128xf32> to vector<128x128xf32>
    %cst_81 = arith.constant dense<0.000000e+00> : vector<6x128xf32>
    %72 = tpu.matmul %69, %71, %cst_81 {dimension_numbers = #tpu.dot_dimension_numbers<[1], [0], [0], [1], [0, 0, 1, 1], [], []>} : vector<6x128xf32>, vector<128x128xf32>, vector<6x128xf32> -> vector<6x128xf32>
    %c1_82 = arith.constant 1 : index
    %c0_83 = arith.constant 0 : index
    %73 = vector.load %arg14[%c1_82, %c0_83] : memref<8x128xf32, #tpu.memory_space<vmem>>, vector<6x128xf32>
    %c1_84 = arith.constant 1 : index
    %c0_85 = arith.constant 0 : index
    %c0_86 = arith.constant 0 : index
    %74 = vector.load %arg7[%c1_84, %c0_85, %c0_86] : memref<3x128x128xf32, #tpu.memory_space<vmem>>, vector<1x128x128xf32>
    %75 = vector.shape_cast %74 : vector<1x128x128xf32> to vector<128x128xf32>
    %cst_87 = arith.constant dense<0.000000e+00> : vector<6x128xf32>
    %76 = tpu.matmul %73, %75, %cst_87 {dimension_numbers = #tpu.dot_dimension_numbers<[1], [0], [0], [1], [0, 0, 1, 1], [], []>} : vector<6x128xf32>, vector<128x128xf32>, vector<6x128xf32> -> vector<6x128xf32>
    %77 = arith.addf %72, %76 : vector<6x128xf32>
    %c2_88 = arith.constant 2 : index
    %c0_89 = arith.constant 0 : index
    %78 = vector.load %arg14[%c2_88, %c0_89] : memref<8x128xf32, #tpu.memory_space<vmem>>, vector<6x128xf32>
    %c2_90 = arith.constant 2 : index
    %c0_91 = arith.constant 0 : index
    %c0_92 = arith.constant 0 : index
    %79 = vector.load %arg7[%c2_90, %c0_91, %c0_92] : memref<3x128x128xf32, #tpu.memory_space<vmem>>, vector<1x128x128xf32>
    %80 = vector.shape_cast %79 : vector<1x128x128xf32> to vector<128x128xf32>
    %cst_93 = arith.constant dense<0.000000e+00> : vector<6x128xf32>
    %81 = tpu.matmul %78, %80, %cst_93 {dimension_numbers = #tpu.dot_dimension_numbers<[1], [0], [0], [1], [0, 0, 1, 1], [], []>} : vector<6x128xf32>, vector<128x128xf32>, vector<6x128xf32> -> vector<6x128xf32>
    %82 = arith.addf %77, %81 : vector<6x128xf32>
    %83 = vector.broadcast %68 : vector<1x128xf32> to vector<6x128xf32>
    %84 = arith.addf %82, %83 : vector<6x128xf32>
    %c0_94 = arith.constant 0 : index
    %c0_95 = arith.constant 0 : index
    %85 = vector.load %arg8[%c0_94, %c0_95] : memref<2x6xf32, #tpu.memory_space<vmem>>, vector<2x6xf32>
    %cst_96 = arith.constant dense<0.000000e+00> : vector<2x128xf32>
    %86 = tpu.matmul %85, %84, %cst_96 {dimension_numbers = #tpu.dot_dimension_numbers<[1], [0], [0], [1], [0, 0, 1, 1], [], []>} : vector<2x6xf32>, vector<6x128xf32>, vector<2x128xf32> -> vector<2x128xf32>
    %c0_97 = arith.constant 0 : index
    %c0_98 = arith.constant 0 : index
    %87 = vector.load %arg9[%c0_97, %c0_98] : memref<128x96xf32, #tpu.memory_space<vmem>>, vector<128x96xf32>
    %cst_99 = arith.constant dense<0.000000e+00> : vector<2x96xf32>
    %88 = tpu.matmul %86, %87, %cst_99 {dimension_numbers = #tpu.dot_dimension_numbers<[1], [0], [0], [1], [0, 0, 1, 1], [], []>} : vector<2x128xf32>, vector<128x96xf32>, vector<2x96xf32> -> vector<2x96xf32>
    %89 = vector.extract_strided_slice %88 {offsets = [0, 32], sizes = [2, 64], strides = [1, 1]} : vector<2x96xf32> to vector<2x64xf32>
    %90 = vector.extract_strided_slice %88 {offsets = [0, 0], sizes = [2, 32], strides = [1, 1]} : vector<2x96xf32> to vector<2x32xf32>
    %c3 = arith.constant 3 : index
    %c0_100 = arith.constant 0 : index
    %91 = vector.load %arg11[%c3, %c0_100] : memref<7x352xf32, #tpu.memory_space<vmem>>, vector<1x32xf32>
    %92 = vector.broadcast %91 : vector<1x32xf32> to vector<2x32xf32>
    %93 = arith.addf %90, %92 : vector<2x32xf32>
    %cst_101 = arith.constant dense<0.000000e+00> : vector<32xf32>
    %94 = vector.multi_reduction <add>, %93, %cst_101 [0] : vector<2x32xf32> to vector<32xf32>
    %95 = vector.shape_cast %94 : vector<32xf32> to vector<1x32xf32>
    %cst_102 = arith.constant 2.000000e+00 : f32
    %96 = vector.broadcast %cst_102 : f32 to vector<1x32xf32>
    %97 = arith.divf %95, %96 : vector<1x32xf32>
    %98 = vector.broadcast %97 : vector<1x32xf32> to vector<2x32xf32>
    %99 = arith.subf %93, %98 : vector<2x32xf32>
    %100 = arith.mulf %99, %99 : vector<2x32xf32>
    %cst_103 = arith.constant dense<0.000000e+00> : vector<32xf32>
    %101 = vector.multi_reduction <add>, %100, %cst_103 [0] : vector<2x32xf32> to vector<32xf32>
    %102 = vector.shape_cast %101 : vector<32xf32> to vector<1x32xf32>
    %cst_104 = arith.constant 2.000000e+00 : f32
    %103 = vector.broadcast %cst_104 : f32 to vector<1x32xf32>
    %104 = arith.divf %102, %103 : vector<1x32xf32>
    %105 = vector.broadcast %97 : vector<1x32xf32> to vector<2x32xf32>
    %106 = arith.subf %93, %105 : vector<2x32xf32>
    %cst_105 = arith.constant 9.99999974E-6 : f32
    %107 = vector.broadcast %cst_105 : f32 to vector<1x32xf32>
    %108 = arith.addf %104, %107 : vector<1x32xf32>
    %109 = math.rsqrt %108 : vector<1x32xf32>
    %110 = vector.broadcast %109 : vector<1x32xf32> to vector<2x32xf32>
    %111 = arith.mulf %106, %110 : vector<2x32xf32>
    %c4 = arith.constant 4 : index
    %c0_106 = arith.constant 0 : index
    %112 = vector.load %arg11[%c4, %c0_106] : memref<7x352xf32, #tpu.memory_space<vmem>>, vector<1x32xf32>
    %113 = vector.broadcast %112 : vector<1x32xf32> to vector<2x32xf32>
    %114 = arith.mulf %111, %113 : vector<2x32xf32>
    %c5 = arith.constant 5 : index
    %c0_107 = arith.constant 0 : index
    %115 = vector.load %arg11[%c5, %c0_107] : memref<7x352xf32, #tpu.memory_space<vmem>>, vector<1x32xf32>
    %116 = vector.broadcast %115 : vector<1x32xf32> to vector<2x32xf32>
    %117 = arith.addf %114, %116 : vector<2x32xf32>
    %cst_108 = arith.constant 0.000000e+00 : f32
    %118 = vector.broadcast %cst_108 : f32 to vector<2x32xf32>
    %119 = arith.maximumf %117, %118 : vector<2x32xf32>
    %c0_109 = arith.constant 0 : index
    %c0_110 = arith.constant 0 : index
    %120 = vector.load %arg10[%c0_109, %c0_110] : memref<32x12xf32, #tpu.memory_space<vmem>>, vector<32x12xf32>
    %cst_111 = arith.constant dense<0.000000e+00> : vector<2x12xf32>
    %121 = tpu.matmul %119, %120, %cst_111 {dimension_numbers = #tpu.dot_dimension_numbers<[1], [0], [0], [1], [0, 0, 1, 1], [], []>} : vector<2x32xf32>, vector<32x12xf32>, vector<2x12xf32> -> vector<2x12xf32>
    %c6 = arith.constant 6 : index
    %c0_112 = arith.constant 0 : index
    %122 = vector.load %arg11[%c6, %c0_112] : memref<7x352xf32, #tpu.memory_space<vmem>>, vector<1x12xf32>
    %123 = vector.broadcast %122 : vector<1x12xf32> to vector<2x12xf32>
    %124 = arith.addf %121, %123 : vector<2x12xf32>
    %125 = vector.extract_strided_slice %124 {offsets = [0, 0], sizes = [2, 3], strides = [1, 1]} : vector<2x12xf32> to vector<2x3xf32>
    %cst_113 = arith.constant dense<0xFF800000> : vector<2xf32>
    %126 = vector.multi_reduction <maximumf>, %125, %cst_113 [1] : vector<2x3xf32> to vector<2xf32>
    %127 = vector.shape_cast %126 : vector<2xf32> to vector<2x1xf32>
    %128 = vector.broadcast %127 : vector<2x1xf32> to vector<2x3xf32>
    %129 = arith.subf %125, %128 : vector<2x3xf32>
    %130 = math.exp %129 : vector<2x3xf32>
    %cst_114 = arith.constant dense<0.000000e+00> : vector<2xf32>
    %131 = vector.multi_reduction <add>, %130, %cst_114 [1] : vector<2x3xf32> to vector<2xf32>
    %132 = vector.shape_cast %131 : vector<2xf32> to vector<2x1xf32>
    %133 = vector.broadcast %132 : vector<2x1xf32> to vector<2x3xf32>
    %134 = arith.divf %130, %133 : vector<2x3xf32>
    %135 = vector.extract_strided_slice %124 {offsets = [0, 3], sizes = [2, 6], strides = [1, 1]} : vector<2x12xf32> to vector<2x6xf32>
    %136 = vector.extract_strided_slice %124 {offsets = [0, 9], sizes = [2, 3], strides = [1, 1]} : vector<2x12xf32> to vector<2x3xf32>
    %137 = math.exp %136 : vector<2x3xf32>
    %cst_115 = arith.constant 0.000000e+00 : f32
    %138 = vector.broadcast %cst_115 : f32 to vector<2x52xf32>
    %139 = tpu.concatenate %134, %135, %137, %89, %138 in 1 : vector<2x3xf32>, vector<2x6xf32>, vector<2x3xf32>, vector<2x64xf32>, vector<2x52xf32> -> vector<2x128xf32>
    %c0_116 = arith.constant 0 : index
    %c0_117 = arith.constant 0 : index
    %140 = vector.load %arg12[%c0_116, %c0_117] : memref<2x128xf32, #tpu.memory_space<vmem>>, vector<2x128xf32>
    tpu.vector_store %arg12[%c0_116, %c0_117], %139 {strides = array<i32>} : memref<2x128xf32, #tpu.memory_space<vmem>>, vector<2x128xf32>,
    return
  }
}

</mosaic_0001>

<llo_original>
// kernel: convolutional_mdn_forward.1
$region0: #{convolutional_mdn_forward.1}
  #allocation0 [shape = 'u32[]', space=smem, size = 0x4, offset = 0x4, fixed_abs, tag = 'smem constant byte address 0x4 - core index']
  #allocation1 [shape = 'u32[144,128]{1,0:T(1,128)}', space=vmem, size = 0x12000, scoped, tag = 'internal scratch']
  #allocation2 [shape = 'f32[22,176]{1,0:T(8,128)}', space=vmem, size = 0x6000, scoped, tag = 'scratch operand']
  #allocation3 [shape = 'f32[8,128]{1,0:T(8,128)}', space=vmem, size = 0x1000, scoped, tag = 'scratch operand']
  %s0 = inlined_call_operand.vmem [shape: f32[48,96], index: 0, kind: input, shape index: {}]
  %s1 = inlined_call_operand.vmem [shape: f32[3,96,352], index: 1, kind: input, shape index: {}]
  %s2 = inlined_call_operand.vmem [shape: f32[2,352,176], index: 2, kind: input, shape index: {}]
  %s3 = inlined_call_operand.vmem [shape: f32[2,22,46], index: 3, kind: input, shape index: {}]
  %s4 = inlined_call_operand.vmem [shape: f32[3,176,288], index: 4, kind: input, shape index: {}]
  %s5 = inlined_call_operand.hbm [shape: f32[2,288,128], index: 5, kind: input, shape index: {}]
  %s6 = inlined_call_operand.vmem [shape: f32[2,8,20], index: 6, kind: input, shape index: {}]
  %s7 = inlined_call_operand.hbm [shape: f32[3,128,128], index: 7, kind: input, shape index: {}]
  %s8 = inlined_call_operand.vmem [shape: f32[2,6], index: 8, kind: input, shape index: {}]
  %s9 = inlined_call_operand.vmem [shape: f32[128,96], index: 9, kind: input, shape index: {}]
  %s10 = inlined_call_operand.vmem [shape: f32[32,12], index: 10, kind: input, shape index: {}]
  %s11 = inlined_call_operand.vmem [shape: f32[7,352], index: 11, kind: input, shape index: {}]
  %s12 = inlined_call_operand.vmem [shape: f32[2,128], index: 12, kind: output, shape index: {}]
  %s13 = sld [smem:[#allocation0]]
  $region66: #{convolutional_mdn_forward.1} parent=0
    _
  %s15 = ssub.s32 1, %s13
  %s16 = scalar_select 0, %s15, %s13
  $region1: #{convolutional_mdn_forward.1} parent=0
    #allocation4 [shape = 'u8[294912]{0}', space=vmem, size = 0x48000, scoped, tag = 'input window, operand 5, single buffered']
    #allocation5 [shape = 's32[1]{0}', space=sflag, size = 0x4, scoped, tag = 'scoped memory for convolutional_mdn_forward.1']
    #allocation6 [shape = 'u8[196608]{0}', space=vmem, size = 0x30000, scoped, tag = 'input window, operand 7, single buffered']
    #allocation7 [shape = 's32[1]{0}', space=sflag, size = 0x4, scoped, tag = 'scoped memory for convolutional_mdn_forward.1']
    %17 = vsyncpa [#allocation5], 0
    %18 = vsyncpa [#allocation7], 0
    // Predicated region
    $region2: #{convolutional_mdn_forward.1} parent=1 // pred_check
      _
    $region3: #{convolutional_mdn_forward.1} parent=1 // pred_check_branch
      %20 = sbr.rel (0) target = $region5
    $region4: #{convolutional_mdn_forward.1} parent=1 // pred_region
      _
    $region5: #{convolutional_mdn_forward.1} parent=1 // pred_fallthru
      _
    // Predicated region
    $region6: #{convolutional_mdn_forward.1} parent=1 // pred_check
      _
    $region7: #{convolutional_mdn_forward.1} parent=1 // pred_check_branch
      %22 = sbr.rel (0) target = $region9
    $region8: #{convolutional_mdn_forward.1} parent=1 // pred_region
      _
    $region9: #{convolutional_mdn_forward.1} parent=1 // pred_fallthru
      _
    // Predicated region
    $region10: #{convolutional_mdn_forward.1} parent=1 // pred_check
      _
    $region11: #{convolutional_mdn_forward.1} parent=1 // pred_check_branch
      %24 = sbr.rel (0) target = $region13
    $region12: #{convolutional_mdn_forward.1} parent=1 // pred_region
      _
    $region13: #{convolutional_mdn_forward.1} parent=1 // pred_fallthru
      _
    // Predicated region
    $region14: #{convolutional_mdn_forward.1} parent=1 // pred_check
      _
    $region15: #{convolutional_mdn_forward.1} parent=1 // pred_check_branch
      %26 = sbr.rel (0) target = $region17
    $region16: #{convolutional_mdn_forward.1} parent=1 // pred_region
      _
    $region17: #{convolutional_mdn_forward.1} parent=1 // pred_fallthru
      _
    // Predicated region
    $region18: #{convolutional_mdn_forward.1} parent=1 // pred_check
      _
    $region19: #{convolutional_mdn_forward.1} parent=1 // pred_check_branch
      %28 = sbr.rel (0) target = $region21
    $region20: #{convolutional_mdn_forward.1} parent=1 // pred_region
      _
    $region21: #{convolutional_mdn_forward.1} parent=1 // pred_fallthru
      _
    // Predicated region
    $region22: #{convolutional_mdn_forward.1} parent=1 // pred_check
      _
    $region23: #{convolutional_mdn_forward.1} parent=1 // pred_check_branch
      %30 = sbr.rel (0) target = $region25
    $region24: #{convolutional_mdn_forward.1} parent=1 // pred_region
      %s32 = ssub.s32 9216, 9216
      %33 = vsyncadd [#allocation5], %s32
      %s34 = sshll.u32 [#allocation4], 4
      %s35 = int_to_ptr.vmem [resolvable:$true] %s34
      %40 = dma.hbm_to_vmem [thread:$0]  %s5, 9216, %s35, [#allocation5], 128, 128, 8
    $region25: #{convolutional_mdn_forward.1} parent=1 // pred_fallthru
      _
    // Predicated region
    $region26: #{convolutional_mdn_forward.1} parent=1 // pred_check
      _
    $region27: #{convolutional_mdn_forward.1} parent=1 // pred_check_branch
      %42 = sbr.rel (0) target = $region29
    $region28: #{convolutional_mdn_forward.1} parent=1 // pred_region
      _
    $region29: #{convolutional_mdn_forward.1} parent=1 // pred_fallthru
      _
    // Predicated region
    $region30: #{convolutional_mdn_forward.1} parent=1 // pred_check
      _
    $region31: #{convolutional_mdn_forward.1} parent=1 // pred_check_branch
      %44 = sbr.rel (0) target = $region33
    $region32: #{convolutional_mdn_forward.1} parent=1 // pred_region
      %s46 = ssub.s32 6144, 6144
      %47 = vsyncadd [#allocation7], %s46
      %s48 = sshll.u32 [#allocation6], 4
      %s49 = int_to_ptr.vmem [resolvable:$true] %s48
      %54 = dma.hbm_to_vmem [thread:$0]  %s7, 6144, %s49, [#allocation7], 128, 128, 8
    $region33: #{convolutional_mdn_forward.1} parent=1 // pred_fallthru
      _
    // Predicated region
    $region34: #{convolutional_mdn_forward.1} parent=1 // pred_check
      _
    $region35: #{convolutional_mdn_forward.1} parent=1 // pred_check_branch
      %56 = sbr.rel (0) target = $region37
    $region36: #{convolutional_mdn_forward.1} parent=1 // pred_region
      _
    $region37: #{convolutional_mdn_forward.1} parent=1 // pred_fallthru
      _
    // Predicated region
    $region38: #{convolutional_mdn_forward.1} parent=1 // pred_check
      _
    $region39: #{convolutional_mdn_forward.1} parent=1 // pred_check_branch
      %58 = sbr.rel (0) target = $region41
    $region40: #{convolutional_mdn_forward.1} parent=1 // pred_region
      _
    $region41: #{convolutional_mdn_forward.1} parent=1 // pred_fallthru
      _
    // Predicated region
    $region42: #{convolutional_mdn_forward.1} parent=1 // pred_check
      _
    $region43: #{convolutional_mdn_forward.1} parent=1 // pred_check_branch
      %60 = sbr.rel (0) target = $region45
    $region44: #{convolutional_mdn_forward.1} parent=1 // pred_region
      _
    $region45: #{convolutional_mdn_forward.1} parent=1 // pred_fallthru
      _
    // Predicated region
    $region46: #{convolutional_mdn_forward.1} parent=1 // pred_check
      _
    $region47: #{convolutional_mdn_forward.1} parent=1 // pred_check_branch
      %62 = sbr.rel (0) target = $region49
    $region48: #{convolutional_mdn_forward.1} parent=1 // pred_region
      _
    $region49: #{convolutional_mdn_forward.1} parent=1 // pred_fallthru
      _
    // Predicated region
    $region50: #{convolutional_mdn_forward.1} parent=1 // pred_check
      _
    $region51: #{convolutional_mdn_forward.1} parent=1 // pred_check_branch
      %64 = sbr.rel (0) target = $region53
    $region52: #{convolutional_mdn_forward.1} parent=1 // pred_region
      %65 = dma.done [#allocation5], 9216
    $region53: #{convolutional_mdn_forward.1} parent=1 // pred_fallthru
      _
    // Predicated region
    $region54: #{convolutional_mdn_forward.1} parent=1 // pred_check
      _
    $region55: #{convolutional_mdn_forward.1} parent=1 // pred_check_branch
      %67 = sbr.rel (0) target = $region57
    $region56: #{convolutional_mdn_forward.1} parent=1 // pred_region
      %68 = dma.done [#allocation7], 6144
    $region57: #{convolutional_mdn_forward.1} parent=1 // pred_fallthru
      _
    %v69 = vld [vmem:[%s11] ss:$8 sm:$0x7]
    %v70 = vld [vmem:[%s0] sm:$0xff]
    %v71 = vld [vmem:[%s0 + $0x8] sm:$0xff]
    %v72 = vld [vmem:[%s0 + $0x10] sm:$0xff]
    %v73 = vld [vmem:[%s0 + $0x18] sm:$0xff]
    %v74 = vld [vmem:[%s0 + $0x20] sm:$0xff]
    %v75 = vld [vmem:[%s0 + $0x28] sm:$0x3f]
    %v76 = vld [vmem:[%s1] sm:$0xff]
    %v77 = vld [vmem:[%s1 + $0x8] sm:$0xff]
    %v78 = vld [vmem:[%s1 + $0x10] sm:$0xff]
    %v79 = vld [vmem:[%s1 + $0x18] sm:$0xff]
    %v80 = vld [vmem:[%s1 + $0x20] sm:$0xff]
    %v81 = vld [vmem:[%s1 + $0x28] sm:$0xff]
    %v82 = vld [vmem:[%s1 + $0x30] sm:$0xff]
    %v83 = vld [vmem:[%s1 + $0x38] sm:$0xff]
    %v84 = vld [vmem:[%s1 + $0x40] sm:$0xff]
    %v85 = vld [vmem:[%s1 + $0x48] sm:$0xff]
    %v86 = vld [vmem:[%s1 + $0x50] sm:$0xff]
    %v87 = vld [vmem:[%s1 + $0x58] sm:$0xff]
    %v88 = vld [vmem:[%s1 + $0x60] sm:$0xff]
    %v89 = vld [vmem:[%s1 + $0x68] sm:$0xff]
    %v90 = vld [vmem:[%s1 + $0x70] sm:$0xff]
    %v91 = vld [vmem:[%s1 + $0x78] sm:$0xff]
    %v92 = vld [vmem:[%s1 + $0x80] sm:$0xff]
    %v93 = vld [vmem:[%s1 + $0x88] sm:$0xff]
    %v94 = vld [vmem:[%s1 + $0x90] sm:$0xff]
    %v95 = vld [vmem:[%s1 + $0x98] sm:$0xff]
    %v96 = vld [vmem:[%s1 + $0xa0] sm:$0xff]
    %v97 = vld [vmem:[%s1 + $0xa8] sm:$0xff]
    %v98 = vld [vmem:[%s1 + $0xb0] sm:$0xff]
    %v99 = vld [vmem:[%s1 + $0xb8] sm:$0xff]
    %v100 = vld [vmem:[%s1 + $0xc0] sm:$0xff]
    %v101 = vld [vmem:[%s1 + $0xc8] sm:$0xff]
    %v102 = vld [vmem:[%s1 + $0xd0] sm:$0xff]
    %v103 = vld [vmem:[%s1 + $0xd8] sm:$0xff]
    %v104 = vld [vmem:[%s1 + $0xe0] sm:$0xff]
    %v105 = vld [vmem:[%s1 + $0xe8] sm:$0xff]
    %v106 = vld [vmem:[%s1 + $0xf0] sm:$0xff]
    %v107 = vld [vmem:[%s1 + $0xf8] sm:$0xff]
    %v108 = vld [vmem:[%s1 + $0x100] sm:$0xff]
    %v109 = vld [vmem:[%s1 + $0x108] sm:$0xff]
    %v110 = vld [vmem:[%s1 + $0x110] sm:$0xff]
    %v111 = vld [vmem:[%s1 + $0x118] sm:$0xff]
    %v112 = vld [vmem:[%s0 + $0x1] sm:$0xff]
    %v113 = vld [vmem:[%s0 + $0x9] sm:$0xff]
    %v114 = vld [vmem:[%s0 + $0x11] sm:$0xff]
    %v115 = vld [vmem:[%s0 + $0x19] sm:$0xff]
    %v116 = vld [vmem:[%s0 + $0x21] sm:$0xff]
    %v117 = vld [vmem:[%s0 + $0x29] sm:$0x3f]
    %s118 = scalar_lea.vmem %s1, 288
    %v119 = vld [vmem:[%s118] sm:$0xff]
    %v120 = vld [vmem:[%s118 + $0x8] sm:$0xff]
    %v121 = vld [vmem:[%s118 + $0x10] sm:$0xff]
    %v122 = vld [vmem:[%s118 + $0x18] sm:$0xff]
    %v123 = vld [vmem:[%s118 + $0x20] sm:$0xff]
    %v124 = vld [vmem:[%s118 + $0x28] sm:$0xff]
    %v125 = vld [vmem:[%s118 + $0x30] sm:$0xff]
    %v126 = vld [vmem:[%s118 + $0x38] sm:$0xff]
    %v127 = vld [vmem:[%s118 + $0x40] sm:$0xff]
    %v128 = vld [vmem:[%s118 + $0x48] sm:$0xff]
    %v129 = vld [vmem:[%s118 + $0x50] sm:$0xff]
    %v130 = vld [vmem:[%s118 + $0x58] sm:$0xff]
    %v131 = vld [vmem:[%s118 + $0x60] sm:$0xff]
    %v132 = vld [vmem:[%s118 + $0x68] sm:$0xff]
    %v133 = vld [vmem:[%s118 + $0x70] sm:$0xff]
    %v134 = vld [vmem:[%s118 + $0x78] sm:$0xff]
    %v135 = vld [vmem:[%s118 + $0x80] sm:$0xff]
    %v136 = vld [vmem:[%s118 + $0x88] sm:$0xff]
    %v137 = vld [vmem:[%s118 + $0x90] sm:$0xff]
    %v138 = vld [vmem:[%s118 + $0x98] sm:$0xff]
    %v139 = vld [vmem:[%s118 + $0xa0] sm:$0xff]
    %v140 = vld [vmem:[%s118 + $0xa8] sm:$0xff]
    %v141 = vld [vmem:[%s118 + $0xb0] sm:$0xff]
    %v142 = vld [vmem:[%s118 + $0xb8] sm:$0xff]
    %v143 = vld [vmem:[%s118 + $0xc0] sm:$0xff]
    %v144 = vld [vmem:[%s118 + $0xc8] sm:$0xff]
    %v145 = vld [vmem:[%s118 + $0xd0] sm:$0xff]
    %v146 = vld [vmem:[%s118 + $0xd8] sm:$0xff]
    %v147 = vld [vmem:[%s118 + $0xe0] sm:$0xff]
    %v148 = vld [vmem:[%s118 + $0xe8] sm:$0xff]
    %v149 = vld [vmem:[%s118 + $0xf0] sm:$0xff]
    %v150 = vld [vmem:[%s118 + $0xf8] sm:$0xff]
    %v151 = vld [vmem:[%s118 + $0x100] sm:$0xff]
    %v152 = vld [vmem:[%s118 + $0x108] sm:$0xff]
    %v153 = vld [vmem:[%s118 + $0x110] sm:$0xff]
    %v154 = vld [vmem:[%s118 + $0x118] sm:$0xff]
    %vm155 = vcmask 785408
    %v157 = vsel %vm155, %v112, 0
    %v160 = vsel %vm155, %v113, 0
    %v163 = vsel %vm155, %v114, 0
    %v166 = vsel %vm155, %v115, 0
    %v169 = vsel %vm155, %v116, 0
    %v172 = vsel %vm155, %v117, 0
    %174 = vmatprep.subr.mxu0 %v120
    %175 = vmatpush1.msra.mxu0 %v119
    %176 = vmatprep.subr.mxu0 %v123
    %177 = vmatpush1.msra.mxu0 %v122
    %178 = vmatprep.subr.mxu0 %v126
    %179 = vmatpush1.msra.mxu0 %v125
    %180 = vmatprep.subr.mxu0 %v129
    %181 = vmatpush1.msra.mxu0 %v128
    %182 = vmatprep.subr.mxu0 %v132
    %183 = vmatpush1.msra.mxu0 %v131
    %184 = vmatprep.subr.mxu0 %v135
    %185 = vmatpush1.msra.mxu0 %v134
    %186 = vmatprep.subr.mxu0 %v138
    %187 = vmatpush1.msra.mxu0 %v137
    %188 = vmatprep.subr.mxu0 %v141
    %189 = vmatpush1.msra.mxu0 %v140
    %190 = vmatprep.subr.mxu0 %v144
    %191 = vmatpush1.msra.mxu0 %v143
    %192 = vmatprep.subr.mxu0 %v147
    %193 = vmatpush1.msra.mxu0 %v146
    %194 = vmatprep.subr.mxu0 %v150
    %195 = vmatpush1.msra.mxu0 %v149
    %196 = vmatprep.subr.mxu0 %v153
    %197 = vmatpush1.msra.mxu0 %v152
    %198 = vmatprep.subr.mxu0 0.0
    %199 = vmatpush1.msra.mxu0 0.0
    %200 = vmatprep.subr.mxu0 0.0
    %201 = vmatpush1.msra.mxu0 0.0
    %202 = vmatprep.subr.mxu0 0.0
    %203 = vmatpush1.msra.mxu0 0.0
    %204 = vmatprep.subr.mxu0 0.0
    %205 = vmatpush1.msra.mxu0 0.0
    %206 = vmatprep.subr.mxu0 0.0
    %207 = vmatpush1.msra.mxu0 0.0
    %208 = vmatprep.subr.mxu0 0.0
    %209 = vmatpush1.msra.mxu0 0.0
    %210 = vmatprep.subr.mxu0 0.0
    %211 = vmatpush1.msra.mxu0 0.0
    %212 = vmatprep.subr.mxu0 0.0
    %213 = vmatpush1.msra.mxu0 0.0
    %214 = vmatprep.subr.mxu0 0.0
    %215 = vmatpush1.msra.mxu0 0.0
    %216 = vmatprep.subr.mxu0 0.0
    %217 = vmatpush1.msra.mxu0 0.0
    %218 = vmatprep.subr.mxu0 0.0
    %219 = vmatpush1.msra.mxu0 0.0
    %220 = vmatprep.subr.mxu0 0.0
    %221 = vmatpush1.msra.mxu0 0.0
    %222 = vmatprep.subr.mxu0 0.0
    %223 = vmatpush1.msra.mxu0 0.0
    %224 = vmatprep.subr.mxu0 0.0
    %225 = vmatpush1.msra.mxu0 0.0
    %226 = vmatprep.subr.mxu0 0.0
    %227 = vmatpush1.msra.mxu0 0.0
    %228 = vmatprep.subr.mxu0 0.0
    %229 = vmatpush1.msra.mxu0 0.0
    %230 = vmatprep.subr.mxu0 0.0
    %231 = vmatpush1.msra.mxu0 0.0
    %232 = vmatprep.subr.mxu0 0.0
    %233 = vmatpush1.msra.mxu0 0.0
    %234 = vmatprep.subr.mxu0 0.0
    %235 = vmatpush1.msra.mxu0 0.0
    %236 = vmatprep.subr.mxu0 0.0
    %237 = vmatpush1.msra.mxu0 0.0
    %238 = vmatprep.mubr.f32.mxu0 0.0
    %239 = vmatmul.mubr.f32.gmra.mrb[0].mxu0 %v157
    %v240 = vpop.f32.mrb[0].mxu0
    %v241 = vadd.f32 0.0, %v240
    %v242 = vpop.f32.mrb[0].mxu0
    %v243 = vadd.f32 0.0, %v242
    %244 = vmatprep.mubr.f32.mxu0 0.0
    %245 = vmatmul.mubr.f32.gmra.mrb[0].mxu0 %v160
    %v246 = vpop.f32.mrb[0].mxu0
    %v247 = vadd.f32 0.0, %v246
    %v248 = vpop.f32.mrb[0].mxu0
    %v249 = vadd.f32 0.0, %v248
    %250 = vmatprep.mubr.f32.mxu0 0.0
    %251 = vmatmul.mubr.f32.gmra.mrb[0].mxu0 %v163
    %v252 = vpop.f32.mrb[0].mxu0
    %v253 = vadd.f32 0.0, %v252
    %v254 = vpop.f32.mrb[0].mxu0
    %v255 = vadd.f32 0.0, %v254
    %256 = vmatprep.mubr.f32.mxu0 0.0
    %257 = vmatmul.mubr.f32.gmra.mrb[0].mxu0 %v166
    %v258 = vpop.f32.mrb[0].mxu0
    %v259 = vadd.f32 0.0, %v258
    %v260 = vpop.f32.mrb[0].mxu0
    %v261 = vadd.f32 0.0, %v260
    %262 = vmatprep.mubr.f32.mxu0 0.0
    %263 = vmatmul.mubr.f32.gmra.mrb[0].mxu0 %v169
    %v264 = vpop.f32.mrb[0].mxu0
    %v265 = vadd.f32 0.0, %v264
    %v266 = vpop.f32.mrb[0].mxu0
    %v267 = vadd.f32 0.0, %v266
    %268 = vmatprep.mubr.f32.mxu0 0.0
    %269 = vmatmul.mubr.f32.gmra.mrb[0].mxu0 %v172
    %v270 = vpop.f32.mrb[0].mxu0
    %v271 = vadd.f32 0.0, %v270
    %v272 = vpop.f32.mrb[0].mxu0
    %v273 = vadd.f32 0.0, %v272
    %274 = vdwg.mxu0
    %275 = vmatprep.subr.mxu0 0.0
    %276 = vmatpush1.msra.mxu0 %v121
    %277 = vmatprep.subr.mxu0 0.0
    %278 = vmatpush1.msra.mxu0 %v124
    %279 = vmatprep.subr.mxu0 0.0
    %280 = vmatpush1.msra.mxu0 %v127
    %281 = vmatprep.subr.mxu0 0.0
    %282 = vmatpush1.msra.mxu0 %v130
    %283 = vmatprep.subr.mxu0 0.0
    %284 = vmatpush1.msra.mxu0 %v133
    %285 = vmatprep.subr.mxu0 0.0
    %286 = vmatpush1.msra.mxu0 %v136
    %287 = vmatprep.subr.mxu0 0.0
    %288 = vmatpush1.msra.mxu0 %v139
    %289 = vmatprep.subr.mxu0 0.0
    %290 = vmatpush1.msra.mxu0 %v142
    %291 = vmatprep.subr.mxu0 0.0
    %292 = vmatpush1.msra.mxu0 %v145
    %293 = vmatprep.subr.mxu0 0.0
    %294 = vmatpush1.msra.mxu0 %v148
    %295 = vmatprep.subr.mxu0 0.0
    %296 = vmatpush1.msra.mxu0 %v151
    %297 = vmatprep.subr.mxu0 0.0
    %298 = vmatpush1.msra.mxu0 %v154
    %299 = vmatprep.subr.mxu0 0.0
    %300 = vmatpush1.msra.mxu0 0.0
    %301 = vmatprep.subr.mxu0 0.0
    %302 = vmatpush1.msra.mxu0 0.0
    %303 = vmatprep.subr.mxu0 0.0
    %304 = vmatpush1.msra.mxu0 0.0
    %305 = vmatprep.subr.mxu0 0.0
    %306 = vmatpush1.msra.mxu0 0.0
    %307 = vmatprep.subr.mxu0 0.0
    %308 = vmatpush1.msra.mxu0 0.0
    %309 = vmatprep.subr.mxu0 0.0
    %310 = vmatpush1.msra.mxu0 0.0
    %311 = vmatprep.subr.mxu0 0.0
    %312 = vmatpush1.msra.mxu0 0.0
    %313 = vmatprep.subr.mxu0 0.0
    %314 = vmatpush1.msra.mxu0 0.0
    %315 = vmatprep.subr.mxu0 0.0
    %316 = vmatpush1.msra.mxu0 0.0
    %317 = vmatprep.subr.mxu0 0.0
    %318 = vmatpush1.msra.mxu0 0.0
    %319 = vmatprep.subr.mxu0 0.0
    %320 = vmatpush1.msra.mxu0 0.0
    %321 = vmatprep.subr.mxu0 0.0
    %322 = vmatpush1.msra.mxu0 0.0
    %323 = vmatprep.subr.mxu0 0.0
    %324 = vmatpush1.msra.mxu0 0.0
    %325 = vmatprep.subr.mxu0 0.0
    %326 = vmatpush1.msra.mxu0 0.0
    %327 = vmatprep.subr.mxu0 0.0
    %328 = vmatpush1.msra.mxu0 0.0
    %329 = vmatprep.subr.mxu0 0.0
    %330 = vmatpush1.msra.mxu0 0.0
    %331 = vmatprep.subr.mxu0 0.0
    %332 = vmatpush1.msra.mxu0 0.0
    %333 = vmatprep.subr.mxu0 0.0
    %334 = vmatpush1.msra.mxu0 0.0
    %335 = vmatprep.subr.mxu0 0.0
    %336 = vmatpush1.msra.mxu0 0.0
    %337 = vmatprep.subr.mxu0 0.0
    %338 = vmatpush1.msra.mxu0 0.0
    %339 = vmatprep.mubr.f32.mxu0 0.0
    %340 = vmatmul.mubr.f32.gmra.mrb[0].mxu0 %v157
    %v341 = vpop.f32.mrb[0].mxu0
    %v342 = vadd.f32 0.0, %v341
    %v343 = vpop.f32.mrb[0].mxu0
    %344 = vmatprep.mubr.f32.mxu0 0.0
    %345 = vmatmul.mubr.f32.gmra.mrb[0].mxu0 %v160
    %v346 = vpop.f32.mrb[0].mxu0
    %v347 = vadd.f32 0.0, %v346
    %v348 = vpop.f32.mrb[0].mxu0
    %349 = vmatprep.mubr.f32.mxu0 0.0
    %350 = vmatmul.mubr.f32.gmra.mrb[0].mxu0 %v163
    %v351 = vpop.f32.mrb[0].mxu0
    %v352 = vadd.f32 0.0, %v351
    %v353 = vpop.f32.mrb[0].mxu0
    %354 = vmatprep.mubr.f32.mxu0 0.0
    %355 = vmatmul.mubr.f32.gmra.mrb[0].mxu0 %v166
    %v356 = vpop.f32.mrb[0].mxu0
    %v357 = vadd.f32 0.0, %v356
    %v358 = vpop.f32.mrb[0].mxu0
    %359 = vmatprep.mubr.f32.mxu0 0.0
    %360 = vmatmul.mubr.f32.gmra.mrb[0].mxu0 %v169
    %v361 = vpop.f32.mrb[0].mxu0
    %v362 = vadd.f32 0.0, %v361
    %v363 = vpop.f32.mrb[0].mxu0
    %364 = vmatprep.mubr.f32.mxu0 0.0
    %365 = vmatmul.mubr.f32.gmra.mrb[0].mxu0 %v172
    %v366 = vpop.f32.mrb[0].mxu0
    %v367 = vadd.f32 0.0, %v366
    %v368 = vpop.f32.mrb[0].mxu0
    %369 = vdwg.mxu0
    %v371 = vsel %vm155, %v70, 0
    %v374 = vsel %vm155, %v71, 0
    %v377 = vsel %vm155, %v72, 0
    %v380 = vsel %vm155, %v73, 0
    %v383 = vsel %vm155, %v74, 0
    %v386 = vsel %vm155, %v75, 0
    %388 = vmatprep.subr.mxu0 %v77
    %389 = vmatpush1.msra.mxu0 %v76
    %390 = vmatprep.subr.mxu0 %v80
    %391 = vmatpush1.msra.mxu0 %v79
    %392 = vmatprep.subr.mxu0 %v83
    %393 = vmatpush1.msra.mxu0 %v82
    %394 = vmatprep.subr.mxu0 %v86
    %395 = vmatpush1.msra.mxu0 %v85
    %396 = vmatprep.subr.mxu0 %v89
    %397 = vmatpush1.msra.mxu0 %v88
    %398 = vmatprep.subr.mxu0 %v92
    %399 = vmatpush1.msra.mxu0 %v91
    %400 = vmatprep.subr.mxu0 %v95
    %401 = vmatpush1.msra.mxu0 %v94
    %402 = vmatprep.subr.mxu0 %v98
    %403 = vmatpush1.msra.mxu0 %v97
    %404 = vmatprep.subr.mxu0 %v101
    %405 = vmatpush1.msra.mxu0 %v100
    %406 = vmatprep.subr.mxu0 %v104
    %407 = vmatpush1.msra.mxu0 %v103
    %408 = vmatprep.subr.mxu0 %v107
    %409 = vmatpush1.msra.mxu0 %v106
    %410 = vmatprep.subr.mxu0 %v110
    %411 = vmatpush1.msra.mxu0 %v109
    %412 = vmatprep.subr.mxu0 0.0
    %413 = vmatpush1.msra.mxu0 0.0
    %414 = vmatprep.subr.mxu0 0.0
    %415 = vmatpush1.msra.mxu0 0.0
    %416 = vmatprep.subr.mxu0 0.0
    %417 = vmatpush1.msra.mxu0 0.0
    %418 = vmatprep.subr.mxu0 0.0
    %419 = vmatpush1.msra.mxu0 0.0
    %420 = vmatprep.subr.mxu0 0.0
    %421 = vmatpush1.msra.mxu0 0.0
    %422 = vmatprep.subr.mxu0 0.0
    %423 = vmatpush1.msra.mxu0 0.0
    %424 = vmatprep.subr.mxu0 0.0
    %425 = vmatpush1.msra.mxu0 0.0
    %426 = vmatprep.subr.mxu0 0.0
    %427 = vmatpush1.msra.mxu0 0.0
    %428 = vmatprep.subr.mxu0 0.0
    %429 = vmatpush1.msra.mxu0 0.0
    %430 = vmatprep.subr.mxu0 0.0
    %431 = vmatpush1.msra.mxu0 0.0
    %432 = vmatprep.subr.mxu0 0.0
    %433 = vmatpush1.msra.mxu0 0.0
    %434 = vmatprep.subr.mxu0 0.0
    %435 = vmatpush1.msra.mxu0 0.0
    %436 = vmatprep.subr.mxu0 0.0
    %437 = vmatpush1.msra.mxu0 0.0
    %438 = vmatprep.subr.mxu0 0.0
    %439 = vmatpush1.msra.mxu0 0.0
    %440 = vmatprep.subr.mxu0 0.0
    %441 = vmatpush1.msra.mxu0 0.0
    %442 = vmatprep.subr.mxu0 0.0
    %443 = vmatpush1.msra.mxu0 0.0
    %444 = vmatprep.subr.mxu0 0.0
    %445 = vmatpush1.msra.mxu0 0.0
    %446 = vmatprep.subr.mxu0 0.0
    %447 = vmatpush1.msra.mxu0 0.0
    %448 = vmatprep.subr.mxu0 0.0
    %449 = vmatpush1.msra.mxu0 0.0
    %450 = vmatprep.subr.mxu0 0.0
    %451 = vmatpush1.msra.mxu0 0.0
    %452 = vmatprep.mubr.f32.mxu0 0.0
    %453 = vmatmul.mubr.f32.gmra.mrb[0].mxu0 %v371
    %v454 = vpop.f32.mrb[0].mxu0
    %v455 = vadd.f32 %v241, %v454
    %v456 = vpop.f32.mrb[0].mxu0
    %v457 = vadd.f32 %v243, %v456
    %458 = vmatprep.mubr.f32.mxu0 0.0
    %459 = vmatmul.mubr.f32.gmra.mrb[0].mxu0 %v374
    %v460 = vpop.f32.mrb[0].mxu0
    %v461 = vadd.f32 %v247, %v460
    %v462 = vpop.f32.mrb[0].mxu0
    %v463 = vadd.f32 %v249, %v462
    %464 = vmatprep.mubr.f32.mxu0 0.0
    %465 = vmatmul.mubr.f32.gmra.mrb[0].mxu0 %v377
    %v466 = vpop.f32.mrb[0].mxu0
    %v467 = vadd.f32 %v253, %v466
    %v468 = vpop.f32.mrb[0].mxu0
    %v469 = vadd.f32 %v255, %v468
    %470 = vmatprep.mubr.f32.mxu0 0.0
    %471 = vmatmul.mubr.f32.gmra.mrb[0].mxu0 %v380
    %v472 = vpop.f32.mrb[0].mxu0
    %v473 = vadd.f32 %v259, %v472
    %v474 = vpop.f32.mrb[0].mxu0
    %v475 = vadd.f32 %v261, %v474
    %476 = vmatprep.mubr.f32.mxu0 0.0
    %477 = vmatmul.mubr.f32.gmra.mrb[0].mxu0 %v383
    %v478 = vpop.f32.mrb[0].mxu0
    %v479 = vadd.f32 %v265, %v478
    %v480 = vpop.f32.mrb[0].mxu0
    %v481 = vadd.f32 %v267, %v480
    %482 = vmatprep.mubr.f32.mxu0 0.0
    %483 = vmatmul.mubr.f32.gmra.mrb[0].mxu0 %v386
    %v484 = vpop.f32.mrb[0].mxu0
    %v485 = vadd.f32 %v271, %v484
    %v486 = vpop.f32.mrb[0].mxu0
    %v487 = vadd.f32 %v273, %v486
    %488 = vdwg.mxu0
    %489 = vmatprep.subr.mxu0 0.0
    %490 = vmatpush1.msra.mxu0 %v78
    %491 = vmatprep.subr.mxu0 0.0
    %492 = vmatpush1.msra.mxu0 %v81
    %493 = vmatprep.subr.mxu0 0.0
    %494 = vmatpush1.msra.mxu0 %v84
    %495 = vmatprep.subr.mxu0 0.0
    %496 = vmatpush1.msra.mxu0 %v87
    %497 = vmatprep.subr.mxu0 0.0
    %498 = vmatpush1.msra.mxu0 %v90
    %499 = vmatprep.subr.mxu0 0.0
    %500 = vmatpush1.msra.mxu0 %v93
    %501 = vmatprep.subr.mxu0 0.0
    %502 = vmatpush1.msra.mxu0 %v96
    %503 = vmatprep.subr.mxu0 0.0
    %504 = vmatpush1.msra.mxu0 %v99
    %505 = vmatprep.subr.mxu0 0.0
    %506 = vmatpush1.msra.mxu0 %v102
    %507 = vmatprep.subr.mxu0 0.0
    %508 = vmatpush1.msra.mxu0 %v105
    %509 = vmatprep.subr.mxu0 0.0
    %510 = vmatpush1.msra.mxu0 %v108
    %511 = vmatprep.subr.mxu0 0.0
    %512 = vmatpush1.msra.mxu0 %v111
    %513 = vmatprep.subr.mxu0 0.0
    %514 = vmatpush1.msra.mxu0 0.0
    %515 = vmatprep.subr.mxu0 0.0
    %516 = vmatpush1.msra.mxu0 0.0
    %517 = vmatprep.subr.mxu0 0.0
    %518 = vmatpush1.msra.mxu0 0.0
    %519 = vmatprep.subr.mxu0 0.0
    %520 = vmatpush1.msra.mxu0 0.0
    %521 = vmatprep.subr.mxu0 0.0
    %522 = vmatpush1.msra.mxu0 0.0
    %523 = vmatprep.subr.mxu0 0.0
    %524 = vmatpush1.msra.mxu0 0.0
    %525 = vmatprep.subr.mxu0 0.0
    %526 = vmatpush1.msra.mxu0 0.0
    %527 = vmatprep.subr.mxu0 0.0
    %528 = vmatpush1.msra.mxu0 0.0
    %529 = vmatprep.subr.mxu0 0.0
    %530 = vmatpush1.msra.mxu0 0.0
    %531 = vmatprep.subr.mxu0 0.0
    %532 = vmatpush1.msra.mxu0 0.0
    %533 = vmatprep.subr.mxu0 0.0
    %534 = vmatpush1.msra.mxu0 0.0
    %535 = vmatprep.subr.mxu0 0.0
    %536 = vmatpush1.msra.mxu0 0.0
    %537 = vmatprep.subr.mxu0 0.0
    %538 = vmatpush1.msra.mxu0 0.0
    %539 = vmatprep.subr.mxu0 0.0
    %540 = vmatpush1.msra.mxu0 0.0
    %541 = vmatprep.subr.mxu0 0.0
    %542 = vmatpush1.msra.mxu0 0.0
    %543 = vmatprep.subr.mxu0 0.0
    %544 = vmatpush1.msra.mxu0 0.0
    %545 = vmatprep.subr.mxu0 0.0
    %546 = vmatpush1.msra.mxu0 0.0
    %547 = vmatprep.subr.mxu0 0.0
    %548 = vmatpush1.msra.mxu0 0.0
    %549 = vmatprep.subr.mxu0 0.0
    %550 = vmatpush1.msra.mxu0 0.0
    %551 = vmatprep.subr.mxu0 0.0
    %552 = vmatpush1.msra.mxu0 0.0
    %553 = vmatprep.mubr.f32.mxu0 0.0
    %554 = vmatmul.mubr.f32.gmra.mrb[0].mxu0 %v371
    %v555 = vpop.f32.mrb[0].mxu0
    %v556 = vadd.f32 %v342, %v555
    %v557 = vpop.f32.mrb[0].mxu0
    %558 = vmatprep.mubr.f32.mxu0 0.0
    %559 = vmatmul.mubr.f32.gmra.mrb[0].mxu0 %v374
    %v560 = vpop.f32.mrb[0].mxu0
    %v561 = vadd.f32 %v347, %v560
    %v562 = vpop.f32.mrb[0].mxu0
    %563 = vmatprep.mubr.f32.mxu0 0.0
    %564 = vmatmul.mubr.f32.gmra.mrb[0].mxu0 %v377
    %v565 = vpop.f32.mrb[0].mxu0
    %v566 = vadd.f32 %v352, %v565
    %v567 = vpop.f32.mrb[0].mxu0
    %568 = vmatprep.mubr.f32.mxu0 0.0
    %569 = vmatmul.mubr.f32.gmra.mrb[0].mxu0 %v380
    %v570 = vpop.f32.mrb[0].mxu0
    %v571 = vadd.f32 %v357, %v570
    %v572 = vpop.f32.mrb[0].mxu0
    %573 = vmatprep.mubr.f32.mxu0 0.0
    %574 = vmatmul.mubr.f32.gmra.mrb[0].mxu0 %v383
    %v575 = vpop.f32.mrb[0].mxu0
    %v576 = vadd.f32 %v362, %v575
    %v577 = vpop.f32.mrb[0].mxu0
    %578 = vmatprep.mubr.f32.mxu0 0.0
    %579 = vmatmul.mubr.f32.gmra.mrb[0].mxu0 %v386
    %v580 = vpop.f32.mrb[0].mxu0
    %v581 = vadd.f32 %v367, %v580
    %v582 = vpop.f32.mrb[0].mxu0
    %583 = vdwg.mxu0
    %v584 = vld [vmem:[%s0 + $0x2] sm:$0xff]
    %v585 = vld [vmem:[%s0 + $0xa] sm:$0xff]
    %v586 = vld [vmem:[%s0 + $0x12] sm:$0xff]
    %v587 = vld [vmem:[%s0 + $0x1a] sm:$0xff]
    %v588 = vld [vmem:[%s0 + $0x22] sm:$0xff]
    %v589 = vld [vmem:[%s0 + $0x2a] sm:$0x3f]
    %s590 = scalar_lea.vmem %s1, 576
    %v591 = vld [vmem:[%s590] sm:$0xff]
    %v592 = vld [vmem:[%s590 + $0x8] sm:$0xff]
    %v593 = vld [vmem:[%s590 + $0x10] sm:$0xff]
    %v594 = vld [vmem:[%s590 + $0x18] sm:$0xff]
    %v595 = vld [vmem:[%s590 + $0x20] sm:$0xff]
    %v596 = vld [vmem:[%s590 + $0x28] sm:$0xff]
    %v597 = vld [vmem:[%s590 + $0x30] sm:$0xff]
    %v598 = vld [vmem:[%s590 + $0x38] sm:$0xff]
    %v599 = vld [vmem:[%s590 + $0x40] sm:$0xff]
    %v600 = vld [vmem:[%s590 + $0x48] sm:$0xff]
    %v601 = vld [vmem:[%s590 + $0x50] sm:$0xff]
    %v602 = vld [vmem:[%s590 + $0x58] sm:$0xff]
    %v603 = vld [vmem:[%s590 + $0x60] sm:$0xff]
    %v604 = vld [vmem:[%s590 + $0x68] sm:$0xff]
    %v605 = vld [vmem:[%s590 + $0x70] sm:$0xff]
    %v606 = vld [vmem:[%s590 + $0x78] sm:$0xff]
    %v607 = vld [vmem:[%s590 + $0x80] sm:$0xff]
    %v608 = vld [vmem:[%s590 + $0x88] sm:$0xff]
    %v609 = vld [vmem:[%s590 + $0x90] sm:$0xff]
    %v610 = vld [vmem:[%s590 + $0x98] sm:$0xff]
    %v611 = vld [vmem:[%s590 + $0xa0] sm:$0xff]
    %v612 = vld [vmem:[%s590 + $0xa8] sm:$0xff]
    %v613 = vld [vmem:[%s590 + $0xb0] sm:$0xff]
    %v614 = vld [vmem:[%s590 + $0xb8] sm:$0xff]
    %v615 = vld [vmem:[%s590 + $0xc0] sm:$0xff]
    %v616 = vld [vmem:[%s590 + $0xc8] sm:$0xff]
    %v617 = vld [vmem:[%s590 + $0xd0] sm:$0xff]
    %v618 = vld [vmem:[%s590 + $0xd8] sm:$0xff]
    %v619 = vld [vmem:[%s590 + $0xe0] sm:$0xff]
    %v620 = vld [vmem:[%s590 + $0xe8] sm:$0xff]
    %v621 = vld [vmem:[%s590 + $0xf0] sm:$0xff]
    %v622 = vld [vmem:[%s590 + $0xf8] sm:$0xff]
    %v623 = vld [vmem:[%s590 + $0x100] sm:$0xff]
    %v624 = vld [vmem:[%s590 + $0x108] sm:$0xff]
    %v625 = vld [vmem:[%s590 + $0x110] sm:$0xff]
    %v626 = vld [vmem:[%s590 + $0x118] sm:$0xff]
    %v628 = vsel %vm155, %v584, 0
    %v631 = vsel %vm155, %v585, 0
    %v634 = vsel %vm155, %v586, 0
    %v637 = vsel %vm155, %v587, 0
    %v640 = vsel %vm155, %v588, 0
    %v643 = vsel %vm155, %v589, 0
    %645 = vmatprep.subr.mxu0 %v592
    %646 = vmatpush1.msra.mxu0 %v591
    %647 = vmatprep.subr.mxu0 %v595
    %648 = vmatpush1.msra.mxu0 %v594
    %649 = vmatprep.subr.mxu0 %v598
    %650 = vmatpush1.msra.mxu0 %v597
    %651 = vmatprep.subr.mxu0 %v601
    %652 = vmatpush1.msra.mxu0 %v600
    %653 = vmatprep.subr.mxu0 %v604
    %654 = vmatpush1.msra.mxu0 %v603
    %655 = vmatprep.subr.mxu0 %v607
    %656 = vmatpush1.msra.mxu0 %v606
    %657 = vmatprep.subr.mxu0 %v610
    %658 = vmatpush1.msra.mxu0 %v609
    %659 = vmatprep.subr.mxu0 %v613
    %660 = vmatpush1.msra.mxu0 %v612
    %661 = vmatprep.subr.mxu0 %v616
    %662 = vmatpush1.msra.mxu0 %v615
    %663 = vmatprep.subr.mxu0 %v619
    %664 = vmatpush1.msra.mxu0 %v618
    %665 = vmatprep.subr.mxu0 %v622
    %666 = vmatpush1.msra.mxu0 %v621
    %667 = vmatprep.subr.mxu0 %v625
    %668 = vmatpush1.msra.mxu0 %v624
    %669 = vmatprep.subr.mxu0 0.0
    %670 = vmatpush1.msra.mxu0 0.0
    %671 = vmatprep.subr.mxu0 0.0
    %672 = vmatpush1.msra.mxu0 0.0
    %673 = vmatprep.subr.mxu0 0.0
    %674 = vmatpush1.msra.mxu0 0.0
    %675 = vmatprep.subr.mxu0 0.0
    %676 = vmatpush1.msra.mxu0 0.0
    %677 = vmatprep.subr.mxu0 0.0
    %678 = vmatpush1.msra.mxu0 0.0
    %679 = vmatprep.subr.mxu0 0.0
    %680 = vmatpush1.msra.mxu0 0.0
    %681 = vmatprep.subr.mxu0 0.0
    %682 = vmatpush1.msra.mxu0 0.0
    %683 = vmatprep.subr.mxu0 0.0
    %684 = vmatpush1.msra.mxu0 0.0
    %685 = vmatprep.subr.mxu0 0.0
    %686 = vmatpush1.msra.mxu0 0.0
    %687 = vmatprep.subr.mxu0 0.0
    %688 = vmatpush1.msra.mxu0 0.0
    %689 = vmatprep.subr.mxu0 0.0
    %690 = vmatpush1.msra.mxu0 0.0
    %691 = vmatprep.subr.mxu0 0.0
    %692 = vmatpush1.msra.mxu0 0.0
    %693 = vmatprep.subr.mxu0 0.0
    %694 = vmatpush1.msra.mxu0 0.0
    %695 = vmatprep.subr.mxu0 0.0
    %696 = vmatpush1.msra.mxu0 0.0
    %697 = vmatprep.subr.mxu0 0.0
    %698 = vmatpush1.msra.mxu0 0.0
    %699 = vmatprep.subr.mxu0 0.0
    %700 = vmatpush1.msra.mxu0 0.0
    %701 = vmatprep.subr.mxu0 0.0
    %702 = vmatpush1.msra.mxu0 0.0
    %703 = vmatprep.subr.mxu0 0.0
    %704 = vmatpush1.msra.mxu0 0.0
    %705 = vmatprep.subr.mxu0 0.0
    %706 = vmatpush1.msra.mxu0 0.0
    %707 = vmatprep.subr.mxu0 0.0
    %708 = vmatpush1.msra.mxu0 0.0
    %709 = vmatprep.mubr.f32.mxu0 0.0
    %710 = vmatmul.mubr.f32.gmra.mrb[0].mxu0 %v628
    %v711 = vpop.f32.mrb[0].mxu0
    %v712 = vadd.f32 0.0, %v711
    %v713 = vpop.f32.mrb[0].mxu0
    %v714 = vadd.f32 0.0, %v713
    %715 = vmatprep.mubr.f32.mxu0 0.0
    %716 = vmatmul.mubr.f32.gmra.mrb[0].mxu0 %v631
    %v717 = vpop.f32.mrb[0].mxu0
    %v718 = vadd.f32 0.0, %v717
    %v719 = vpop.f32.mrb[0].mxu0
    %v720 = vadd.f32 0.0, %v719
    %721 = vmatprep.mubr.f32.mxu0 0.0
    %722 = vmatmul.mubr.f32.gmra.mrb[0].mxu0 %v634
    %v723 = vpop.f32.mrb[0].mxu0
    %v724 = vadd.f32 0.0, %v723
    %v725 = vpop.f32.mrb[0].mxu0
    %v726 = vadd.f32 0.0, %v725
    %727 = vmatprep.mubr.f32.mxu0 0.0
    %728 = vmatmul.mubr.f32.gmra.mrb[0].mxu0 %v637
    %v729 = vpop.f32.mrb[0].mxu0
    %v730 = vadd.f32 0.0, %v729
    %v731 = vpop.f32.mrb[0].mxu0
    %v732 = vadd.f32 0.0, %v731
    %733 = vmatprep.mubr.f32.mxu0 0.0
    %734 = vmatmul.mubr.f32.gmra.mrb[0].mxu0 %v640
    %v735 = vpop.f32.mrb[0].mxu0
    %v736 = vadd.f32 0.0, %v735
    %v737 = vpop.f32.mrb[0].mxu0
    %v738 = vadd.f32 0.0, %v737
    %739 = vmatprep.mubr.f32.mxu0 0.0
    %740 = vmatmul.mubr.f32.gmra.mrb[0].mxu0 %v643
    %v741 = vpop.f32.mrb[0].mxu0
    %v742 = vadd.f32 0.0, %v741
    %v743 = vpop.f32.mrb[0].mxu0
    %v744 = vadd.f32 0.0, %v743
    %745 = vdwg.mxu0
    %746 = vmatprep.subr.mxu0 0.0
    %747 = vmatpush1.msra.mxu0 %v593
    %748 = vmatprep.subr.mxu0 0.0
    %749 = vmatpush1.msra.mxu0 %v596
    %750 = vmatprep.subr.mxu0 0.0
    %751 = vmatpush1.msra.mxu0 %v599
    %752 = vmatprep.subr.mxu0 0.0
    %753 = vmatpush1.msra.mxu0 %v602
    %754 = vmatprep.subr.mxu0 0.0
    %755 = vmatpush1.msra.mxu0 %v605
    %756 = vmatprep.subr.mxu0 0.0
    %757 = vmatpush1.msra.mxu0 %v608
    %758 = vmatprep.subr.mxu0 0.0
    %759 = vmatpush1.msra.mxu0 %v611
    %760 = vmatprep.subr.mxu0 0.0
    %761 = vmatpush1.msra.mxu0 %v614
    %762 = vmatprep.subr.mxu0 0.0
    %763 = vmatpush1.msra.mxu0 %v617
    %764 = vmatprep.subr.mxu0 0.0
    %765 = vmatpush1.msra.mxu0 %v620
    %766 = vmatprep.subr.mxu0 0.0
    %767 = vmatpush1.msra.mxu0 %v623
    %768 = vmatprep.subr.mxu0 0.0
    %769 = vmatpush1.msra.mxu0 %v626
    %770 = vmatprep.subr.mxu0 0.0
    %771 = vmatpush1.msra.mxu0 0.0
    %772 = vmatprep.subr.mxu0 0.0
    %773 = vmatpush1.msra.mxu0 0.0
    %774 = vmatprep.subr.mxu0 0.0
    %775 = vmatpush1.msra.mxu0 0.0
    %776 = vmatprep.subr.mxu0 0.0
    %777 = vmatpush1.msra.mxu0 0.0
    %778 = vmatprep.subr.mxu0 0.0
    %779 = vmatpush1.msra.mxu0 0.0
    %780 = vmatprep.subr.mxu0 0.0
    %781 = vmatpush1.msra.mxu0 0.0
    %782 = vmatprep.subr.mxu0 0.0
    %783 = vmatpush1.msra.mxu0 0.0
    %784 = vmatprep.subr.mxu0 0.0
    %785 = vmatpush1.msra.mxu0 0.0
    %786 = vmatprep.subr.mxu0 0.0
    %787 = vmatpush1.msra.mxu0 0.0
    %788 = vmatprep.subr.mxu0 0.0
    %789 = vmatpush1.msra.mxu0 0.0
    %790 = vmatprep.subr.mxu0 0.0
    %791 = vmatpush1.msra.mxu0 0.0
    %792 = vmatprep.subr.mxu0 0.0
    %793 = vmatpush1.msra.mxu0 0.0
    %794 = vmatprep.subr.mxu0 0.0
    %795 = vmatpush1.msra.mxu0 0.0
    %796 = vmatprep.subr.mxu0 0.0
    %797 = vmatpush1.msra.mxu0 0.0
    %798 = vmatprep.subr.mxu0 0.0
    %799 = vmatpush1.msra.mxu0 0.0
    %800 = vmatprep.subr.mxu0 0.0
    %801 = vmatpush1.msra.mxu0 0.0
    %802 = vmatprep.subr.mxu0 0.0
    %803 = vmatpush1.msra.mxu0 0.0
    %804 = vmatprep.subr.mxu0 0.0
    %805 = vmatpush1.msra.mxu0 0.0
    %806 = vmatprep.subr.mxu0 0.0
    %807 = vmatpush1.msra.mxu0 0.0
    %808 = vmatprep.subr.mxu0 0.0
    %809 = vmatpush1.msra.mxu0 0.0
    %810 = vmatprep.mubr.f32.mxu0 0.0
    %811 = vmatmul.mubr.f32.gmra.mrb[0].mxu0 %v628
    %v812 = vpop.f32.mrb[0].mxu0
    %v813 = vadd.f32 0.0, %v812
    %v814 = vpop.f32.mrb[0].mxu0
    %815 = vmatprep.mubr.f32.mxu0 0.0
    %816 = vmatmul.mubr.f32.gmra.mrb[0].mxu0 %v631
    %v817 = vpop.f32.mrb[0].mxu0
    %v818 = vadd.f32 0.0, %v817
    %v819 = vpop.f32.mrb[0].mxu0
    %820 = vmatprep.mubr.f32.mxu0 0.0
    %821 = vmatmul.mubr.f32.gmra.mrb[0].mxu0 %v634
    %v822 = vpop.f32.mrb[0].mxu0
    %v823 = vadd.f32 0.0, %v822
    %v824 = vpop.f32.mrb[0].mxu0
    %825 = vmatprep.mubr.f32.mxu0 0.0
    %826 = vmatmul.mubr.f32.gmra.mrb[0].mxu0 %v637
    %v827 = vpop.f32.mrb[0].mxu0
    %v828 = vadd.f32 0.0, %v827
    %v829 = vpop.f32.mrb[0].mxu0
    %830 = vmatprep.mubr.f32.mxu0 0.0
    %831 = vmatmul.mubr.f32.gmra.mrb[0].mxu0 %v640
    %v832 = vpop.f32.mrb[0].mxu0
    %v833 = vadd.f32 0.0, %v832
    %v834 = vpop.f32.mrb[0].mxu0
    %835 = vmatprep.mubr.f32.mxu0 0.0
    %836 = vmatmul.mubr.f32.gmra.mrb[0].mxu0 %v643
    %v837 = vpop.f32.mrb[0].mxu0
    %v838 = vadd.f32 0.0, %v837
    %v839 = vpop.f32.mrb[0].mxu0
    %840 = vdwg.mxu0
    %v841 = vadd.f32 %v455, %v712
    %v842 = vadd.f32 %v457, %v714
    %v843 = vadd.f32 %v556, %v813
    %v844 = vadd.f32 %v461, %v718
    %v845 = vadd.f32 %v463, %v720
    %v846 = vadd.f32 %v561, %v818
    %v847 = vadd.f32 %v467, %v724
    %v848 = vadd.f32 %v469, %v726
    %v849 = vadd.f32 %v566, %v823
    %v850 = vadd.f32 %v473, %v730
    %v851 = vadd.f32 %v475, %v732
    %v852 = vadd.f32 %v571, %v828
    %v853 = vadd.f32 %v479, %v736
    %v854 = vadd.f32 %v481, %v738
    %v855 = vadd.f32 %v576, %v833
    %v856 = vadd.f32 %v485, %v742
    %v857 = vadd.f32 %v487, %v744
    %v858 = vadd.f32 %v581, %v838
    %v860 = vlaneseq
    %v861 = vshrl.u32 %v860, 7
    %v862 = vsub.s32 0, %v861
    %v863 = vrot.slane %v69, %v862
    %v864 = vlaneseq
    %v865 = vshrl.u32 %v864, 7
    %v866 = vsub.s32 1, %v865
    %v867 = vrot.slane %v69, %v866
    %v868 = vlaneseq
    %v869 = vshrl.u32 %v868, 7
    %v870 = vsub.s32 2, %v869
    %v871 = vrot.slane %v69, %v870
    %v875 = vadd.f32 %v841, %v863
    %v876 = vadd.f32 %v842, %v867
    %v877 = vadd.f32 %v843, %v871
    %v878 = vadd.f32 %v844, %v863
    %v879 = vadd.f32 %v845, %v867
    %v880 = vadd.f32 %v846, %v871
    %v881 = vadd.f32 %v847, %v863
    %v882 = vadd.f32 %v848, %v867
    %v883 = vadd.f32 %v849, %v871
    %v884 = vadd.f32 %v850, %v863
    %v885 = vadd.f32 %v851, %v867
    %v886 = vadd.f32 %v852, %v871
    %v887 = vadd.f32 %v853, %v863
    %v888 = vadd.f32 %v854, %v867
    %v889 = vadd.f32 %v855, %v871
    %v890 = vadd.f32 %v856, %v863
    %v891 = vadd.f32 %v857, %v867
    %v892 = vadd.f32 %v858, %v871
    %v893 = vmax.f32 %v875, 0.0
    %v894 = vmax.f32 %v876, 0.0
    %v895 = vmax.f32 %v877, 0.0
    %v896 = vmax.f32 %v878, 0.0
    %v897 = vmax.f32 %v879, 0.0
    %v898 = vmax.f32 %v880, 0.0
    %v899 = vmax.f32 %v881, 0.0
    %v900 = vmax.f32 %v882, 0.0
    %v901 = vmax.f32 %v883, 0.0
    %v902 = vmax.f32 %v884, 0.0
    %v903 = vmax.f32 %v885, 0.0
    %v904 = vmax.f32 %v886, 0.0
    %v905 = vmax.f32 %v887, 0.0
    %v906 = vmax.f32 %v888, 0.0
    %v907 = vmax.f32 %v889, 0.0
    %v908 = vmax.f32 %v890, 0.0
    %v909 = vmax.f32 %v891, 0.0
    %v910 = vmax.f32 %v892, 0.0
    %v911 = vld [vmem:[%s2] sm:$0xff]
    %v912 = vld [vmem:[%s2 + $0x8] sm:$0xff]
    %v913 = vld [vmem:[%s2 + $0x10] sm:$0xff]
    %v914 = vld [vmem:[%s2 + $0x18] sm:$0xff]
    %v915 = vld [vmem:[%s2 + $0x20] sm:$0xff]
    %v916 = vld [vmem:[%s2 + $0x28] sm:$0xff]
    %v917 = vld [vmem:[%s2 + $0x30] sm:$0xff]
    %v918 = vld [vmem:[%s2 + $0x38] sm:$0xff]
    %v919 = vld [vmem:[%s2 + $0x40] sm:$0xff]
    %v920 = vld [vmem:[%s2 + $0x48] sm:$0xff]
    %v921 = vld [vmem:[%s2 + $0x50] sm:$0xff]
    %v922 = vld [vmem:[%s2 + $0x58] sm:$0xff]
    %v923 = vld [vmem:[%s2 + $0x60] sm:$0xff]
    %v924 = vld [vmem:[%s2 + $0x68] sm:$0xff]
    %v925 = vld [vmem:[%s2 + $0x70] sm:$0xff]
    %v926 = vld [vmem:[%s2 + $0x78] sm:$0xff]
    %v927 = vld [vmem:[%s2 + $0x80] sm:$0xff]
    %v928 = vld [vmem:[%s2 + $0x88] sm:$0xff]
    %v929 = vld [vmem:[%s2 + $0x90] sm:$0xff]
    %v930 = vld [vmem:[%s2 + $0x98] sm:$0xff]
    %v931 = vld [vmem:[%s2 + $0xa0] sm:$0xff]
    %v932 = vld [vmem:[%s2 + $0xa8] sm:$0xff]
    %v933 = vld [vmem:[%s2 + $0xb0] sm:$0xff]
    %v934 = vld [vmem:[%s2 + $0xb8] sm:$0xff]
    %v935 = vld [vmem:[%s2 + $0xc0] sm:$0xff]
    %v936 = vld [vmem:[%s2 + $0xc8] sm:$0xff]
    %v937 = vld [vmem:[%s2 + $0xd0] sm:$0xff]
    %v938 = vld [vmem:[%s2 + $0xd8] sm:$0xff]
    %v939 = vld [vmem:[%s2 + $0xe0] sm:$0xff]
    %v940 = vld [vmem:[%s2 + $0xe8] sm:$0xff]
    %v941 = vld [vmem:[%s2 + $0xf0] sm:$0xff]
    %v942 = vld [vmem:[%s2 + $0xf8] sm:$0xff]
    %v943 = vld [vmem:[%s2 + $0x100] sm:$0xff]
    %v944 = vld [vmem:[%s2 + $0x108] sm:$0xff]
    %v945 = vld [vmem:[%s2 + $0x110] sm:$0xff]
    %v946 = vld [vmem:[%s2 + $0x118] sm:$0xff]
    %v947 = vld [vmem:[%s2 + $0x120] sm:$0xff]
    %v948 = vld [vmem:[%s2 + $0x128] sm:$0xff]
    %v949 = vld [vmem:[%s2 + $0x130] sm:$0xff]
    %v950 = vld [vmem:[%s2 + $0x138] sm:$0xff]
    %v951 = vld [vmem:[%s2 + $0x140] sm:$0xff]
    %v952 = vld [vmem:[%s2 + $0x148] sm:$0xff]
    %v953 = vld [vmem:[%s2 + $0x150] sm:$0xff]
    %v954 = vld [vmem:[%s2 + $0x158] sm:$0xff]
    %v955 = vld [vmem:[%s2 + $0x160] sm:$0xff]
    %v956 = vld [vmem:[%s2 + $0x168] sm:$0xff]
    %v957 = vld [vmem:[%s2 + $0x170] sm:$0xff]
    %v958 = vld [vmem:[%s2 + $0x178] sm:$0xff]
    %v959 = vld [vmem:[%s2 + $0x180] sm:$0xff]
    %v960 = vld [vmem:[%s2 + $0x188] sm:$0xff]
    %v961 = vld [vmem:[%s2 + $0x190] sm:$0xff]
    %v962 = vld [vmem:[%s2 + $0x198] sm:$0xff]
    %v963 = vld [vmem:[%s2 + $0x1a0] sm:$0xff]
    %v964 = vld [vmem:[%s2 + $0x1a8] sm:$0xff]
    %v965 = vld [vmem:[%s2 + $0x1b0] sm:$0xff]
    %v966 = vld [vmem:[%s2 + $0x1b8] sm:$0xff]
    %v967 = vld [vmem:[%s2 + $0x1c0] sm:$0xff]
    %v968 = vld [vmem:[%s2 + $0x1c8] sm:$0xff]
    %v969 = vld [vmem:[%s2 + $0x1d0] sm:$0xff]
    %v970 = vld [vmem:[%s2 + $0x1d8] sm:$0xff]
    %v971 = vld [vmem:[%s2 + $0x1e0] sm:$0xff]
    %v972 = vld [vmem:[%s2 + $0x1e8] sm:$0xff]
    %v973 = vld [vmem:[%s2 + $0x1f0] sm:$0xff]
    %v974 = vld [vmem:[%s2 + $0x1f8] sm:$0xff]
    %v975 = vld [vmem:[%s2 + $0x200] sm:$0xff]
    %v976 = vld [vmem:[%s2 + $0x208] sm:$0xff]
    %v977 = vld [vmem:[%s2 + $0x210] sm:$0xff]
    %v978 = vld [vmem:[%s2 + $0x218] sm:$0xff]
    %v979 = vld [vmem:[%s2 + $0x220] sm:$0xff]
    %v980 = vld [vmem:[%s2 + $0x228] sm:$0xff]
    %v981 = vld [vmem:[%s2 + $0x230] sm:$0xff]
    %v982 = vld [vmem:[%s2 + $0x238] sm:$0xff]
    %v983 = vld [vmem:[%s2 + $0x240] sm:$0xff]
    %v984 = vld [vmem:[%s2 + $0x248] sm:$0xff]
    %v985 = vld [vmem:[%s2 + $0x250] sm:$0xff]
    %v986 = vld [vmem:[%s2 + $0x258] sm:$0xff]
    %v987 = vld [vmem:[%s2 + $0x260] sm:$0xff]
    %v988 = vld [vmem:[%s2 + $0x268] sm:$0xff]
    %v989 = vld [vmem:[%s2 + $0x270] sm:$0xff]
    %v990 = vld [vmem:[%s2 + $0x278] sm:$0xff]
    %v991 = vld [vmem:[%s2 + $0x280] sm:$0xff]
    %v992 = vld [vmem:[%s2 + $0x288] sm:$0xff]
    %v993 = vld [vmem:[%s2 + $0x290] sm:$0xff]
    %v994 = vld [vmem:[%s2 + $0x298] sm:$0xff]
    %v995 = vld [vmem:[%s2 + $0x2a0] sm:$0xff]
    %v996 = vld [vmem:[%s2 + $0x2a8] sm:$0xff]
    %v997 = vld [vmem:[%s2 + $0x2b0] sm:$0xff]
    %v998 = vld [vmem:[%s2 + $0x2b8] sm:$0xff]
    %v1000 = vsel %vm155, %v895, 0
    %v1003 = vsel %vm155, %v898, 0
    %v1006 = vsel %vm155, %v901, 0
    %v1009 = vsel %vm155, %v904, 0
    %v1012 = vsel %vm155, %v907, 0
    %v1015 = vsel %vm155, %v910, 0
    %1017 = vmatprep.subr.mxu0 %v912
    %1018 = vmatpush1.msra.mxu0 %v911
    %1019 = vmatprep.subr.mxu0 %v914
    %1020 = vmatpush1.msra.mxu0 %v913
    %1021 = vmatprep.subr.mxu0 %v916
    %1022 = vmatpush1.msra.mxu0 %v915
    %1023 = vmatprep.subr.mxu0 %v918
    %1024 = vmatpush1.msra.mxu0 %v917
    %1025 = vmatprep.subr.mxu0 %v920
    %1026 = vmatpush1.msra.mxu0 %v919
    %1027 = vmatprep.subr.mxu0 %v922
    %1028 = vmatpush1.msra.mxu0 %v921
    %1029 = vmatprep.subr.mxu0 %v924
    %1030 = vmatpush1.msra.mxu0 %v923
    %1031 = vmatprep.subr.mxu0 %v926
    %1032 = vmatpush1.msra.mxu0 %v925
    %1033 = vmatprep.subr.mxu0 %v928
    %1034 = vmatpush1.msra.mxu0 %v927
    %1035 = vmatprep.subr.mxu0 %v930
    %1036 = vmatpush1.msra.mxu0 %v929
    %1037 = vmatprep.subr.mxu0 %v932
    %1038 = vmatpush1.msra.mxu0 %v931
    %1039 = vmatprep.subr.mxu0 %v934
    %1040 = vmatpush1.msra.mxu0 %v933
    %1041 = vmatprep.subr.mxu0 %v936
    %1042 = vmatpush1.msra.mxu0 %v935
    %1043 = vmatprep.subr.mxu0 %v938
    %1044 = vmatpush1.msra.mxu0 %v937
    %1045 = vmatprep.subr.mxu0 %v940
    %1046 = vmatpush1.msra.mxu0 %v939
    %1047 = vmatprep.subr.mxu0 %v942
    %1048 = vmatpush1.msra.mxu0 %v941
    %1049 = vmatprep.subr.mxu0 %v944
    %1050 = vmatpush1.msra.mxu0 %v943
    %1051 = vmatprep.subr.mxu0 %v946
    %1052 = vmatpush1.msra.mxu0 %v945
    %1053 = vmatprep.subr.mxu0 %v948
    %1054 = vmatpush1.msra.mxu0 %v947
    %1055 = vmatprep.subr.mxu0 %v950
    %1056 = vmatpush1.msra.mxu0 %v949
    %1057 = vmatprep.subr.mxu0 %v952
    %1058 = vmatpush1.msra.mxu0 %v951
    %1059 = vmatprep.subr.mxu0 %v954
    %1060 = vmatpush1.msra.mxu0 %v953
    %1061 = vmatprep.subr.mxu0 %v956
    %1062 = vmatpush1.msra.mxu0 %v955
    %1063 = vmatprep.subr.mxu0 %v958
    %1064 = vmatpush1.msra.mxu0 %v957
    %1065 = vmatprep.subr.mxu0 %v960
    %1066 = vmatpush1.msra.mxu0 %v959
    %1067 = vmatprep.subr.mxu0 %v962
    %1068 = vmatpush1.msra.mxu0 %v961
    %1069 = vmatprep.subr.mxu0 %v964
    %1070 = vmatpush1.msra.mxu0 %v963
    %1071 = vmatprep.subr.mxu0 %v966
    %1072 = vmatpush1.msra.mxu0 %v965
    %1073 = vmatprep.subr.mxu0 %v968
    %1074 = vmatpush1.msra.mxu0 %v967
    %1075 = vmatprep.subr.mxu0 %v970
    %1076 = vmatpush1.msra.mxu0 %v969
    %1077 = vmatprep.subr.mxu0 %v972
    %1078 = vmatpush1.msra.mxu0 %v971
    %1079 = vmatprep.subr.mxu0 %v974
    %1080 = vmatpush1.msra.mxu0 %v973
    %1081 = vmatprep.mubr.f32.mxu0 %v894
    %1082 = vmatmul.mubr.f32.gmra.mrb[0].mxu0 %v893
    %v1083 = vpop.f32.mrb[0].mxu0
    %v1084 = vadd.f32 0.0, %v1083
    %v1085 = vpop.f32.mrb[0].mxu0
    %v1086 = vadd.f32 0.0, %v1085
    %1087 = vmatprep.mubr.f32.mxu0 %v897
    %1088 = vmatmul.mubr.f32.gmra.mrb[0].mxu0 %v896
    %v1089 = vpop.f32.mrb[0].mxu0
    %v1090 = vadd.f32 0.0, %v1089
    %v1091 = vpop.f32.mrb[0].mxu0
    %v1092 = vadd.f32 0.0, %v1091
    %1093 = vmatprep.mubr.f32.mxu0 %v900
    %1094 = vmatmul.mubr.f32.gmra.mrb[0].mxu0 %v899
    %v1095 = vpop.f32.mrb[0].mxu0
    %v1096 = vadd.f32 0.0, %v1095
    %v1097 = vpop.f32.mrb[0].mxu0
    %v1098 = vadd.f32 0.0, %v1097
    %1099 = vmatprep.mubr.f32.mxu0 %v903
    %1100 = vmatmul.mubr.f32.gmra.mrb[0].mxu0 %v902
    %v1101 = vpop.f32.mrb[0].mxu0
    %v1102 = vadd.f32 0.0, %v1101
    %v1103 = vpop.f32.mrb[0].mxu0
    %v1104 = vadd.f32 0.0, %v1103
    %1105 = vmatprep.mubr.f32.mxu0 %v906
    %1106 = vmatmul.mubr.f32.gmra.mrb[0].mxu0 %v905
    %v1107 = vpop.f32.mrb[0].mxu0
    %v1108 = vadd.f32 0.0, %v1107
    %v1109 = vpop.f32.mrb[0].mxu0
    %v1110 = vadd.f32 0.0, %v1109
    %1111 = vmatprep.mubr.f32.mxu0 %v909
    %1112 = vmatmul.mubr.f32.gmra.mrb[0].mxu0 %v908
    %v1113 = vpop.f32.mrb[0].mxu0
    %v1114 = vadd.f32 0.0, %v1113
    %v1115 = vpop.f32.mrb[0].mxu0
    %v1116 = vadd.f32 0.0, %v1115
    %1117 = vdwg.mxu0
    %1118 = vmatprep.subr.mxu0 %v976
    %1119 = vmatpush1.msra.mxu0 %v975
    %1120 = vmatprep.subr.mxu0 %v978
    %1121 = vmatpush1.msra.mxu0 %v977
    %1122 = vmatprep.subr.mxu0 %v980
    %1123 = vmatpush1.msra.mxu0 %v979
    %1124 = vmatprep.subr.mxu0 %v982
    %1125 = vmatpush1.msra.mxu0 %v981
    %1126 = vmatprep.subr.mxu0 %v984
    %1127 = vmatpush1.msra.mxu0 %v983
    %1128 = vmatprep.subr.mxu0 %v986
    %1129 = vmatpush1.msra.mxu0 %v985
    %1130 = vmatprep.subr.mxu0 %v988
    %1131 = vmatpush1.msra.mxu0 %v987
    %1132 = vmatprep.subr.mxu0 %v990
    %1133 = vmatpush1.msra.mxu0 %v989
    %1134 = vmatprep.subr.mxu0 %v992
    %1135 = vmatpush1.msra.mxu0 %v991
    %1136 = vmatprep.subr.mxu0 %v994
    %1137 = vmatpush1.msra.mxu0 %v993
    %1138 = vmatprep.subr.mxu0 %v996
    %1139 = vmatpush1.msra.mxu0 %v995
    %1140 = vmatprep.subr.mxu0 %v998
    %1141 = vmatpush1.msra.mxu0 %v997
    %1142 = vmatprep.subr.mxu0 0.0
    %1143 = vmatpush1.msra.mxu0 0.0
    %1144 = vmatprep.subr.mxu0 0.0
    %1145 = vmatpush1.msra.mxu0 0.0
    %1146 = vmatprep.subr.mxu0 0.0
    %1147 = vmatpush1.msra.mxu0 0.0
    %1148 = vmatprep.subr.mxu0 0.0
    %1149 = vmatpush1.msra.mxu0 0.0
    %1150 = vmatprep.subr.mxu0 0.0
    %1151 = vmatpush1.msra.mxu0 0.0
    %1152 = vmatprep.subr.mxu0 0.0
    %1153 = vmatpush1.msra.mxu0 0.0
    %1154 = vmatprep.subr.mxu0 0.0
    %1155 = vmatpush1.msra.mxu0 0.0
    %1156 = vmatprep.subr.mxu0 0.0
    %1157 = vmatpush1.msra.mxu0 0.0
    %1158 = vmatprep.subr.mxu0 0.0
    %1159 = vmatpush1.msra.mxu0 0.0
    %1160 = vmatprep.subr.mxu0 0.0
    %1161 = vmatpush1.msra.mxu0 0.0
    %1162 = vmatprep.subr.mxu0 0.0
    %1163 = vmatpush1.msra.mxu0 0.0
    %1164 = vmatprep.subr.mxu0 0.0
    %1165 = vmatpush1.msra.mxu0 0.0
    %1166 = vmatprep.subr.mxu0 0.0
    %1167 = vmatpush1.msra.mxu0 0.0
    %1168 = vmatprep.subr.mxu0 0.0
    %1169 = vmatpush1.msra.mxu0 0.0
    %1170 = vmatprep.subr.mxu0 0.0
    %1171 = vmatpush1.msra.mxu0 0.0
    %1172 = vmatprep.subr.mxu0 0.0
    %1173 = vmatpush1.msra.mxu0 0.0
    %1174 = vmatprep.subr.mxu0 0.0
    %1175 = vmatpush1.msra.mxu0 0.0
    %1176 = vmatprep.subr.mxu0 0.0
    %1177 = vmatpush1.msra.mxu0 0.0
    %1178 = vmatprep.subr.mxu0 0.0
    %1179 = vmatpush1.msra.mxu0 0.0
    %1180 = vmatprep.subr.mxu0 0.0
    %1181 = vmatpush1.msra.mxu0 0.0
    %1182 = vmatprep.mubr.f32.mxu0 0.0
    %1183 = vmatmul.mubr.f32.gmra.mrb[0].mxu0 %v1000
    %v1184 = vpop.f32.mrb[0].mxu0
    %v1185 = vadd.f32 %v1084, %v1184
    %v1186 = vpop.f32.mrb[0].mxu0
    %v1187 = vadd.f32 %v1086, %v1186
    %1188 = vmatprep.mubr.f32.mxu0 0.0
    %1189 = vmatmul.mubr.f32.gmra.mrb[0].mxu0 %v1003
    %v1190 = vpop.f32.mrb[0].mxu0
    %v1191 = vadd.f32 %v1090, %v1190
    %v1192 = vpop.f32.mrb[0].mxu0
    %v1193 = vadd.f32 %v1092, %v1192
    %1194 = vmatprep.mubr.f32.mxu0 0.0
    %1195 = vmatmul.mubr.f32.gmra.mrb[0].mxu0 %v1006
    %v1196 = vpop.f32.mrb[0].mxu0
    %v1197 = vadd.f32 %v1096, %v1196
    %v1198 = vpop.f32.mrb[0].mxu0
    %v1199 = vadd.f32 %v1098, %v1198
    %1200 = vmatprep.mubr.f32.mxu0 0.0
    %1201 = vmatmul.mubr.f32.gmra.mrb[0].mxu0 %v1009
    %v1202 = vpop.f32.mrb[0].mxu0
    %v1203 = vadd.f32 %v1102, %v1202
    %v1204 = vpop.f32.mrb[0].mxu0
    %v1205 = vadd.f32 %v1104, %v1204
    %1206 = vmatprep.mubr.f32.mxu0 0.0
    %1207 = vmatmul.mubr.f32.gmra.mrb[0].mxu0 %v1012
    %v1208 = vpop.f32.mrb[0].mxu0
    %v1209 = vadd.f32 %v1108, %v1208
    %v1210 = vpop.f32.mrb[0].mxu0
    %v1211 = vadd.f32 %v1110, %v1210
    %1212 = vmatprep.mubr.f32.mxu0 0.0
    %1213 = vmatmul.mubr.f32.gmra.mrb[0].mxu0 %v1015
    %v1214 = vpop.f32.mrb[0].mxu0
    %v1215 = vadd.f32 %v1114, %v1214
    %v1216 = vpop.f32.mrb[0].mxu0
    %v1217 = vadd.f32 %v1116, %v1216
    %1218 = vdwg.mxu0
    %s1219 = scalar_lea.vmem %s2, 704
    %v1220 = vld [vmem:[%s1219] sm:$0xff]
    %v1221 = vld [vmem:[%s1219 + $0x8] sm:$0xff]
    %v1222 = vld [vmem:[%s1219 + $0x10] sm:$0xff]
    %v1223 = vld [vmem:[%s1219 + $0x18] sm:$0xff]
    %v1224 = vld [vmem:[%s1219 + $0x20] sm:$0xff]
    %v1225 = vld [vmem:[%s1219 + $0x28] sm:$0xff]
    %v1226 = vld [vmem:[%s1219 + $0x30] sm:$0xff]
    %v1227 = vld [vmem:[%s1219 + $0x38] sm:$0xff]
    %v1228 = vld [vmem:[%s1219 + $0x40] sm:$0xff]
    %v1229 = vld [vmem:[%s1219 + $0x48] sm:$0xff]
    %v1230 = vld [vmem:[%s1219 + $0x50] sm:$0xff]
    %v1231 = vld [vmem:[%s1219 + $0x58] sm:$0xff]
    %v1232 = vld [vmem:[%s1219 + $0x60] sm:$0xff]
    %v1233 = vld [vmem:[%s1219 + $0x68] sm:$0xff]
    %v1234 = vld [vmem:[%s1219 + $0x70] sm:$0xff]
    %v1235 = vld [vmem:[%s1219 + $0x78] sm:$0xff]
    %v1236 = vld [vmem:[%s1219 + $0x80] sm:$0xff]
    %v1237 = vld [vmem:[%s1219 + $0x88] sm:$0xff]
    %v1238 = vld [vmem:[%s1219 + $0x90] sm:$0xff]
    %v1239 = vld [vmem:[%s1219 + $0x98] sm:$0xff]
    %v1240 = vld [vmem:[%s1219 + $0xa0] sm:$0xff]
    %v1241 = vld [vmem:[%s1219 + $0xa8] sm:$0xff]
    %v1242 = vld [vmem:[%s1219 + $0xb0] sm:$0xff]
    %v1243 = vld [vmem:[%s1219 + $0xb8] sm:$0xff]
    %v1244 = vld [vmem:[%s1219 + $0xc0] sm:$0xff]
    %v1245 = vld [vmem:[%s1219 + $0xc8] sm:$0xff]
    %v1246 = vld [vmem:[%s1219 + $0xd0] sm:$0xff]
    %v1247 = vld [vmem:[%s1219 + $0xd8] sm:$0xff]
    %v1248 = vld [vmem:[%s1219 + $0xe0] sm:$0xff]
    %v1249 = vld [vmem:[%s1219 + $0xe8] sm:$0xff]
    %v1250 = vld [vmem:[%s1219 + $0xf0] sm:$0xff]
    %v1251 = vld [vmem:[%s1219 + $0xf8] sm:$0xff]
    %v1252 = vld [vmem:[%s1219 + $0x100] sm:$0xff]
    %v1253 = vld [vmem:[%s1219 + $0x108] sm:$0xff]
    %v1254 = vld [vmem:[%s1219 + $0x110] sm:$0xff]
    %v1255 = vld [vmem:[%s1219 + $0x118] sm:$0xff]
    %v1256 = vld [vmem:[%s1219 + $0x120] sm:$0xff]
    %v1257 = vld [vmem:[%s1219 + $0x128] sm:$0xff]
    %v1258 = vld [vmem:[%s1219 + $0x130] sm:$0xff]
    %v1259 = vld [vmem:[%s1219 + $0x138] sm:$0xff]
    %v1260 = vld [vmem:[%s1219 + $0x140] sm:$0xff]
    %v1261 = vld [vmem:[%s1219 + $0x148] sm:$0xff]
    %v1262 = vld [vmem:[%s1219 + $0x150] sm:$0xff]
    %v1263 = vld [vmem:[%s1219 + $0x158] sm:$0xff]
    %v1264 = vld [vmem:[%s1219 + $0x160] sm:$0xff]
    %v1265 = vld [vmem:[%s1219 + $0x168] sm:$0xff]
    %v1266 = vld [vmem:[%s1219 + $0x170] sm:$0xff]
    %v1267 = vld [vmem:[%s1219 + $0x178] sm:$0xff]
    %v1268 = vld [vmem:[%s1219 + $0x180] sm:$0xff]
    %v1269 = vld [vmem:[%s1219 + $0x188] sm:$0xff]
    %v1270 = vld [vmem:[%s1219 + $0x190] sm:$0xff]
    %v1271 = vld [vmem:[%s1219 + $0x198] sm:$0xff]
    %v1272 = vld [vmem:[%s1219 + $0x1a0] sm:$0xff]
    %v1273 = vld [vmem:[%s1219 + $0x1a8] sm:$0xff]
    %v1274 = vld [vmem:[%s1219 + $0x1b0] sm:$0xff]
    %v1275 = vld [vmem:[%s1219 + $0x1b8] sm:$0xff]
    %v1276 = vld [vmem:[%s1219 + $0x1c0] sm:$0xff]
    %v1277 = vld [vmem:[%s1219 + $0x1c8] sm:$0xff]
    %v1278 = vld [vmem:[%s1219 + $0x1d0] sm:$0xff]
    %v1279 = vld [vmem:[%s1219 + $0x1d8] sm:$0xff]
    %v1280 = vld [vmem:[%s1219 + $0x1e0] sm:$0xff]
    %v1281 = vld [vmem:[%s1219 + $0x1e8] sm:$0xff]
    %v1282 = vld [vmem:[%s1219 + $0x1f0] sm:$0xff]
    %v1283 = vld [vmem:[%s1219 + $0x1f8] sm:$0xff]
    %v1284 = vld [vmem:[%s1219 + $0x200] sm:$0xff]
    %v1285 = vld [vmem:[%s1219 + $0x208] sm:$0xff]
    %v1286 = vld [vmem:[%s1219 + $0x210] sm:$0xff]
    %v1287 = vld [vmem:[%s1219 + $0x218] sm:$0xff]
    %v1288 = vld [vmem:[%s1219 + $0x220] sm:$0xff]
    %v1289 = vld [vmem:[%s1219 + $0x228] sm:$0xff]
    %v1290 = vld [vmem:[%s1219 + $0x230] sm:$0xff]
    %v1291 = vld [vmem:[%s1219 + $0x238] sm:$0xff]
    %v1292 = vld [vmem:[%s1219 + $0x240] sm:$0xff]
    %v1293 = vld [vmem:[%s1219 + $0x248] sm:$0xff]
    %v1294 = vld [vmem:[%s1219 + $0x250] sm:$0xff]
    %v1295 = vld [vmem:[%s1219 + $0x258] sm:$0xff]
    %v1296 = vld [vmem:[%s1219 + $0x260] sm:$0xff]
    %v1297 = vld [vmem:[%s1219 + $0x268] sm:$0xff]
    %v1298 = vld [vmem:[%s1219 + $0x270] sm:$0xff]
    %v1299 = vld [vmem:[%s1219 + $0x278] sm:$0xff]
    %v1300 = vld [vmem:[%s1219 + $0x280] sm:$0xff]
    %v1301 = vld [vmem:[%s1219 + $0x288] sm:$0xff]
    %v1302 = vld [vmem:[%s1219 + $0x290] sm:$0xff]
    %v1303 = vld [vmem:[%s1219 + $0x298] sm:$0xff]
    %v1304 = vld [vmem:[%s1219 + $0x2a0] sm:$0xff]
    %v1305 = vld [vmem:[%s1219 + $0x2a8] sm:$0xff]
    %v1306 = vld [vmem:[%s1219 + $0x2b0] sm:$0xff]
    %v1307 = vld [vmem:[%s1219 + $0x2b8] sm:$0xff]
    %1308 = vmatprep.subr.mxu0 %v1221
    %1309 = vmatpush1.msra.mxu0 %v1220
    %1310 = vmatprep.subr.mxu0 %v1223
    %1311 = vmatpush1.msra.mxu0 %v1222
    %1312 = vmatprep.subr.mxu0 %v1225
    %1313 = vmatpush1.msra.mxu0 %v1224
    %1314 = vmatprep.subr.mxu0 %v1227
    %1315 = vmatpush1.msra.mxu0 %v1226
    %1316 = vmatprep.subr.mxu0 %v1229
    %1317 = vmatpush1.msra.mxu0 %v1228
    %1318 = vmatprep.subr.mxu0 %v1231
    %1319 = vmatpush1.msra.mxu0 %v1230
    %1320 = vmatprep.subr.mxu0 %v1233
    %1321 = vmatpush1.msra.mxu0 %v1232
    %1322 = vmatprep.subr.mxu0 %v1235
    %1323 = vmatpush1.msra.mxu0 %v1234
    %1324 = vmatprep.subr.mxu0 %v1237
    %1325 = vmatpush1.msra.mxu0 %v1236
    %1326 = vmatprep.subr.mxu0 %v1239
    %1327 = vmatpush1.msra.mxu0 %v1238
    %1328 = vmatprep.subr.mxu0 %v1241
    %1329 = vmatpush1.msra.mxu0 %v1240
    %1330 = vmatprep.subr.mxu0 %v1243
    %1331 = vmatpush1.msra.mxu0 %v1242
    %1332 = vmatprep.subr.mxu0 %v1245
    %1333 = vmatpush1.msra.mxu0 %v1244
    %1334 = vmatprep.subr.mxu0 %v1247
    %1335 = vmatpush1.msra.mxu0 %v1246
    %1336 = vmatprep.subr.mxu0 %v1249
    %1337 = vmatpush1.msra.mxu0 %v1248
    %1338 = vmatprep.subr.mxu0 %v1251
    %1339 = vmatpush1.msra.mxu0 %v1250
    %1340 = vmatprep.subr.mxu0 %v1253
    %1341 = vmatpush1.msra.mxu0 %v1252
    %1342 = vmatprep.subr.mxu0 %v1255
    %1343 = vmatpush1.msra.mxu0 %v1254
    %1344 = vmatprep.subr.mxu0 %v1257
    %1345 = vmatpush1.msra.mxu0 %v1256
    %1346 = vmatprep.subr.mxu0 %v1259
    %1347 = vmatpush1.msra.mxu0 %v1258
    %1348 = vmatprep.subr.mxu0 %v1261
    %1349 = vmatpush1.msra.mxu0 %v1260
    %1350 = vmatprep.subr.mxu0 %v1263
    %1351 = vmatpush1.msra.mxu0 %v1262
    %1352 = vmatprep.subr.mxu0 %v1265
    %1353 = vmatpush1.msra.mxu0 %v1264
    %1354 = vmatprep.subr.mxu0 %v1267
    %1355 = vmatpush1.msra.mxu0 %v1266
    %1356 = vmatprep.subr.mxu0 %v1269
    %1357 = vmatpush1.msra.mxu0 %v1268
    %1358 = vmatprep.subr.mxu0 %v1271
    %1359 = vmatpush1.msra.mxu0 %v1270
    %1360 = vmatprep.subr.mxu0 %v1273
    %1361 = vmatpush1.msra.mxu0 %v1272
    %1362 = vmatprep.subr.mxu0 %v1275
    %1363 = vmatpush1.msra.mxu0 %v1274
    %1364 = vmatprep.subr.mxu0 %v1277
    %1365 = vmatpush1.msra.mxu0 %v1276
    %1366 = vmatprep.subr.mxu0 %v1279
    %1367 = vmatpush1.msra.mxu0 %v1278
    %1368 = vmatprep.subr.mxu0 %v1281
    %1369 = vmatpush1.msra.mxu0 %v1280
    %1370 = vmatprep.subr.mxu0 %v1283
    %1371 = vmatpush1.msra.mxu0 %v1282
    %1372 = vmatprep.mubr.f32.mxu0 %v894
    %1373 = vmatmul.mubr.f32.gmra.mrb[0].mxu0 %v893
    %v1374 = vpop.f32.mrb[0].mxu0
    %v1375 = vadd.f32 0.0, %v1374
    %v1376 = vpop.f32.mrb[0].mxu0
    %v1377 = vadd.f32 0.0, %v1376
    %1378 = vmatprep.mubr.f32.mxu0 %v897
    %1379 = vmatmul.mubr.f32.gmra.mrb[0].mxu0 %v896
    %v1380 = vpop.f32.mrb[0].mxu0
    %v1381 = vadd.f32 0.0, %v1380
    %v1382 = vpop.f32.mrb[0].mxu0
    %v1383 = vadd.f32 0.0, %v1382
    %1384 = vmatprep.mubr.f32.mxu0 %v900
    %1385 = vmatmul.mubr.f32.gmra.mrb[0].mxu0 %v899
    %v1386 = vpop.f32.mrb[0].mxu0
    %v1387 = vadd.f32 0.0, %v1386
    %v1388 = vpop.f32.mrb[0].mxu0
    %v1389 = vadd.f32 0.0, %v1388
    %1390 = vmatprep.mubr.f32.mxu0 %v903
    %1391 = vmatmul.mubr.f32.gmra.mrb[0].mxu0 %v902
    %v1392 = vpop.f32.mrb[0].mxu0
    %v1393 = vadd.f32 0.0, %v1392
    %v1394 = vpop.f32.mrb[0].mxu0
    %v1395 = vadd.f32 0.0, %v1394
    %1396 = vmatprep.mubr.f32.mxu0 %v906
    %1397 = vmatmul.mubr.f32.gmra.mrb[0].mxu0 %v905
    %v1398 = vpop.f32.mrb[0].mxu0
    %v1399 = vadd.f32 0.0, %v1398
    %v1400 = vpop.f32.mrb[0].mxu0
    %v1401 = vadd.f32 0.0, %v1400
    %1402 = vmatprep.mubr.f32.mxu0 %v909
    %1403 = vmatmul.mubr.f32.gmra.mrb[0].mxu0 %v908
    %v1404 = vpop.f32.mrb[0].mxu0
    %v1405 = vadd.f32 0.0, %v1404
    %v1406 = vpop.f32.mrb[0].mxu0
    %v1407 = vadd.f32 0.0, %v1406
    %1408 = vdwg.mxu0
    %1409 = vmatprep.subr.mxu0 %v1285
    %1410 = vmatpush1.msra.mxu0 %v1284
    %1411 = vmatprep.subr.mxu0 %v1287
    %1412 = vmatpush1.msra.mxu0 %v1286
    %1413 = vmatprep.subr.mxu0 %v1289
    %1414 = vmatpush1.msra.mxu0 %v1288
    %1415 = vmatprep.subr.mxu0 %v1291
    %1416 = vmatpush1.msra.mxu0 %v1290
    %1417 = vmatprep.subr.mxu0 %v1293
    %1418 = vmatpush1.msra.mxu0 %v1292
    %1419 = vmatprep.subr.mxu0 %v1295
    %1420 = vmatpush1.msra.mxu0 %v1294
    %1421 = vmatprep.subr.mxu0 %v1297
    %1422 = vmatpush1.msra.mxu0 %v1296
    %1423 = vmatprep.subr.mxu0 %v1299
    %1424 = vmatpush1.msra.mxu0 %v1298
    %1425 = vmatprep.subr.mxu0 %v1301
    %1426 = vmatpush1.msra.mxu0 %v1300
    %1427 = vmatprep.subr.mxu0 %v1303
    %1428 = vmatpush1.msra.mxu0 %v1302
    %1429 = vmatprep.subr.mxu0 %v1305
    %1430 = vmatpush1.msra.mxu0 %v1304
    %1431 = vmatprep.subr.mxu0 %v1307
    %1432 = vmatpush1.msra.mxu0 %v1306
    %1433 = vmatprep.subr.mxu0 0.0
    %1434 = vmatpush1.msra.mxu0 0.0
    %1435 = vmatprep.subr.mxu0 0.0
    %1436 = vmatpush1.msra.mxu0 0.0
    %1437 = vmatprep.subr.mxu0 0.0
    %1438 = vmatpush1.msra.mxu0 0.0
    %1439 = vmatprep.subr.mxu0 0.0
    %1440 = vmatpush1.msra.mxu0 0.0
    %1441 = vmatprep.subr.mxu0 0.0
    %1442 = vmatpush1.msra.mxu0 0.0
    %1443 = vmatprep.subr.mxu0 0.0
    %1444 = vmatpush1.msra.mxu0 0.0
    %1445 = vmatprep.subr.mxu0 0.0
    %1446 = vmatpush1.msra.mxu0 0.0
    %1447 = vmatprep.subr.mxu0 0.0
    %1448 = vmatpush1.msra.mxu0 0.0
    %1449 = vmatprep.subr.mxu0 0.0
    %1450 = vmatpush1.msra.mxu0 0.0
    %1451 = vmatprep.subr.mxu0 0.0
    %1452 = vmatpush1.msra.mxu0 0.0
    %1453 = vmatprep.subr.mxu0 0.0
    %1454 = vmatpush1.msra.mxu0 0.0
    %1455 = vmatprep.subr.mxu0 0.0
    %1456 = vmatpush1.msra.mxu0 0.0
    %1457 = vmatprep.subr.mxu0 0.0
    %1458 = vmatpush1.msra.mxu0 0.0
    %1459 = vmatprep.subr.mxu0 0.0
    %1460 = vmatpush1.msra.mxu0 0.0
    %1461 = vmatprep.subr.mxu0 0.0
    %1462 = vmatpush1.msra.mxu0 0.0
    %1463 = vmatprep.subr.mxu0 0.0
    %1464 = vmatpush1.msra.mxu0 0.0
    %1465 = vmatprep.subr.mxu0 0.0
    %1466 = vmatpush1.msra.mxu0 0.0
    %1467 = vmatprep.subr.mxu0 0.0
    %1468 = vmatpush1.msra.mxu0 0.0
    %1469 = vmatprep.subr.mxu0 0.0
    %1470 = vmatpush1.msra.mxu0 0.0
    %1471 = vmatprep.subr.mxu0 0.0
    %1472 = vmatpush1.msra.mxu0 0.0
    %1473 = vmatprep.mubr.f32.mxu0 0.0
    %1474 = vmatmul.mubr.f32.gmra.mrb[0].mxu0 %v1000
    %v1475 = vpop.f32.mrb[0].mxu0
    %v1476 = vadd.f32 %v1375, %v1475
    %v1477 = vpop.f32.mrb[0].mxu0
    %v1478 = vadd.f32 %v1377, %v1477
    %1479 = vmatprep.mubr.f32.mxu0 0.0
    %1480 = vmatmul.mubr.f32.gmra.mrb[0].mxu0 %v1003
    %v1481 = vpop.f32.mrb[0].mxu0
    %v1482 = vadd.f32 %v1381, %v1481
    %v1483 = vpop.f32.mrb[0].mxu0
    %v1484 = vadd.f32 %v1383, %v1483
    %1485 = vmatprep.mubr.f32.mxu0 0.0
    %1486 = vmatmul.mubr.f32.gmra.mrb[0].mxu0 %v1006
    %v1487 = vpop.f32.mrb[0].mxu0
    %v1488 = vadd.f32 %v1387, %v1487
    %v1489 = vpop.f32.mrb[0].mxu0
    %v1490 = vadd.f32 %v1389, %v1489
    %1491 = vmatprep.mubr.f32.mxu0 0.0
    %1492 = vmatmul.mubr.f32.gmra.mrb[0].mxu0 %v1009
    %v1493 = vpop.f32.mrb[0].mxu0
    %v1494 = vadd.f32 %v1393, %v1493
    %v1495 = vpop.f32.mrb[0].mxu0
    %v1496 = vadd.f32 %v1395, %v1495
    %1497 = vmatprep.mubr.f32.mxu0 0.0
    %1498 = vmatmul.mubr.f32.gmra.mrb[0].mxu0 %v1012
    %v1499 = vpop.f32.mrb[0].mxu0
    %v1500 = vadd.f32 %v1399, %v1499
    %v1501 = vpop.f32.mrb[0].mxu0
    %v1502 = vadd.f32 %v1401, %v1501
    %1503 = vmatprep.mubr.f32.mxu0 0.0
    %1504 = vmatmul.mubr.f32.gmra.mrb[0].mxu0 %v1015
    %v1505 = vpop.f32.mrb[0].mxu0
    %v1506 = vadd.f32 %v1405, %v1505
    %v1507 = vpop.f32.mrb[0].mxu0
    %v1508 = vadd.f32 %v1407, %v1507
    %1509 = vdwg.mxu0
    %v1510 = vmax.f32 %v1185, %v1476
    %v1511 = vmax.f32 %v1187, %v1478
    %v1512 = vmax.f32 %v1191, %v1482
    %v1513 = vmax.f32 %v1193, %v1484
    %v1514 = vmax.f32 %v1197, %v1488
    %v1515 = vmax.f32 %v1199, %v1490
    %v1516 = vmax.f32 %v1203, %v1494
    %v1517 = vmax.f32 %v1205, %v1496
    %v1518 = vmax.f32 %v1209, %v1500
    %v1519 = vmax.f32 %v1211, %v1502
    %v1520 = vmax.f32 %v1215, %v1506
    %v1521 = vmax.f32 %v1217, %v1508
    %v1522 = vld [vmem:[%s3] sm:$0xff]
    %v1523 = vld [vmem:[%s3 + $0x8] sm:$0xff]
    %v1524 = vld [vmem:[%s3 + $0x10] sm:$0x3f]
    %vm1525 = vcmask 375808
    %v1527 = vsel %vm1525, %v1522, 0
    %v1530 = vsel %vm1525, %v1523, 0
    %v1533 = vsel %vm1525, %v1524, 0
    %vm1535 = vcmask 1045504
    %v1537 = vsel %vm1535, %v1520, 0
    %v1540 = vsel %vm1535, %v1521, 0
    %1542 = vmatprep.subr.mxu0 %v1511
    %1543 = vmatpush1.msra.mxu0 %v1510
    %1544 = vmatprep.subr.mxu0 %v1513
    %1545 = vmatpush1.msra.mxu0 %v1512
    %1546 = vmatprep.subr.mxu0 %v1515
    %1547 = vmatpush1.msra.mxu0 %v1514
    %1548 = vmatprep.subr.mxu0 %v1517
    %1549 = vmatpush1.msra.mxu0 %v1516
    %1550 = vmatprep.subr.mxu0 %v1519
    %1551 = vmatpush1.msra.mxu0 %v1518
    %1552 = vmatprep.subr.mxu0 %v1540
    %1553 = vmatpush1.msra.mxu0 %v1537
    %1554 = vmatprep.subr.mxu0 0.0
    %1555 = vmatpush1.msra.mxu0 0.0
    %1556 = vmatprep.subr.mxu0 0.0
    %1557 = vmatpush1.msra.mxu0 0.0
    %1558 = vmatprep.subr.mxu0 0.0
    %1559 = vmatpush1.msra.mxu0 0.0
    %1560 = vmatprep.subr.mxu0 0.0
    %1561 = vmatpush1.msra.mxu0 0.0
    %1562 = vmatprep.subr.mxu0 0.0
    %1563 = vmatpush1.msra.mxu0 0.0
    %1564 = vmatprep.subr.mxu0 0.0
    %1565 = vmatpush1.msra.mxu0 0.0
    %1566 = vmatprep.subr.mxu0 0.0
    %1567 = vmatpush1.msra.mxu0 0.0
    %1568 = vmatprep.subr.mxu0 0.0
    %1569 = vmatpush1.msra.mxu0 0.0
    %1570 = vmatprep.subr.mxu0 0.0
    %1571 = vmatpush1.msra.mxu0 0.0
    %1572 = vmatprep.subr.mxu0 0.0
    %1573 = vmatpush1.msra.mxu0 0.0
    %1574 = vmatprep.subr.mxu0 0.0
    %1575 = vmatpush1.msra.mxu0 0.0
    %1576 = vmatprep.subr.mxu0 0.0
    %1577 = vmatpush1.msra.mxu0 0.0
    %1578 = vmatprep.subr.mxu0 0.0
    %1579 = vmatpush1.msra.mxu0 0.0
    %1580 = vmatprep.subr.mxu0 0.0
    %1581 = vmatpush1.msra.mxu0 0.0
    %1582 = vmatprep.subr.mxu0 0.0
    %1583 = vmatpush1.msra.mxu0 0.0
    %1584 = vmatprep.subr.mxu0 0.0
    %1585 = vmatpush1.msra.mxu0 0.0
    %1586 = vmatprep.subr.mxu0 0.0
    %1587 = vmatpush1.msra.mxu0 0.0
    %1588 = vmatprep.subr.mxu0 0.0
    %1589 = vmatpush1.msra.mxu0 0.0
    %1590 = vmatprep.subr.mxu0 0.0
    %1591 = vmatpush1.msra.mxu0 0.0
    %1592 = vmatprep.subr.mxu0 0.0
    %1593 = vmatpush1.msra.mxu0 0.0
    %1594 = vmatprep.subr.mxu0 0.0
    %1595 = vmatpush1.msra.mxu0 0.0
    %1596 = vmatprep.subr.mxu0 0.0
    %1597 = vmatpush1.msra.mxu0 0.0
    %1598 = vmatprep.subr.mxu0 0.0
    %1599 = vmatpush1.msra.mxu0 0.0
    %1600 = vmatprep.subr.mxu0 0.0
    %1601 = vmatpush1.msra.mxu0 0.0
    %1602 = vmatprep.subr.mxu0 0.0
    %1603 = vmatpush1.msra.mxu0 0.0
    %1604 = vmatprep.subr.mxu0 0.0
    %1605 = vmatpush1.msra.mxu0 0.0
    %1606 = vmatprep.mubr.f32.mxu0 0.0
    %1607 = vmatmul.mubr.f32.gmra.mrb[0].mxu0 %v1527
    %v1608 = vpop.f32.mrb[0].mxu0
    %v1609 = vadd.f32 0.0, %v1608
    %v1610 = vpop.f32.mrb[0].mxu0
    %v1611 = vadd.f32 0.0, %v1610
    %1612 = vmatprep.mubr.f32.mxu0 0.0
    %1613 = vmatmul.mubr.f32.gmra.mrb[0].mxu0 %v1530
    %v1614 = vpop.f32.mrb[0].mxu0
    %v1615 = vadd.f32 0.0, %v1614
    %v1616 = vpop.f32.mrb[0].mxu0
    %v1617 = vadd.f32 0.0, %v1616
    %1618 = vmatprep.mubr.f32.mxu0 0.0
    %1619 = vmatmul.mubr.f32.gmra.mrb[0].mxu0 %v1533
    %v1620 = vpop.f32.mrb[0].mxu0
    %v1621 = vadd.f32 0.0, %v1620
    %v1622 = vpop.f32.mrb[0].mxu0
    %v1623 = vadd.f32 0.0, %v1622
    %1624 = vdwg.mxu0
    %s1625 = scalar_lea.vmem %s3, 24
    %v1626 = vld [vmem:[%s1625] sm:$0xff]
    %v1627 = vld [vmem:[%s1625 + $0x8] sm:$0xff]
    %v1628 = vld [vmem:[%s1625 + $0x10] sm:$0x3f]
    %v1630 = vsel %vm1525, %v1626, 0
    %v1633 = vsel %vm1525, %v1627, 0
    %v1636 = vsel %vm1525, %v1628, 0
    %1638 = vmatprep.subr.mxu0 %v1511
    %1639 = vmatpush1.msra.mxu0 %v1510
    %1640 = vmatprep.subr.mxu0 %v1513
    %1641 = vmatpush1.msra.mxu0 %v1512
    %1642 = vmatprep.subr.mxu0 %v1515
    %1643 = vmatpush1.msra.mxu0 %v1514
    %1644 = vmatprep.subr.mxu0 %v1517
    %1645 = vmatpush1.msra.mxu0 %v1516
    %1646 = vmatprep.subr.mxu0 %v1519
    %1647 = vmatpush1.msra.mxu0 %v1518
    %1648 = vmatprep.subr.mxu0 %v1540
    %1649 = vmatpush1.msra.mxu0 %v1537
    %1650 = vmatprep.subr.mxu0 0.0
    %1651 = vmatpush1.msra.mxu0 0.0
    %1652 = vmatprep.subr.mxu0 0.0
    %1653 = vmatpush1.msra.mxu0 0.0
    %1654 = vmatprep.subr.mxu0 0.0
    %1655 = vmatpush1.msra.mxu0 0.0
    %1656 = vmatprep.subr.mxu0 0.0
    %1657 = vmatpush1.msra.mxu0 0.0
    %1658 = vmatprep.subr.mxu0 0.0
    %1659 = vmatpush1.msra.mxu0 0.0
    %1660 = vmatprep.subr.mxu0 0.0
    %1661 = vmatpush1.msra.mxu0 0.0
    %1662 = vmatprep.subr.mxu0 0.0
    %1663 = vmatpush1.msra.mxu0 0.0
    %1664 = vmatprep.subr.mxu0 0.0
    %1665 = vmatpush1.msra.mxu0 0.0
    %1666 = vmatprep.subr.mxu0 0.0
    %1667 = vmatpush1.msra.mxu0 0.0
    %1668 = vmatprep.subr.mxu0 0.0
    %1669 = vmatpush1.msra.mxu0 0.0
    %1670 = vmatprep.subr.mxu0 0.0
    %1671 = vmatpush1.msra.mxu0 0.0
    %1672 = vmatprep.subr.mxu0 0.0
    %1673 = vmatpush1.msra.mxu0 0.0
    %1674 = vmatprep.subr.mxu0 0.0
    %1675 = vmatpush1.msra.mxu0 0.0
    %1676 = vmatprep.subr.mxu0 0.0
    %1677 = vmatpush1.msra.mxu0 0.0
    %1678 = vmatprep.subr.mxu0 0.0
    %1679 = vmatpush1.msra.mxu0 0.0
    %1680 = vmatprep.subr.mxu0 0.0
    %1681 = vmatpush1.msra.mxu0 0.0
    %1682 = vmatprep.subr.mxu0 0.0
    %1683 = vmatpush1.msra.mxu0 0.0
    %1684 = vmatprep.subr.mxu0 0.0
    %1685 = vmatpush1.msra.mxu0 0.0
    %1686 = vmatprep.subr.mxu0 0.0
    %1687 = vmatpush1.msra.mxu0 0.0
    %1688 = vmatprep.subr.mxu0 0.0
    %1689 = vmatpush1.msra.mxu0 0.0
    %1690 = vmatprep.subr.mxu0 0.0
    %1691 = vmatpush1.msra.mxu0 0.0
    %1692 = vmatprep.subr.mxu0 0.0
    %1693 = vmatpush1.msra.mxu0 0.0
    %1694 = vmatprep.subr.mxu0 0.0
    %1695 = vmatpush1.msra.mxu0 0.0
    %1696 = vmatprep.subr.mxu0 0.0
    %1697 = vmatpush1.msra.mxu0 0.0
    %1698 = vmatprep.subr.mxu0 0.0
    %1699 = vmatpush1.msra.mxu0 0.0
    %1700 = vmatprep.subr.mxu0 0.0
    %1701 = vmatpush1.msra.mxu0 0.0
    %1702 = vmatprep.mubr.f32.mxu0 0.0
    %1703 = vmatmul.mubr.f32.gmra.mrb[0].mxu0 %v1630
    %v1704 = vpop.f32.mrb[0].mxu0
    %v1705 = vadd.f32 0.0, %v1704
    %v1706 = vpop.f32.mrb[0].mxu0
    %v1707 = vadd.f32 0.0, %v1706
    %1708 = vmatprep.mubr.f32.mxu0 0.0
    %1709 = vmatmul.mubr.f32.gmra.mrb[0].mxu0 %v1633
    %v1710 = vpop.f32.mrb[0].mxu0
    %v1711 = vadd.f32 0.0, %v1710
    %v1712 = vpop.f32.mrb[0].mxu0
    %v1713 = vadd.f32 0.0, %v1712
    %1714 = vmatprep.mubr.f32.mxu0 0.0
    %1715 = vmatmul.mubr.f32.gmra.mrb[0].mxu0 %v1636
    %v1716 = vpop.f32.mrb[0].mxu0
    %v1717 = vadd.f32 0.0, %v1716
    %v1718 = vpop.f32.mrb[0].mxu0
    %v1719 = vadd.f32 0.0, %v1718
    %1720 = vdwg.mxu0
    %v1721 = vmax.f32 %v1609, %v1705
    %v1722 = vmax.f32 %v1611, %v1707
    %v1723 = vmax.f32 %v1615, %v1711
    %v1724 = vmax.f32 %v1617, %v1713
    %v1725 = vmax.f32 %v1621, %v1717
    %v1726 = vmax.f32 %v1623, %v1719
    %1727 = vst [vmem:[#allocation2] sm:$0xff] %v1721
    %vm1728 = vcmask 392192
    %1729 = vst.msk [vmem:[#allocation2 + $0x8] sm:$0xff] %vm1728, %v1722
    %1730 = vst [vmem:[#allocation2 + $0x10] sm:$0xff] %v1723
    %1731 = vst.msk [vmem:[#allocation2 + $0x18] sm:$0xff] %vm1728, %v1724
    %1732 = vst [vmem:[#allocation2 + $0x20] sm:$0x3f] %v1725
    %vm1733 = vcmask 390144
    %1734 = vst.msk [vmem:[#allocation2 + $0x28] sm:$0x3f] %vm1733, %v1726
    %s1735 = scalar_lea.vmem %s11, 1
    %v1736 = vld [vmem:[%s1735] ss:$8 sm:$0x7]
    %v1737 = vld [vmem:[#allocation2] sm:$0xff]
    %v1738 = vld [vmem:[#allocation2 + $0x8] sm:$0xff]
    %v1739 = vld [vmem:[#allocation2 + $0x10] sm:$0xff]
    %v1740 = vld [vmem:[#allocation2 + $0x18] sm:$0xff]
    %v1741 = vld [vmem:[#allocation2 + $0x20] sm:$0xf]
    %v1742 = vld [vmem:[#allocation2 + $0x28] sm:$0xf]
    %v1743 = vld [vmem:[%s4] sm:$0xff]
    %v1744 = vld [vmem:[%s4 + $0x8] sm:$0xff]
    %v1745 = vld [vmem:[%s4 + $0x10] sm:$0xff]
    %v1746 = vld [vmem:[%s4 + $0x18] sm:$0xff]
    %v1747 = vld [vmem:[%s4 + $0x20] sm:$0xff]
    %v1748 = vld [vmem:[%s4 + $0x28] sm:$0xff]
    %v1749 = vld [vmem:[%s4 + $0x30] sm:$0xff]
    %v1750 = vld [vmem:[%s4 + $0x38] sm:$0xff]
    %v1751 = vld [vmem:[%s4 + $0x40] sm:$0xff]
    %v1752 = vld [vmem:[%s4 + $0x48] sm:$0xff]
    %v1753 = vld [vmem:[%s4 + $0x50] sm:$0xff]
    %v1754 = vld [vmem:[%s4 + $0x58] sm:$0xff]
    %v1755 = vld [vmem:[%s4 + $0x60] sm:$0xff]
    %v1756 = vld [vmem:[%s4 + $0x68] sm:$0xff]
    %v1757 = vld [vmem:[%s4 + $0x70] sm:$0xff]
    %v1758 = vld [vmem:[%s4 + $0x78] sm:$0xff]
    %v1759 = vld [vmem:[%s4 + $0x80] sm:$0xff]
    %v1760 = vld [vmem:[%s4 + $0x88] sm:$0xff]
    %v1761 = vld [vmem:[%s4 + $0x90] sm:$0xff]
    %v1762 = vld [vmem:[%s4 + $0x98] sm:$0xff]
    %v1763 = vld [vmem:[%s4 + $0xa0] sm:$0xff]
    %v1764 = vld [vmem:[%s4 + $0xa8] sm:$0xff]
    %v1765 = vld [vmem:[%s4 + $0xb0] sm:$0xff]
    %v1766 = vld [vmem:[%s4 + $0xb8] sm:$0xff]
    %v1767 = vld [vmem:[%s4 + $0xc0] sm:$0xff]
    %v1768 = vld [vmem:[%s4 + $0xc8] sm:$0xff]
    %v1769 = vld [vmem:[%s4 + $0xd0] sm:$0xff]
    %v1770 = vld [vmem:[%s4 + $0xd8] sm:$0xff]
    %v1771 = vld [vmem:[%s4 + $0xe0] sm:$0xff]
    %v1772 = vld [vmem:[%s4 + $0xe8] sm:$0xff]
    %v1773 = vld [vmem:[%s4 + $0xf0] sm:$0xff]
    %v1774 = vld [vmem:[%s4 + $0xf8] sm:$0xff]
    %v1775 = vld [vmem:[%s4 + $0x100] sm:$0xff]
    %v1776 = vld [vmem:[%s4 + $0x108] sm:$0xff]
    %v1777 = vld [vmem:[%s4 + $0x110] sm:$0xff]
    %v1778 = vld [vmem:[%s4 + $0x118] sm:$0xff]
    %v1779 = vld [vmem:[%s4 + $0x120] sm:$0xff]
    %v1780 = vld [vmem:[%s4 + $0x128] sm:$0xff]
    %v1781 = vld [vmem:[%s4 + $0x130] sm:$0xff]
    %v1782 = vld [vmem:[%s4 + $0x138] sm:$0xff]
    %v1783 = vld [vmem:[%s4 + $0x140] sm:$0xff]
    %v1784 = vld [vmem:[%s4 + $0x148] sm:$0xff]
    %v1785 = vld [vmem:[%s4 + $0x150] sm:$0xff]
    %v1786 = vld [vmem:[%s4 + $0x158] sm:$0xff]
    %v1787 = vld [vmem:[%s4 + $0x160] sm:$0xff]
    %v1788 = vld [vmem:[%s4 + $0x168] sm:$0xff]
    %v1789 = vld [vmem:[%s4 + $0x170] sm:$0xff]
    %v1790 = vld [vmem:[%s4 + $0x178] sm:$0xff]
    %v1791 = vld [vmem:[%s4 + $0x180] sm:$0xff]
    %v1792 = vld [vmem:[%s4 + $0x188] sm:$0xff]
    %v1793 = vld [vmem:[%s4 + $0x190] sm:$0xff]
    %v1794 = vld [vmem:[%s4 + $0x198] sm:$0xff]
    %v1795 = vld [vmem:[%s4 + $0x1a0] sm:$0xff]
    %v1796 = vld [vmem:[%s4 + $0x1a8] sm:$0xff]
    %v1797 = vld [vmem:[%s4 + $0x1b0] sm:$0xff]
    %v1798 = vld [vmem:[%s4 + $0x1b8] sm:$0xff]
    %v1799 = vld [vmem:[%s4 + $0x1c0] sm:$0xff]
    %v1800 = vld [vmem:[%s4 + $0x1c8] sm:$0xff]
    %v1801 = vld [vmem:[%s4 + $0x1d0] sm:$0xff]
    %v1802 = vld [vmem:[%s4 + $0x1d8] sm:$0xff]
    %v1803 = vld [vmem:[%s4 + $0x1e0] sm:$0xff]
    %v1804 = vld [vmem:[%s4 + $0x1e8] sm:$0xff]
    %v1805 = vld [vmem:[%s4 + $0x1f0] sm:$0xff]
    %v1806 = vld [vmem:[%s4 + $0x1f8] sm:$0xff]
    %v1807 = vld [vmem:[%s4 + $0x200] sm:$0xff]
    %v1808 = vld [vmem:[%s4 + $0x208] sm:$0xff]
    %v1809 = vld [vmem:[#allocation2] sm:$0xfe]
    %v1810 = vld [vmem:[#allocation2 + $0x8] sm:$0xfe]
    %v1811 = vld [vmem:[#allocation2 + $0x20] sm:$0x1f]
    %v1812 = vld [vmem:[#allocation2 + $0x28] sm:$0x1f]
    %s1813 = scalar_lea.vmem %s4, 528
    %v1814 = vld [vmem:[%s1813] sm:$0xff]
    %v1815 = vld [vmem:[%s1813 + $0x8] sm:$0xff]
    %v1816 = vld [vmem:[%s1813 + $0x10] sm:$0xff]
    %v1817 = vld [vmem:[%s1813 + $0x18] sm:$0xff]
    %v1818 = vld [vmem:[%s1813 + $0x20] sm:$0xff]
    %v1819 = vld [vmem:[%s1813 + $0x28] sm:$0xff]
    %v1820 = vld [vmem:[%s1813 + $0x30] sm:$0xff]
    %v1821 = vld [vmem:[%s1813 + $0x38] sm:$0xff]
    %v1822 = vld [vmem:[%s1813 + $0x40] sm:$0xff]
    %v1823 = vld [vmem:[%s1813 + $0x48] sm:$0xff]
    %v1824 = vld [vmem:[%s1813 + $0x50] sm:$0xff]
    %v1825 = vld [vmem:[%s1813 + $0x58] sm:$0xff]
    %v1826 = vld [vmem:[%s1813 + $0x60] sm:$0xff]
    %v1827 = vld [vmem:[%s1813 + $0x68] sm:$0xff]
    %v1828 = vld [vmem:[%s1813 + $0x70] sm:$0xff]
    %v1829 = vld [vmem:[%s1813 + $0x78] sm:$0xff]
    %v1830 = vld [vmem:[%s1813 + $0x80] sm:$0xff]
    %v1831 = vld [vmem:[%s1813 + $0x88] sm:$0xff]
    %v1832 = vld [vmem:[%s1813 + $0x90] sm:$0xff]
    %v1833 = vld [vmem:[%s1813 + $0x98] sm:$0xff]
    %v1834 = vld [vmem:[%s1813 + $0xa0] sm:$0xff]
    %v1835 = vld [vmem:[%s1813 + $0xa8] sm:$0xff]
    %v1836 = vld [vmem:[%s1813 + $0xb0] sm:$0xff]
    %v1837 = vld [vmem:[%s1813 + $0xb8] sm:$0xff]
    %v1838 = vld [vmem:[%s1813 + $0xc0] sm:$0xff]
    %v1839 = vld [vmem:[%s1813 + $0xc8] sm:$0xff]
    %v1840 = vld [vmem:[%s1813 + $0xd0] sm:$0xff]
    %v1841 = vld [vmem:[%s1813 + $0xd8] sm:$0xff]
    %v1842 = vld [vmem:[%s1813 + $0xe0] sm:$0xff]
    %v1843 = vld [vmem:[%s1813 + $0xe8] sm:$0xff]
    %v1844 = vld [vmem:[%s1813 + $0xf0] sm:$0xff]
    %v1845 = vld [vmem:[%s1813 + $0xf8] sm:$0xff]
    %v1846 = vld [vmem:[%s1813 + $0x100] sm:$0xff]
    %v1847 = vld [vmem:[%s1813 + $0x108] sm:$0xff]
    %v1848 = vld [vmem:[%s1813 + $0x110] sm:$0xff]
    %v1849 = vld [vmem:[%s1813 + $0x118] sm:$0xff]
    %v1850 = vld [vmem:[%s1813 + $0x120] sm:$0xff]
    %v1851 = vld [vmem:[%s1813 + $0x128] sm:$0xff]
    %v1852 = vld [vmem:[%s1813 + $0x130] sm:$0xff]
    %v1853 = vld [vmem:[%s1813 + $0x138] sm:$0xff]
    %v1854 = vld [vmem:[%s1813 + $0x140] sm:$0xff]
    %v1855 = vld [vmem:[%s1813 + $0x148] sm:$0xff]
    %v1856 = vld [vmem:[%s1813 + $0x150] sm:$0xff]
    %v1857 = vld [vmem:[%s1813 + $0x158] sm:$0xff]
    %v1858 = vld [vmem:[%s1813 + $0x160] sm:$0xff]
    %v1859 = vld [vmem:[%s1813 + $0x168] sm:$0xff]
    %v1860 = vld [vmem:[%s1813 + $0x170] sm:$0xff]
    %v1861 = vld [vmem:[%s1813 + $0x178] sm:$0xff]
    %v1862 = vld [vmem:[%s1813 + $0x180] sm:$0xff]
    %v1863 = vld [vmem:[%s1813 + $0x188] sm:$0xff]
    %v1864 = vld [vmem:[%s1813 + $0x190] sm:$0xff]
    %v1865 = vld [vmem:[%s1813 + $0x198] sm:$0xff]
    %v1866 = vld [vmem:[%s1813 + $0x1a0] sm:$0xff]
    %v1867 = vld [vmem:[%s1813 + $0x1a8] sm:$0xff]
    %v1868 = vld [vmem:[%s1813 + $0x1b0] sm:$0xff]
    %v1869 = vld [vmem:[%s1813 + $0x1b8] sm:$0xff]
    %v1870 = vld [vmem:[%s1813 + $0x1c0] sm:$0xff]
    %v1871 = vld [vmem:[%s1813 + $0x1c8] sm:$0xff]
    %v1872 = vld [vmem:[%s1813 + $0x1d0] sm:$0xff]
    %v1873 = vld [vmem:[%s1813 + $0x1d8] sm:$0xff]
    %v1874 = vld [vmem:[%s1813 + $0x1e0] sm:$0xff]
    %v1875 = vld [vmem:[%s1813 + $0x1e8] sm:$0xff]
    %v1876 = vld [vmem:[%s1813 + $0x1f0] sm:$0xff]
    %v1877 = vld [vmem:[%s1813 + $0x1f8] sm:$0xff]
    %v1878 = vld [vmem:[%s1813 + $0x200] sm:$0xff]
    %v1879 = vld [vmem:[%s1813 + $0x208] sm:$0xff]
    %vm1886 = vcmask 1046528
    %v1887 = vrot.slane %v1809, 1
    %v1888 = vrot.slane %v1739, 1
    %v1889 = vsel %vm1886, %v1887, %v1888
    %v1890 = vrot.slane %v1810, 1
    %v1891 = vrot.slane %v1740, 1
    %v1892 = vsel %vm1886, %v1890, %v1891
    %v1893 = vrot.slane %v1811, 1
    %v1894 = vsel %vm1886, %v1888, %v1893
    %v1895 = vrot.slane %v1812, 1
    %v1896 = vsel %vm1886, %v1891, %v1895
    %v1900 = vsel %vm1728, %v1892, 0
    %v1902 = vsel %vm1728, %v1896, 0
    %v1904 = vsel %vm1728, %v1895, 0
    %1906 = vmatprep.subr.mxu0 %v1815
    %1907 = vmatpush1.msra.mxu0 %v1814
    %1908 = vmatprep.subr.mxu0 %v1818
    %1909 = vmatpush1.msra.mxu0 %v1817
    %1910 = vmatprep.subr.mxu0 %v1821
    %1911 = vmatpush1.msra.mxu0 %v1820
    %1912 = vmatprep.subr.mxu0 %v1824
    %1913 = vmatpush1.msra.mxu0 %v1823
    %1914 = vmatprep.subr.mxu0 %v1827
    %1915 = vmatpush1.msra.mxu0 %v1826
    %1916 = vmatprep.subr.mxu0 %v1830
    %1917 = vmatpush1.msra.mxu0 %v1829
    %1918 = vmatprep.subr.mxu0 %v1833
    %1919 = vmatpush1.msra.mxu0 %v1832
    %1920 = vmatprep.subr.mxu0 %v1836
    %1921 = vmatpush1.msra.mxu0 %v1835
    %1922 = vmatprep.subr.mxu0 %v1839
    %1923 = vmatpush1.msra.mxu0 %v1838
    %1924 = vmatprep.subr.mxu0 %v1842
    %1925 = vmatpush1.msra.mxu0 %v1841
    %1926 = vmatprep.subr.mxu0 %v1845
    %1927 = vmatpush1.msra.mxu0 %v1844
    %1928 = vmatprep.subr.mxu0 %v1848
    %1929 = vmatpush1.msra.mxu0 %v1847
    %1930 = vmatprep.subr.mxu0 %v1851
    %1931 = vmatpush1.msra.mxu0 %v1850
    %1932 = vmatprep.subr.mxu0 %v1854
    %1933 = vmatpush1.msra.mxu0 %v1853
    %1934 = vmatprep.subr.mxu0 %v1857
    %1935 = vmatpush1.msra.mxu0 %v1856
    %1936 = vmatprep.subr.mxu0 %v1860
    %1937 = vmatpush1.msra.mxu0 %v1859
    %1938 = vmatprep.subr.mxu0 %v1863
    %1939 = vmatpush1.msra.mxu0 %v1862
    %1940 = vmatprep.subr.mxu0 %v1866
    %1941 = vmatpush1.msra.mxu0 %v1865
    %1942 = vmatprep.subr.mxu0 %v1869
    %1943 = vmatpush1.msra.mxu0 %v1868
    %1944 = vmatprep.subr.mxu0 %v1872
    %1945 = vmatpush1.msra.mxu0 %v1871
    %1946 = vmatprep.subr.mxu0 %v1875
    %1947 = vmatpush1.msra.mxu0 %v1874
    %1948 = vmatprep.subr.mxu0 %v1878
    %1949 = vmatpush1.msra.mxu0 %v1877
    %1950 = vmatprep.subr.mxu0 0.0
    %1951 = vmatpush1.msra.mxu0 0.0
    %1952 = vmatprep.subr.mxu0 0.0
    %1953 = vmatpush1.msra.mxu0 0.0
    %1954 = vmatprep.subr.mxu0 0.0
    %1955 = vmatpush1.msra.mxu0 0.0
    %1956 = vmatprep.subr.mxu0 0.0
    %1957 = vmatpush1.msra.mxu0 0.0
    %1958 = vmatprep.subr.mxu0 0.0
    %1959 = vmatpush1.msra.mxu0 0.0
    %1960 = vmatprep.subr.mxu0 0.0
    %1961 = vmatpush1.msra.mxu0 0.0
    %1962 = vmatprep.subr.mxu0 0.0
    %1963 = vmatpush1.msra.mxu0 0.0
    %1964 = vmatprep.subr.mxu0 0.0
    %1965 = vmatpush1.msra.mxu0 0.0
    %1966 = vmatprep.subr.mxu0 0.0
    %1967 = vmatpush1.msra.mxu0 0.0
    %1968 = vmatprep.subr.mxu0 0.0
    %1969 = vmatpush1.msra.mxu0 0.0
    %1970 = vmatprep.mubr.f32.mxu0 %v1900
    %1971 = vmatmul.mubr.f32.gmra.mrb[0].mxu0 %v1889
    %v1972 = vpop.f32.mrb[0].mxu0
    %v1973 = vadd.f32 0.0, %v1972
    %v1974 = vpop.f32.mrb[0].mxu0
    %v1975 = vadd.f32 0.0, %v1974
    %1976 = vmatprep.mubr.f32.mxu0 %v1902
    %1977 = vmatmul.mubr.f32.gmra.mrb[0].mxu0 %v1894
    %v1978 = vpop.f32.mrb[0].mxu0
    %v1979 = vadd.f32 0.0, %v1978
    %v1980 = vpop.f32.mrb[0].mxu0
    %v1981 = vadd.f32 0.0, %v1980
    %1982 = vmatprep.mubr.f32.mxu0 %v1904
    %1983 = vmatmul.mubr.f32.gmra.mrb[0].mxu0 %v1893
    %v1984 = vpop.f32.mrb[0].mxu0
    %v1985 = vadd.f32 0.0, %v1984
    %v1986 = vpop.f32.mrb[0].mxu0
    %v1987 = vadd.f32 0.0, %v1986
    %1988 = vdwg.mxu0
    %1989 = vmatprep.subr.mxu0 0.0
    %1990 = vmatpush1.msra.mxu0 %v1816
    %1991 = vmatprep.subr.mxu0 0.0
    %1992 = vmatpush1.msra.mxu0 %v1819
    %1993 = vmatprep.subr.mxu0 0.0
    %1994 = vmatpush1.msra.mxu0 %v1822
    %1995 = vmatprep.subr.mxu0 0.0
    %1996 = vmatpush1.msra.mxu0 %v1825
    %1997 = vmatprep.subr.mxu0 0.0
    %1998 = vmatpush1.msra.mxu0 %v1828
    %1999 = vmatprep.subr.mxu0 0.0
    %2000 = vmatpush1.msra.mxu0 %v1831
    %2001 = vmatprep.subr.mxu0 0.0
    %2002 = vmatpush1.msra.mxu0 %v1834
    %2003 = vmatprep.subr.mxu0 0.0
    %2004 = vmatpush1.msra.mxu0 %v1837
    %2005 = vmatprep.subr.mxu0 0.0
    %2006 = vmatpush1.msra.mxu0 %v1840
    %2007 = vmatprep.subr.mxu0 0.0
    %2008 = vmatpush1.msra.mxu0 %v1843
    %2009 = vmatprep.subr.mxu0 0.0
    %2010 = vmatpush1.msra.mxu0 %v1846
    %2011 = vmatprep.subr.mxu0 0.0
    %2012 = vmatpush1.msra.mxu0 %v1849
    %2013 = vmatprep.subr.mxu0 0.0
    %2014 = vmatpush1.msra.mxu0 %v1852
    %2015 = vmatprep.subr.mxu0 0.0
    %2016 = vmatpush1.msra.mxu0 %v1855
    %2017 = vmatprep.subr.mxu0 0.0
    %2018 = vmatpush1.msra.mxu0 %v1858
    %2019 = vmatprep.subr.mxu0 0.0
    %2020 = vmatpush1.msra.mxu0 %v1861
    %2021 = vmatprep.subr.mxu0 0.0
    %2022 = vmatpush1.msra.mxu0 %v1864
    %2023 = vmatprep.subr.mxu0 0.0
    %2024 = vmatpush1.msra.mxu0 %v1867
    %2025 = vmatprep.subr.mxu0 0.0
    %2026 = vmatpush1.msra.mxu0 %v1870
    %2027 = vmatprep.subr.mxu0 0.0
    %2028 = vmatpush1.msra.mxu0 %v1873
    %2029 = vmatprep.subr.mxu0 0.0
    %2030 = vmatpush1.msra.mxu0 %v1876
    %2031 = vmatprep.subr.mxu0 0.0
    %2032 = vmatpush1.msra.mxu0 %v1879
    %2033 = vmatprep.subr.mxu0 0.0
    %2034 = vmatpush1.msra.mxu0 0.0
    %2035 = vmatprep.subr.mxu0 0.0
    %2036 = vmatpush1.msra.mxu0 0.0
    %2037 = vmatprep.subr.mxu0 0.0
    %2038 = vmatpush1.msra.mxu0 0.0
    %2039 = vmatprep.subr.mxu0 0.0
    %2040 = vmatpush1.msra.mxu0 0.0
    %2041 = vmatprep.subr.mxu0 0.0
    %2042 = vmatpush1.msra.mxu0 0.0
    %2043 = vmatprep.subr.mxu0 0.0
    %2044 = vmatpush1.msra.mxu0 0.0
    %2045 = vmatprep.subr.mxu0 0.0
    %2046 = vmatpush1.msra.mxu0 0.0
    %2047 = vmatprep.subr.mxu0 0.0
    %2048 = vmatpush1.msra.mxu0 0.0
    %2049 = vmatprep.subr.mxu0 0.0
    %2050 = vmatpush1.msra.mxu0 0.0
    %2051 = vmatprep.subr.mxu0 0.0
    %2052 = vmatpush1.msra.mxu0 0.0
    %2053 = vmatprep.mubr.f32.mxu0 %v1900
    %2054 = vmatmul.mubr.f32.gmra.mrb[0].mxu0 %v1889
    %v2055 = vpop.f32.mrb[0].mxu0
    %v2056 = vadd.f32 0.0, %v2055
    %v2057 = vpop.f32.mrb[0].mxu0
    %2058 = vmatprep.mubr.f32.mxu0 %v1902
    %2059 = vmatmul.mubr.f32.gmra.mrb[0].mxu0 %v1894
    %v2060 = vpop.f32.mrb[0].mxu0
    %v2061 = vadd.f32 0.0, %v2060
    %v2062 = vpop.f32.mrb[0].mxu0
    %2063 = vmatprep.mubr.f32.mxu0 %v1904
    %2064 = vmatmul.mubr.f32.gmra.mrb[0].mxu0 %v1893
    %v2065 = vpop.f32.mrb[0].mxu0
    %v2066 = vadd.f32 0.0, %v2065
    %v2067 = vpop.f32.mrb[0].mxu0
    %2068 = vdwg.mxu0
    %v2070 = vsel %vm1728, %v1738, 0
    %v2072 = vsel %vm1728, %v1740, 0
    %v2075 = vsel %vm1728, %v1742, 0
    %2077 = vmatprep.subr.mxu0 %v1744
    %2078 = vmatpush1.msra.mxu0 %v1743
    %2079 = vmatprep.subr.mxu0 %v1747
    %2080 = vmatpush1.msra.mxu0 %v1746
    %2081 = vmatprep.subr.mxu0 %v1750
    %2082 = vmatpush1.msra.mxu0 %v1749
    %2083 = vmatprep.subr.mxu0 %v1753
    %2084 = vmatpush1.msra.mxu0 %v1752
    %2085 = vmatprep.subr.mxu0 %v1756
    %2086 = vmatpush1.msra.mxu0 %v1755
    %2087 = vmatprep.subr.mxu0 %v1759
    %2088 = vmatpush1.msra.mxu0 %v1758
    %2089 = vmatprep.subr.mxu0 %v1762
    %2090 = vmatpush1.msra.mxu0 %v1761
    %2091 = vmatprep.subr.mxu0 %v1765
    %2092 = vmatpush1.msra.mxu0 %v1764
    %2093 = vmatprep.subr.mxu0 %v1768
    %2094 = vmatpush1.msra.mxu0 %v1767
    %2095 = vmatprep.subr.mxu0 %v1771
    %2096 = vmatpush1.msra.mxu0 %v1770
    %2097 = vmatprep.subr.mxu0 %v1774
    %2098 = vmatpush1.msra.mxu0 %v1773
    %2099 = vmatprep.subr.mxu0 %v1777
    %2100 = vmatpush1.msra.mxu0 %v1776
    %2101 = vmatprep.subr.mxu0 %v1780
    %2102 = vmatpush1.msra.mxu0 %v1779
    %2103 = vmatprep.subr.mxu0 %v1783
    %2104 = vmatpush1.msra.mxu0 %v1782
    %2105 = vmatprep.subr.mxu0 %v1786
    %2106 = vmatpush1.msra.mxu0 %v1785
    %2107 = vmatprep.subr.mxu0 %v1789
    %2108 = vmatpush1.msra.mxu0 %v1788
    %2109 = vmatprep.subr.mxu0 %v1792
    %2110 = vmatpush1.msra.mxu0 %v1791
    %2111 = vmatprep.subr.mxu0 %v1795
    %2112 = vmatpush1.msra.mxu0 %v1794
    %2113 = vmatprep.subr.mxu0 %v1798
    %2114 = vmatpush1.msra.mxu0 %v1797
    %2115 = vmatprep.subr.mxu0 %v1801
    %2116 = vmatpush1.msra.mxu0 %v1800
    %2117 = vmatprep.subr.mxu0 %v1804
    %2118 = vmatpush1.msra.mxu0 %v1803
    %2119 = vmatprep.subr.mxu0 %v1807
    %2120 = vmatpush1.msra.mxu0 %v1806
    %2121 = vmatprep.subr.mxu0 0.0
    %2122 = vmatpush1.msra.mxu0 0.0
    %2123 = vmatprep.subr.mxu0 0.0
    %2124 = vmatpush1.msra.mxu0 0.0
    %2125 = vmatprep.subr.mxu0 0.0
    %2126 = vmatpush1.msra.mxu0 0.0
    %2127 = vmatprep.subr.mxu0 0.0
    %2128 = vmatpush1.msra.mxu0 0.0
    %2129 = vmatprep.subr.mxu0 0.0
    %2130 = vmatpush1.msra.mxu0 0.0
    %2131 = vmatprep.subr.mxu0 0.0
    %2132 = vmatpush1.msra.mxu0 0.0
    %2133 = vmatprep.subr.mxu0 0.0
    %2134 = vmatpush1.msra.mxu0 0.0
    %2135 = vmatprep.subr.mxu0 0.0
    %2136 = vmatpush1.msra.mxu0 0.0
    %2137 = vmatprep.subr.mxu0 0.0
    %2138 = vmatpush1.msra.mxu0 0.0
    %2139 = vmatprep.subr.mxu0 0.0
    %2140 = vmatpush1.msra.mxu0 0.0
    %2141 = vmatprep.mubr.f32.mxu0 %v2070
    %2142 = vmatmul.mubr.f32.gmra.mrb[0].mxu0 %v1737
    %v2143 = vpop.f32.mrb[0].mxu0
    %v2144 = vadd.f32 %v1973, %v2143
    %v2145 = vpop.f32.mrb[0].mxu0
    %v2146 = vadd.f32 %v1975, %v2145
    %2147 = vmatprep.mubr.f32.mxu0 %v2072
    %2148 = vmatmul.mubr.f32.gmra.mrb[0].mxu0 %v1739
    %v2149 = vpop.f32.mrb[0].mxu0
    %v2150 = vadd.f32 %v1979, %v2149
    %v2151 = vpop.f32.mrb[0].mxu0
    %v2152 = vadd.f32 %v1981, %v2151
    %2153 = vmatprep.mubr.f32.mxu0 %v2075
    %2154 = vmatmul.mubr.f32.gmra.mrb[0].mxu0 %v1741
    %v2155 = vpop.f32.mrb[0].mxu0
    %v2156 = vadd.f32 %v1985, %v2155
    %v2157 = vpop.f32.mrb[0].mxu0
    %v2158 = vadd.f32 %v1987, %v2157
    %2159 = vdwg.mxu0
    %2160 = vmatprep.subr.mxu0 0.0
    %2161 = vmatpush1.msra.mxu0 %v1745
    %2162 = vmatprep.subr.mxu0 0.0
    %2163 = vmatpush1.msra.mxu0 %v1748
    %2164 = vmatprep.subr.mxu0 0.0
    %2165 = vmatpush1.msra.mxu0 %v1751
    %2166 = vmatprep.subr.mxu0 0.0
    %2167 = vmatpush1.msra.mxu0 %v1754
    %2168 = vmatprep.subr.mxu0 0.0
    %2169 = vmatpush1.msra.mxu0 %v1757
    %2170 = vmatprep.subr.mxu0 0.0
    %2171 = vmatpush1.msra.mxu0 %v1760
    %2172 = vmatprep.subr.mxu0 0.0
    %2173 = vmatpush1.msra.mxu0 %v1763
    %2174 = vmatprep.subr.mxu0 0.0
    %2175 = vmatpush1.msra.mxu0 %v1766
    %2176 = vmatprep.subr.mxu0 0.0
    %2177 = vmatpush1.msra.mxu0 %v1769
    %2178 = vmatprep.subr.mxu0 0.0
    %2179 = vmatpush1.msra.mxu0 %v1772
    %2180 = vmatprep.subr.mxu0 0.0
    %2181 = vmatpush1.msra.mxu0 %v1775
    %2182 = vmatprep.subr.mxu0 0.0
    %2183 = vmatpush1.msra.mxu0 %v1778
    %2184 = vmatprep.subr.mxu0 0.0
    %2185 = vmatpush1.msra.mxu0 %v1781
    %2186 = vmatprep.subr.mxu0 0.0
    %2187 = vmatpush1.msra.mxu0 %v1784
    %2188 = vmatprep.subr.mxu0 0.0
    %2189 = vmatpush1.msra.mxu0 %v1787
    %2190 = vmatprep.subr.mxu0 0.0
    %2191 = vmatpush1.msra.mxu0 %v1790
    %2192 = vmatprep.subr.mxu0 0.0
    %2193 = vmatpush1.msra.mxu0 %v1793
    %2194 = vmatprep.subr.mxu0 0.0
    %2195 = vmatpush1.msra.mxu0 %v1796
    %2196 = vmatprep.subr.mxu0 0.0
    %2197 = vmatpush1.msra.mxu0 %v1799
    %2198 = vmatprep.subr.mxu0 0.0
    %2199 = vmatpush1.msra.mxu0 %v1802
    %2200 = vmatprep.subr.mxu0 0.0
    %2201 = vmatpush1.msra.mxu0 %v1805
    %2202 = vmatprep.subr.mxu0 0.0
    %2203 = vmatpush1.msra.mxu0 %v1808
    %2204 = vmatprep.subr.mxu0 0.0
    %2205 = vmatpush1.msra.mxu0 0.0
    %2206 = vmatprep.subr.mxu0 0.0
    %2207 = vmatpush1.msra.mxu0 0.0
    %2208 = vmatprep.subr.mxu0 0.0
    %2209 = vmatpush1.msra.mxu0 0.0
    %2210 = vmatprep.subr.mxu0 0.0
    %2211 = vmatpush1.msra.mxu0 0.0
    %2212 = vmatprep.subr.mxu0 0.0
    %2213 = vmatpush1.msra.mxu0 0.0
    %2214 = vmatprep.subr.mxu0 0.0
    %2215 = vmatpush1.msra.mxu0 0.0
    %2216 = vmatprep.subr.mxu0 0.0
    %2217 = vmatpush1.msra.mxu0 0.0
    %2218 = vmatprep.subr.mxu0 0.0
    %2219 = vmatpush1.msra.mxu0 0.0
    %2220 = vmatprep.subr.mxu0 0.0
    %2221 = vmatpush1.msra.mxu0 0.0
    %2222 = vmatprep.subr.mxu0 0.0
    %2223 = vmatpush1.msra.mxu0 0.0
    %2224 = vmatprep.mubr.f32.mxu0 %v2070
    %2225 = vmatmul.mubr.f32.gmra.mrb[0].mxu0 %v1737
    %v2226 = vpop.f32.mrb[0].mxu0
    %v2227 = vadd.f32 %v2056, %v2226
    %v2228 = vpop.f32.mrb[0].mxu0
    %2229 = vmatprep.mubr.f32.mxu0 %v2072
    %2230 = vmatmul.mubr.f32.gmra.mrb[0].mxu0 %v1739
    %v2231 = vpop.f32.mrb[0].mxu0
    %v2232 = vadd.f32 %v2061, %v2231
    %v2233 = vpop.f32.mrb[0].mxu0
    %2234 = vmatprep.mubr.f32.mxu0 %v2075
    %2235 = vmatmul.mubr.f32.gmra.mrb[0].mxu0 %v1741
    %v2236 = vpop.f32.mrb[0].mxu0
    %v2237 = vadd.f32 %v2066, %v2236
    %v2238 = vpop.f32.mrb[0].mxu0
    %2239 = vdwg.mxu0
    %v2240 = vld [vmem:[#allocation2] sm:$0xfc]
    %v2241 = vld [vmem:[#allocation2 + $0x8] sm:$0xfc]
    %v2242 = vld [vmem:[#allocation2 + $0x20] sm:$0x3f]
    %v2243 = vld [vmem:[#allocation2 + $0x28] sm:$0x3f]
    %s2244 = scalar_lea.vmem %s4, 1056
    %v2245 = vld [vmem:[%s2244] sm:$0xff]
    %v2246 = vld [vmem:[%s2244 + $0x8] sm:$0xff]
    %v2247 = vld [vmem:[%s2244 + $0x10] sm:$0xff]
    %v2248 = vld [vmem:[%s2244 + $0x18] sm:$0xff]
    %v2249 = vld [vmem:[%s2244 + $0x20] sm:$0xff]
    %v2250 = vld [vmem:[%s2244 + $0x28] sm:$0xff]
    %v2251 = vld [vmem:[%s2244 + $0x30] sm:$0xff]
    %v2252 = vld [vmem:[%s2244 + $0x38] sm:$0xff]
    %v2253 = vld [vmem:[%s2244 + $0x40] sm:$0xff]
    %v2254 = vld [vmem:[%s2244 + $0x48] sm:$0xff]
    %v2255 = vld [vmem:[%s2244 + $0x50] sm:$0xff]
    %v2256 = vld [vmem:[%s2244 + $0x58] sm:$0xff]
    %v2257 = vld [vmem:[%s2244 + $0x60] sm:$0xff]
    %v2258 = vld [vmem:[%s2244 + $0x68] sm:$0xff]
    %v2259 = vld [vmem:[%s2244 + $0x70] sm:$0xff]
    %v2260 = vld [vmem:[%s2244 + $0x78] sm:$0xff]
    %v2261 = vld [vmem:[%s2244 + $0x80] sm:$0xff]
    %v2262 = vld [vmem:[%s2244 + $0x88] sm:$0xff]
    %v2263 = vld [vmem:[%s2244 + $0x90] sm:$0xff]
    %v2264 = vld [vmem:[%s2244 + $0x98] sm:$0xff]
    %v2265 = vld [vmem:[%s2244 + $0xa0] sm:$0xff]
    %v2266 = vld [vmem:[%s2244 + $0xa8] sm:$0xff]
    %v2267 = vld [vmem:[%s2244 + $0xb0] sm:$0xff]
    %v2268 = vld [vmem:[%s2244 + $0xb8] sm:$0xff]
    %v2269 = vld [vmem:[%s2244 + $0xc0] sm:$0xff]
    %v2270 = vld [vmem:[%s2244 + $0xc8] sm:$0xff]
    %v2271 = vld [vmem:[%s2244 + $0xd0] sm:$0xff]
    %v2272 = vld [vmem:[%s2244 + $0xd8] sm:$0xff]
    %v2273 = vld [vmem:[%s2244 + $0xe0] sm:$0xff]
    %v2274 = vld [vmem:[%s2244 + $0xe8] sm:$0xff]
    %v2275 = vld [vmem:[%s2244 + $0xf0] sm:$0xff]
    %v2276 = vld [vmem:[%s2244 + $0xf8] sm:$0xff]
    %v2277 = vld [vmem:[%s2244 + $0x100] sm:$0xff]
    %v2278 = vld [vmem:[%s2244 + $0x108] sm:$0xff]
    %v2279 = vld [vmem:[%s2244 + $0x110] sm:$0xff]
    %v2280 = vld [vmem:[%s2244 + $0x118] sm:$0xff]
    %v2281 = vld [vmem:[%s2244 + $0x120] sm:$0xff]
    %v2282 = vld [vmem:[%s2244 + $0x128] sm:$0xff]
    %v2283 = vld [vmem:[%s2244 + $0x130] sm:$0xff]
    %v2284 = vld [vmem:[%s2244 + $0x138] sm:$0xff]
    %v2285 = vld [vmem:[%s2244 + $0x140] sm:$0xff]
    %v2286 = vld [vmem:[%s2244 + $0x148] sm:$0xff]
    %v2287 = vld [vmem:[%s2244 + $0x150] sm:$0xff]
    %v2288 = vld [vmem:[%s2244 + $0x158] sm:$0xff]
    %v2289 = vld [vmem:[%s2244 + $0x160] sm:$0xff]
    %v2290 = vld [vmem:[%s2244 + $0x168] sm:$0xff]
    %v2291 = vld [vmem:[%s2244 + $0x170] sm:$0xff]
    %v2292 = vld [vmem:[%s2244 + $0x178] sm:$0xff]
    %v2293 = vld [vmem:[%s2244 + $0x180] sm:$0xff]
    %v2294 = vld [vmem:[%s2244 + $0x188] sm:$0xff]
    %v2295 = vld [vmem:[%s2244 + $0x190] sm:$0xff]
    %v2296 = vld [vmem:[%s2244 + $0x198] sm:$0xff]
    %v2297 = vld [vmem:[%s2244 + $0x1a0] sm:$0xff]
    %v2298 = vld [vmem:[%s2244 + $0x1a8] sm:$0xff]
    %v2299 = vld [vmem:[%s2244 + $0x1b0] sm:$0xff]
    %v2300 = vld [vmem:[%s2244 + $0x1b8] sm:$0xff]
    %v2301 = vld [vmem:[%s2244 + $0x1c0] sm:$0xff]
    %v2302 = vld [vmem:[%s2244 + $0x1c8] sm:$0xff]
    %v2303 = vld [vmem:[%s2244 + $0x1d0] sm:$0xff]
    %v2304 = vld [vmem:[%s2244 + $0x1d8] sm:$0xff]
    %v2305 = vld [vmem:[%s2244 + $0x1e0] sm:$0xff]
    %v2306 = vld [vmem:[%s2244 + $0x1e8] sm:$0xff]
    %v2307 = vld [vmem:[%s2244 + $0x1f0] sm:$0xff]
    %v2308 = vld [vmem:[%s2244 + $0x1f8] sm:$0xff]
    %v2309 = vld [vmem:[%s2244 + $0x200] sm:$0xff]
    %v2310 = vld [vmem:[%s2244 + $0x208] sm:$0xff]
    %v2315 = vrot.slane %v2240, 2
    %v2316 = vrot.slane %v1739, 2
    %v2317 = vsel %vm1535, %v2315, %v2316
    %v2318 = vrot.slane %v2241, 2
    %v2319 = vrot.slane %v1740, 2
    %v2320 = vsel %vm1535, %v2318, %v2319
    %v2321 = vrot.slane %v2242, 2
    %v2322 = vsel %vm1535, %v2316, %v2321
    %v2323 = vrot.slane %v2243, 2
    %v2324 = vsel %vm1535, %v2319, %v2323
    %v2328 = vsel %vm1728, %v2320, 0
    %v2330 = vsel %vm1728, %v2324, 0
    %v2332 = vsel %vm1728, %v2323, 0
    %2334 = vmatprep.subr.mxu0 %v2246
    %2335 = vmatpush1.msra.mxu0 %v2245
    %2336 = vmatprep.subr.mxu0 %v2249
    %2337 = vmatpush1.msra.mxu0 %v2248
    %2338 = vmatprep.subr.mxu0 %v2252
    %2339 = vmatpush1.msra.mxu0 %v2251
    %2340 = vmatprep.subr.mxu0 %v2255
    %2341 = vmatpush1.msra.mxu0 %v2254
    %2342 = vmatprep.subr.mxu0 %v2258
    %2343 = vmatpush1.msra.mxu0 %v2257
    %2344 = vmatprep.subr.mxu0 %v2261
    %2345 = vmatpush1.msra.mxu0 %v2260
    %2346 = vmatprep.subr.mxu0 %v2264
    %2347 = vmatpush1.msra.mxu0 %v2263
    %2348 = vmatprep.subr.mxu0 %v2267
    %2349 = vmatpush1.msra.mxu0 %v2266
    %2350 = vmatprep.subr.mxu0 %v2270
    %2351 = vmatpush1.msra.mxu0 %v2269
    %2352 = vmatprep.subr.mxu0 %v2273
    %2353 = vmatpush1.msra.mxu0 %v2272
    %2354 = vmatprep.subr.mxu0 %v2276
    %2355 = vmatpush1.msra.mxu0 %v2275
    %2356 = vmatprep.subr.mxu0 %v2279
    %2357 = vmatpush1.msra.mxu0 %v2278
    %2358 = vmatprep.subr.mxu0 %v2282
    %2359 = vmatpush1.msra.mxu0 %v2281
    %2360 = vmatprep.subr.mxu0 %v2285
    %2361 = vmatpush1.msra.mxu0 %v2284
    %2362 = vmatprep.subr.mxu0 %v2288
    %2363 = vmatpush1.msra.mxu0 %v2287
    %2364 = vmatprep.subr.mxu0 %v2291
    %2365 = vmatpush1.msra.mxu0 %v2290
    %2366 = vmatprep.subr.mxu0 %v2294
    %2367 = vmatpush1.msra.mxu0 %v2293
    %2368 = vmatprep.subr.mxu0 %v2297
    %2369 = vmatpush1.msra.mxu0 %v2296
    %2370 = vmatprep.subr.mxu0 %v2300
    %2371 = vmatpush1.msra.mxu0 %v2299
    %2372 = vmatprep.subr.mxu0 %v2303
    %2373 = vmatpush1.msra.mxu0 %v2302
    %2374 = vmatprep.subr.mxu0 %v2306
    %2375 = vmatpush1.msra.mxu0 %v2305
    %2376 = vmatprep.subr.mxu0 %v2309
    %2377 = vmatpush1.msra.mxu0 %v2308
    %2378 = vmatprep.subr.mxu0 0.0
    %2379 = vmatpush1.msra.mxu0 0.0
    %2380 = vmatprep.subr.mxu0 0.0
    %2381 = vmatpush1.msra.mxu0 0.0
    %2382 = vmatprep.subr.mxu0 0.0
    %2383 = vmatpush1.msra.mxu0 0.0
    %2384 = vmatprep.subr.mxu0 0.0
    %2385 = vmatpush1.msra.mxu0 0.0
    %2386 = vmatprep.subr.mxu0 0.0
    %2387 = vmatpush1.msra.mxu0 0.0
    %2388 = vmatprep.subr.mxu0 0.0
    %2389 = vmatpush1.msra.mxu0 0.0
    %2390 = vmatprep.subr.mxu0 0.0
    %2391 = vmatpush1.msra.mxu0 0.0
    %2392 = vmatprep.subr.mxu0 0.0
    %2393 = vmatpush1.msra.mxu0 0.0
    %2394 = vmatprep.subr.mxu0 0.0
    %2395 = vmatpush1.msra.mxu0 0.0
    %2396 = vmatprep.subr.mxu0 0.0
    %2397 = vmatpush1.msra.mxu0 0.0
    %2398 = vmatprep.mubr.f32.mxu0 %v2328
    %2399 = vmatmul.mubr.f32.gmra.mrb[0].mxu0 %v2317
    %v2400 = vpop.f32.mrb[0].mxu0
    %v2401 = vadd.f32 0.0, %v2400
    %v2402 = vpop.f32.mrb[0].mxu0
    %v2403 = vadd.f32 0.0, %v2402
    %2404 = vmatprep.mubr.f32.mxu0 %v2330
    %2405 = vmatmul.mubr.f32.gmra.mrb[0].mxu0 %v2322
    %v2406 = vpop.f32.mrb[0].mxu0
    %v2407 = vadd.f32 0.0, %v2406
    %v2408 = vpop.f32.mrb[0].mxu0
    %v2409 = vadd.f32 0.0, %v2408
    %2410 = vmatprep.mubr.f32.mxu0 %v2332
    %2411 = vmatmul.mubr.f32.gmra.mrb[0].mxu0 %v2321
    %v2412 = vpop.f32.mrb[0].mxu0
    %v2413 = vadd.f32 0.0, %v2412
    %v2414 = vpop.f32.mrb[0].mxu0
    %v2415 = vadd.f32 0.0, %v2414
    %2416 = vdwg.mxu0
    %2417 = vmatprep.subr.mxu0 0.0
    %2418 = vmatpush1.msra.mxu0 %v2247
    %2419 = vmatprep.subr.mxu0 0.0
    %2420 = vmatpush1.msra.mxu0 %v2250
    %2421 = vmatprep.subr.mxu0 0.0
    %2422 = vmatpush1.msra.mxu0 %v2253
    %2423 = vmatprep.subr.mxu0 0.0
    %2424 = vmatpush1.msra.mxu0 %v2256
    %2425 = vmatprep.subr.mxu0 0.0
    %2426 = vmatpush1.msra.mxu0 %v2259
    %2427 = vmatprep.subr.mxu0 0.0
    %2428 = vmatpush1.msra.mxu0 %v2262
    %2429 = vmatprep.subr.mxu0 0.0
    %2430 = vmatpush1.msra.mxu0 %v2265
    %2431 = vmatprep.subr.mxu0 0.0
    %2432 = vmatpush1.msra.mxu0 %v2268
    %2433 = vmatprep.subr.mxu0 0.0
    %2434 = vmatpush1.msra.mxu0 %v2271
    %2435 = vmatprep.subr.mxu0 0.0
    %2436 = vmatpush1.msra.mxu0 %v2274
    %2437 = vmatprep.subr.mxu0 0.0
    %2438 = vmatpush1.msra.mxu0 %v2277
    %2439 = vmatprep.subr.mxu0 0.0
    %2440 = vmatpush1.msra.mxu0 %v2280
    %2441 = vmatprep.subr.mxu0 0.0
    %2442 = vmatpush1.msra.mxu0 %v2283
    %2443 = vmatprep.subr.mxu0 0.0
    %2444 = vmatpush1.msra.mxu0 %v2286
    %2445 = vmatprep.subr.mxu0 0.0
    %2446 = vmatpush1.msra.mxu0 %v2289
    %2447 = vmatprep.subr.mxu0 0.0
    %2448 = vmatpush1.msra.mxu0 %v2292
    %2449 = vmatprep.subr.mxu0 0.0
    %2450 = vmatpush1.msra.mxu0 %v2295
    %2451 = vmatprep.subr.mxu0 0.0
    %2452 = vmatpush1.msra.mxu0 %v2298
    %2453 = vmatprep.subr.mxu0 0.0
    %2454 = vmatpush1.msra.mxu0 %v2301
    %2455 = vmatprep.subr.mxu0 0.0
    %2456 = vmatpush1.msra.mxu0 %v2304
    %2457 = vmatprep.subr.mxu0 0.0
    %2458 = vmatpush1.msra.mxu0 %v2307
    %2459 = vmatprep.subr.mxu0 0.0
    %2460 = vmatpush1.msra.mxu0 %v2310
    %2461 = vmatprep.subr.mxu0 0.0
    %2462 = vmatpush1.msra.mxu0 0.0
    %2463 = vmatprep.subr.mxu0 0.0
    %2464 = vmatpush1.msra.mxu0 0.0
    %2465 = vmatprep.subr.mxu0 0.0
    %2466 = vmatpush1.msra.mxu0 0.0
    %2467 = vmatprep.subr.mxu0 0.0
    %2468 = vmatpush1.msra.mxu0 0.0
    %2469 = vmatprep.subr.mxu0 0.0
    %2470 = vmatpush1.msra.mxu0 0.0
    %2471 = vmatprep.subr.mxu0 0.0
    %2472 = vmatpush1.msra.mxu0 0.0
    %2473 = vmatprep.subr.mxu0 0.0
    %2474 = vmatpush1.msra.mxu0 0.0
    %2475 = vmatprep.subr.mxu0 0.0
    %2476 = vmatpush1.msra.mxu0 0.0
    %2477 = vmatprep.subr.mxu0 0.0
    %2478 = vmatpush1.msra.mxu0 0.0
    %2479 = vmatprep.subr.mxu0 0.0
    %2480 = vmatpush1.msra.mxu0 0.0
    %2481 = vmatprep.mubr.f32.mxu0 %v2328
    %2482 = vmatmul.mubr.f32.gmra.mrb[0].mxu0 %v2317
    %v2483 = vpop.f32.mrb[0].mxu0
    %v2484 = vadd.f32 0.0, %v2483
    %v2485 = vpop.f32.mrb[0].mxu0
    %2486 = vmatprep.mubr.f32.mxu0 %v2330
    %2487 = vmatmul.mubr.f32.gmra.mrb[0].mxu0 %v2322
    %v2488 = vpop.f32.mrb[0].mxu0
    %v2489 = vadd.f32 0.0, %v2488
    %v2490 = vpop.f32.mrb[0].mxu0
    %2491 = vmatprep.mubr.f32.mxu0 %v2332
    %2492 = vmatmul.mubr.f32.gmra.mrb[0].mxu0 %v2321
    %v2493 = vpop.f32.mrb[0].mxu0
    %v2494 = vadd.f32 0.0, %v2493
    %v2495 = vpop.f32.mrb[0].mxu0
    %2496 = vdwg.mxu0
    %v2497 = vadd.f32 %v2144, %v2401
    %v2498 = vadd.f32 %v2146, %v2403
    %v2499 = vadd.f32 %v2227, %v2484
    %v2500 = vadd.f32 %v2150, %v2407
    %v2501 = vadd.f32 %v2152, %v2409
    %v2502 = vadd.f32 %v2232, %v2489
    %v2503 = vadd.f32 %v2156, %v2413
    %v2504 = vadd.f32 %v2158, %v2415
    %v2505 = vadd.f32 %v2237, %v2494
    %v2507 = vlaneseq
    %v2508 = vshrl.u32 %v2507, 7
    %v2509 = vsub.s32 0, %v2508
    %v2510 = vrot.slane %v1736, %v2509
    %v2511 = vlaneseq
    %v2512 = vshrl.u32 %v2511, 7
    %v2513 = vsub.s32 1, %v2512
    %v2514 = vrot.slane %v1736, %v2513
    %v2515 = vlaneseq
    %v2516 = vshrl.u32 %v2515, 7
    %v2517 = vsub.s32 2, %v2516
    %v2518 = vrot.slane %v1736, %v2517
    %v2522 = vadd.f32 %v2497, %v2510
    %v2523 = vadd.f32 %v2498, %v2514
    %v2524 = vadd.f32 %v2499, %v2518
    %v2525 = vadd.f32 %v2500, %v2510
    %v2526 = vadd.f32 %v2501, %v2514
    %v2527 = vadd.f32 %v2502, %v2518
    %v2528 = vadd.f32 %v2503, %v2510
    %v2529 = vadd.f32 %v2504, %v2514
    %v2530 = vadd.f32 %v2505, %v2518
    %v2531 = vmax.f32 %v2522, 0.0
    %v2532 = vmax.f32 %v2523, 0.0
    %v2533 = vmax.f32 %v2524, 0.0
    %v2534 = vmax.f32 %v2525, 0.0
    %v2535 = vmax.f32 %v2526, 0.0
    %v2536 = vmax.f32 %v2527, 0.0
    %v2537 = vmax.f32 %v2528, 0.0
    %v2538 = vmax.f32 %v2529, 0.0
    %v2539 = vmax.f32 %v2530, 0.0
    %v2540 = vld [vmem:[#allocation4] sm:$0xff]
    %v2541 = vld [vmem:[#allocation4 + $0x8] sm:$0xff]
    %v2542 = vld [vmem:[#allocation4 + $0x10] sm:$0xff]
    %v2543 = vld [vmem:[#allocation4 + $0x18] sm:$0xff]
    %v2544 = vld [vmem:[#allocation4 + $0x20] sm:$0xff]
    %v2545 = vld [vmem:[#allocation4 + $0x28] sm:$0xff]
    %v2546 = vld [vmem:[#allocation4 + $0x30] sm:$0xff]
    %v2547 = vld [vmem:[#allocation4 + $0x38] sm:$0xff]
    %v2548 = vld [vmem:[#allocation4 + $0x40] sm:$0xff]
    %v2549 = vld [vmem:[#allocation4 + $0x48] sm:$0xff]
    %v2550 = vld [vmem:[#allocation4 + $0x50] sm:$0xff]
    %v2551 = vld [vmem:[#allocation4 + $0x58] sm:$0xff]
    %v2552 = vld [vmem:[#allocation4 + $0x60] sm:$0xff]
    %v2553 = vld [vmem:[#allocation4 + $0x68] sm:$0xff]
    %v2554 = vld [vmem:[#allocation4 + $0x70] sm:$0xff]
    %v2555 = vld [vmem:[#allocation4 + $0x78] sm:$0xff]
    %v2556 = vld [vmem:[#allocation4 + $0x80] sm:$0xff]
    %v2557 = vld [vmem:[#allocation4 + $0x88] sm:$0xff]
    %v2558 = vld [vmem:[#allocation4 + $0x90] sm:$0xff]
    %v2559 = vld [vmem:[#allocation4 + $0x98] sm:$0xff]
    %v2560 = vld [vmem:[#allocation4 + $0xa0] sm:$0xff]
    %v2561 = vld [vmem:[#allocation4 + $0xa8] sm:$0xff]
    %v2562 = vld [vmem:[#allocation4 + $0xb0] sm:$0xff]
    %v2563 = vld [vmem:[#allocation4 + $0xb8] sm:$0xff]
    %v2564 = vld [vmem:[#allocation4 + $0xc0] sm:$0xff]
    %v2565 = vld [vmem:[#allocation4 + $0xc8] sm:$0xff]
    %v2566 = vld [vmem:[#allocation4 + $0xd0] sm:$0xff]
    %v2567 = vld [vmem:[#allocation4 + $0xd8] sm:$0xff]
    %v2568 = vld [vmem:[#allocation4 + $0xe0] sm:$0xff]
    %v2569 = vld [vmem:[#allocation4 + $0xe8] sm:$0xff]
    %v2570 = vld [vmem:[#allocation4 + $0xf0] sm:$0xff]
    %v2571 = vld [vmem:[#allocation4 + $0xf8] sm:$0xff]
    %v2572 = vld [vmem:[#allocation4 + $0x100] sm:$0xff]
    %v2573 = vld [vmem:[#allocation4 + $0x108] sm:$0xff]
    %v2574 = vld [vmem:[#allocation4 + $0x110] sm:$0xff]
    %v2575 = vld [vmem:[#allocation4 + $0x118] sm:$0xff]
    %vm2576 = vcmask 261120
    %v2578 = vsel %vm2576, %v2533, 0
    %v2581 = vsel %vm2576, %v2536, 0
    %v2584 = vsel %vm2576, %v2539, 0
    %2586 = vmatprep.subr.mxu0 0.0
    %2587 = vmatpush1.msra.mxu0 %v2540
    %2588 = vmatprep.subr.mxu0 0.0
    %2589 = vmatpush1.msra.mxu0 %v2541
    %2590 = vmatprep.subr.mxu0 0.0
    %2591 = vmatpush1.msra.mxu0 %v2542
    %2592 = vmatprep.subr.mxu0 0.0
    %2593 = vmatpush1.msra.mxu0 %v2543
    %2594 = vmatprep.subr.mxu0 0.0
    %2595 = vmatpush1.msra.mxu0 %v2544
    %2596 = vmatprep.subr.mxu0 0.0
    %2597 = vmatpush1.msra.mxu0 %v2545
    %2598 = vmatprep.subr.mxu0 0.0
    %2599 = vmatpush1.msra.mxu0 %v2546
    %2600 = vmatprep.subr.mxu0 0.0
    %2601 = vmatpush1.msra.mxu0 %v2547
    %2602 = vmatprep.subr.mxu0 0.0
    %2603 = vmatpush1.msra.mxu0 %v2548
    %2604 = vmatprep.subr.mxu0 0.0
    %2605 = vmatpush1.msra.mxu0 %v2549
    %2606 = vmatprep.subr.mxu0 0.0
    %2607 = vmatpush1.msra.mxu0 %v2550
    %2608 = vmatprep.subr.mxu0 0.0
    %2609 = vmatpush1.msra.mxu0 %v2551
    %2610 = vmatprep.subr.mxu0 0.0
    %2611 = vmatpush1.msra.mxu0 %v2552
    %2612 = vmatprep.subr.mxu0 0.0
    %2613 = vmatpush1.msra.mxu0 %v2553
    %2614 = vmatprep.subr.mxu0 0.0
    %2615 = vmatpush1.msra.mxu0 %v2554
    %2616 = vmatprep.subr.mxu0 0.0
    %2617 = vmatpush1.msra.mxu0 %v2555
    %2618 = vmatprep.subr.mxu0 0.0
    %2619 = vmatpush1.msra.mxu0 %v2556
    %2620 = vmatprep.subr.mxu0 0.0
    %2621 = vmatpush1.msra.mxu0 %v2557
    %2622 = vmatprep.subr.mxu0 0.0
    %2623 = vmatpush1.msra.mxu0 %v2558
    %2624 = vmatprep.subr.mxu0 0.0
    %2625 = vmatpush1.msra.mxu0 %v2559
    %2626 = vmatprep.subr.mxu0 0.0
    %2627 = vmatpush1.msra.mxu0 %v2560
    %2628 = vmatprep.subr.mxu0 0.0
    %2629 = vmatpush1.msra.mxu0 %v2561
    %2630 = vmatprep.subr.mxu0 0.0
    %2631 = vmatpush1.msra.mxu0 %v2562
    %2632 = vmatprep.subr.mxu0 0.0
    %2633 = vmatpush1.msra.mxu0 %v2563
    %2634 = vmatprep.subr.mxu0 0.0
    %2635 = vmatpush1.msra.mxu0 %v2564
    %2636 = vmatprep.subr.mxu0 0.0
    %2637 = vmatpush1.msra.mxu0 %v2565
    %2638 = vmatprep.subr.mxu0 0.0
    %2639 = vmatpush1.msra.mxu0 %v2566
    %2640 = vmatprep.subr.mxu0 0.0
    %2641 = vmatpush1.msra.mxu0 %v2567
    %2642 = vmatprep.subr.mxu0 0.0
    %2643 = vmatpush1.msra.mxu0 %v2568
    %2644 = vmatprep.subr.mxu0 0.0
    %2645 = vmatpush1.msra.mxu0 %v2569
    %2646 = vmatprep.subr.mxu0 0.0
    %2647 = vmatpush1.msra.mxu0 %v2570
    %2648 = vmatprep.subr.mxu0 0.0
    %2649 = vmatpush1.msra.mxu0 %v2571
    %2650 = vmatprep.mubr.f32.mxu0 %v2532
    %2651 = vmatmul.mubr.f32.gmra.mrb[0].mxu0 %v2531
    %v2652 = vpop.f32.mrb[0].mxu0
    %v2653 = vadd.f32 0.0, %v2652
    %v2654 = vpop.f32.mrb[0].mxu0
    %2655 = vmatprep.mubr.f32.mxu0 %v2535
    %2656 = vmatmul.mubr.f32.gmra.mrb[0].mxu0 %v2534
    %v2657 = vpop.f32.mrb[0].mxu0
    %v2658 = vadd.f32 0.0, %v2657
    %v2659 = vpop.f32.mrb[0].mxu0
    %2660 = vmatprep.mubr.f32.mxu0 %v2538
    %2661 = vmatmul.mubr.f32.gmra.mrb[0].mxu0 %v2537
    %v2662 = vpop.f32.mrb[0].mxu0
    %v2663 = vadd.f32 0.0, %v2662
    %v2664 = vpop.f32.mrb[0].mxu0
    %2665 = vdwg.mxu0
    %2666 = vmatprep.subr.mxu0 0.0
    %2667 = vmatpush1.msra.mxu0 %v2572
    %2668 = vmatprep.subr.mxu0 0.0
    %2669 = vmatpush1.msra.mxu0 %v2573
    %2670 = vmatprep.subr.mxu0 0.0
    %2671 = vmatpush1.msra.mxu0 %v2574
    %2672 = vmatprep.subr.mxu0 0.0
    %2673 = vmatpush1.msra.mxu0 %v2575
    %2674 = vmatprep.subr.mxu0 0.0
    %2675 = vmatpush1.msra.mxu0 0.0
    %2676 = vmatprep.subr.mxu0 0.0
    %2677 = vmatpush1.msra.mxu0 0.0
    %2678 = vmatprep.subr.mxu0 0.0
    %2679 = vmatpush1.msra.mxu0 0.0
    %2680 = vmatprep.subr.mxu0 0.0
    %2681 = vmatpush1.msra.mxu0 0.0
    %2682 = vmatprep.subr.mxu0 0.0
    %2683 = vmatpush1.msra.mxu0 0.0
    %2684 = vmatprep.subr.mxu0 0.0
    %2685 = vmatpush1.msra.mxu0 0.0
    %2686 = vmatprep.subr.mxu0 0.0
    %2687 = vmatpush1.msra.mxu0 0.0
    %2688 = vmatprep.subr.mxu0 0.0
    %2689 = vmatpush1.msra.mxu0 0.0
    %2690 = vmatprep.subr.mxu0 0.0
    %2691 = vmatpush1.msra.mxu0 0.0
    %2692 = vmatprep.subr.mxu0 0.0
    %2693 = vmatpush1.msra.mxu0 0.0
    %2694 = vmatprep.subr.mxu0 0.0
    %2695 = vmatpush1.msra.mxu0 0.0
    %2696 = vmatprep.subr.mxu0 0.0
    %2697 = vmatpush1.msra.mxu0 0.0
    %2698 = vmatprep.subr.mxu0 0.0
    %2699 = vmatpush1.msra.mxu0 0.0
    %2700 = vmatprep.subr.mxu0 0.0
    %2701 = vmatpush1.msra.mxu0 0.0
    %2702 = vmatprep.subr.mxu0 0.0
    %2703 = vmatpush1.msra.mxu0 0.0
    %2704 = vmatprep.subr.mxu0 0.0
    %2705 = vmatpush1.msra.mxu0 0.0
    %2706 = vmatprep.subr.mxu0 0.0
    %2707 = vmatpush1.msra.mxu0 0.0
    %2708 = vmatprep.subr.mxu0 0.0
    %2709 = vmatpush1.msra.mxu0 0.0
    %2710 = vmatprep.subr.mxu0 0.0
    %2711 = vmatpush1.msra.mxu0 0.0
    %2712 = vmatprep.subr.mxu0 0.0
    %2713 = vmatpush1.msra.mxu0 0.0
    %2714 = vmatprep.subr.mxu0 0.0
    %2715 = vmatpush1.msra.mxu0 0.0
    %2716 = vmatprep.subr.mxu0 0.0
    %2717 = vmatpush1.msra.mxu0 0.0
    %2718 = vmatprep.subr.mxu0 0.0
    %2719 = vmatpush1.msra.mxu0 0.0
    %2720 = vmatprep.subr.mxu0 0.0
    %2721 = vmatpush1.msra.mxu0 0.0
    %2722 = vmatprep.subr.mxu0 0.0
    %2723 = vmatpush1.msra.mxu0 0.0
    %2724 = vmatprep.subr.mxu0 0.0
    %2725 = vmatpush1.msra.mxu0 0.0
    %2726 = vmatprep.subr.mxu0 0.0
    %2727 = vmatpush1.msra.mxu0 0.0
    %2728 = vmatprep.subr.mxu0 0.0
    %2729 = vmatpush1.msra.mxu0 0.0
    %2730 = vmatprep.mubr.f32.mxu0 0.0
    %2731 = vmatmul.mubr.f32.gmra.mrb[0].mxu0 %v2578
    %v2732 = vpop.f32.mrb[0].mxu0
    %v2733 = vadd.f32 %v2653, %v2732
    %v2734 = vpop.f32.mrb[0].mxu0
    %2735 = vmatprep.mubr.f32.mxu0 0.0
    %2736 = vmatmul.mubr.f32.gmra.mrb[0].mxu0 %v2581
    %v2737 = vpop.f32.mrb[0].mxu0
    %v2738 = vadd.f32 %v2658, %v2737
    %v2739 = vpop.f32.mrb[0].mxu0
    %2740 = vmatprep.mubr.f32.mxu0 0.0
    %2741 = vmatmul.mubr.f32.gmra.mrb[0].mxu0 %v2584
    %v2742 = vpop.f32.mrb[0].mxu0
    %v2743 = vadd.f32 %v2663, %v2742
    %v2744 = vpop.f32.mrb[0].mxu0
    %2745 = vdwg.mxu0
    %s2746 = scalar_lea.vmem [#allocation4], 288
    %v2747 = vld [vmem:[%s2746] sm:$0xff]
    %v2748 = vld [vmem:[%s2746 + $0x8] sm:$0xff]
    %v2749 = vld [vmem:[%s2746 + $0x10] sm:$0xff]
    %v2750 = vld [vmem:[%s2746 + $0x18] sm:$0xff]
    %v2751 = vld [vmem:[%s2746 + $0x20] sm:$0xff]
    %v2752 = vld [vmem:[%s2746 + $0x28] sm:$0xff]
    %v2753 = vld [vmem:[%s2746 + $0x30] sm:$0xff]
    %v2754 = vld [vmem:[%s2746 + $0x38] sm:$0xff]
    %v2755 = vld [vmem:[%s2746 + $0x40] sm:$0xff]
    %v2756 = vld [vmem:[%s2746 + $0x48] sm:$0xff]
    %v2757 = vld [vmem:[%s2746 + $0x50] sm:$0xff]
    %v2758 = vld [vmem:[%s2746 + $0x58] sm:$0xff]
    %v2759 = vld [vmem:[%s2746 + $0x60] sm:$0xff]
    %v2760 = vld [vmem:[%s2746 + $0x68] sm:$0xff]
    %v2761 = vld [vmem:[%s2746 + $0x70] sm:$0xff]
    %v2762 = vld [vmem:[%s2746 + $0x78] sm:$0xff]
    %v2763 = vld [vmem:[%s2746 + $0x80] sm:$0xff]
    %v2764 = vld [vmem:[%s2746 + $0x88] sm:$0xff]
    %v2765 = vld [vmem:[%s2746 + $0x90] sm:$0xff]
    %v2766 = vld [vmem:[%s2746 + $0x98] sm:$0xff]
    %v2767 = vld [vmem:[%s2746 + $0xa0] sm:$0xff]
    %v2768 = vld [vmem:[%s2746 + $0xa8] sm:$0xff]
    %v2769 = vld [vmem:[%s2746 + $0xb0] sm:$0xff]
    %v2770 = vld [vmem:[%s2746 + $0xb8] sm:$0xff]
    %v2771 = vld [vmem:[%s2746 + $0xc0] sm:$0xff]
    %v2772 = vld [vmem:[%s2746 + $0xc8] sm:$0xff]
    %v2773 = vld [vmem:[%s2746 + $0xd0] sm:$0xff]
    %v2774 = vld [vmem:[%s2746 + $0xd8] sm:$0xff]
    %v2775 = vld [vmem:[%s2746 + $0xe0] sm:$0xff]
    %v2776 = vld [vmem:[%s2746 + $0xe8] sm:$0xff]
    %v2777 = vld [vmem:[%s2746 + $0xf0] sm:$0xff]
    %v2778 = vld [vmem:[%s2746 + $0xf8] sm:$0xff]
    %v2779 = vld [vmem:[%s2746 + $0x100] sm:$0xff]
    %v2780 = vld [vmem:[%s2746 + $0x108] sm:$0xff]
    %v2781 = vld [vmem:[%s2746 + $0x110] sm:$0xff]
    %v2782 = vld [vmem:[%s2746 + $0x118] sm:$0xff]
    %2783 = vmatprep.subr.mxu0 0.0
    %2784 = vmatpush1.msra.mxu0 %v2747
    %2785 = vmatprep.subr.mxu0 0.0
    %2786 = vmatpush1.msra.mxu0 %v2748
    %2787 = vmatprep.subr.mxu0 0.0
    %2788 = vmatpush1.msra.mxu0 %v2749
    %2789 = vmatprep.subr.mxu0 0.0
    %2790 = vmatpush1.msra.mxu0 %v2750
    %2791 = vmatprep.subr.mxu0 0.0
    %2792 = vmatpush1.msra.mxu0 %v2751
    %2793 = vmatprep.subr.mxu0 0.0
    %2794 = vmatpush1.msra.mxu0 %v2752
    %2795 = vmatprep.subr.mxu0 0.0
    %2796 = vmatpush1.msra.mxu0 %v2753
    %2797 = vmatprep.subr.mxu0 0.0
    %2798 = vmatpush1.msra.mxu0 %v2754
    %2799 = vmatprep.subr.mxu0 0.0
    %2800 = vmatpush1.msra.mxu0 %v2755
    %2801 = vmatprep.subr.mxu0 0.0
    %2802 = vmatpush1.msra.mxu0 %v2756
    %2803 = vmatprep.subr.mxu0 0.0
    %2804 = vmatpush1.msra.mxu0 %v2757
    %2805 = vmatprep.subr.mxu0 0.0
    %2806 = vmatpush1.msra.mxu0 %v2758
    %2807 = vmatprep.subr.mxu0 0.0
    %2808 = vmatpush1.msra.mxu0 %v2759
    %2809 = vmatprep.subr.mxu0 0.0
    %2810 = vmatpush1.msra.mxu0 %v2760
    %2811 = vmatprep.subr.mxu0 0.0
    %2812 = vmatpush1.msra.mxu0 %v2761
    %2813 = vmatprep.subr.mxu0 0.0
    %2814 = vmatpush1.msra.mxu0 %v2762
    %2815 = vmatprep.subr.mxu0 0.0
    %2816 = vmatpush1.msra.mxu0 %v2763
    %2817 = vmatprep.subr.mxu0 0.0
    %2818 = vmatpush1.msra.mxu0 %v2764
    %2819 = vmatprep.subr.mxu0 0.0
    %2820 = vmatpush1.msra.mxu0 %v2765
    %2821 = vmatprep.subr.mxu0 0.0
    %2822 = vmatpush1.msra.mxu0 %v2766
    %2823 = vmatprep.subr.mxu0 0.0
    %2824 = vmatpush1.msra.mxu0 %v2767
    %2825 = vmatprep.subr.mxu0 0.0
    %2826 = vmatpush1.msra.mxu0 %v2768
    %2827 = vmatprep.subr.mxu0 0.0
    %2828 = vmatpush1.msra.mxu0 %v2769
    %2829 = vmatprep.subr.mxu0 0.0
    %2830 = vmatpush1.msra.mxu0 %v2770
    %2831 = vmatprep.subr.mxu0 0.0
    %2832 = vmatpush1.msra.mxu0 %v2771
    %2833 = vmatprep.subr.mxu0 0.0
    %2834 = vmatpush1.msra.mxu0 %v2772
    %2835 = vmatprep.subr.mxu0 0.0
    %2836 = vmatpush1.msra.mxu0 %v2773
    %2837 = vmatprep.subr.mxu0 0.0
    %2838 = vmatpush1.msra.mxu0 %v2774
    %2839 = vmatprep.subr.mxu0 0.0
    %2840 = vmatpush1.msra.mxu0 %v2775
    %2841 = vmatprep.subr.mxu0 0.0
    %2842 = vmatpush1.msra.mxu0 %v2776
    %2843 = vmatprep.subr.mxu0 0.0
    %2844 = vmatpush1.msra.mxu0 %v2777
    %2845 = vmatprep.subr.mxu0 0.0
    %2846 = vmatpush1.msra.mxu0 %v2778
    %2847 = vmatprep.mubr.f32.mxu0 %v2532
    %2848 = vmatmul.mubr.f32.gmra.mrb[0].mxu0 %v2531
    %v2849 = vpop.f32.mrb[0].mxu0
    %v2850 = vadd.f32 0.0, %v2849
    %v2851 = vpop.f32.mrb[0].mxu0
    %2852 = vmatprep.mubr.f32.mxu0 %v2535
    %2853 = vmatmul.mubr.f32.gmra.mrb[0].mxu0 %v2534
    %v2854 = vpop.f32.mrb[0].mxu0
    %v2855 = vadd.f32 0.0, %v2854
    %v2856 = vpop.f32.mrb[0].mxu0
    %2857 = vmatprep.mubr.f32.mxu0 %v2538
    %2858 = vmatmul.mubr.f32.gmra.mrb[0].mxu0 %v2537
    %v2859 = vpop.f32.mrb[0].mxu0
    %v2860 = vadd.f32 0.0, %v2859
    %v2861 = vpop.f32.mrb[0].mxu0
    %2862 = vdwg.mxu0
    %2863 = vmatprep.subr.mxu0 0.0
    %2864 = vmatpush1.msra.mxu0 %v2779
    %2865 = vmatprep.subr.mxu0 0.0
    %2866 = vmatpush1.msra.mxu0 %v2780
    %2867 = vmatprep.subr.mxu0 0.0
    %2868 = vmatpush1.msra.mxu0 %v2781
    %2869 = vmatprep.subr.mxu0 0.0
    %2870 = vmatpush1.msra.mxu0 %v2782
    %2871 = vmatprep.subr.mxu0 0.0
    %2872 = vmatpush1.msra.mxu0 0.0
    %2873 = vmatprep.subr.mxu0 0.0
    %2874 = vmatpush1.msra.mxu0 0.0
    %2875 = vmatprep.subr.mxu0 0.0
    %2876 = vmatpush1.msra.mxu0 0.0
    %2877 = vmatprep.subr.mxu0 0.0
    %2878 = vmatpush1.msra.mxu0 0.0
    %2879 = vmatprep.subr.mxu0 0.0
    %2880 = vmatpush1.msra.mxu0 0.0
    %2881 = vmatprep.subr.mxu0 0.0
    %2882 = vmatpush1.msra.mxu0 0.0
    %2883 = vmatprep.subr.mxu0 0.0
    %2884 = vmatpush1.msra.mxu0 0.0
    %2885 = vmatprep.subr.mxu0 0.0
    %2886 = vmatpush1.msra.mxu0 0.0
    %2887 = vmatprep.subr.mxu0 0.0
    %2888 = vmatpush1.msra.mxu0 0.0
    %2889 = vmatprep.subr.mxu0 0.0
    %2890 = vmatpush1.msra.mxu0 0.0
    %2891 = vmatprep.subr.mxu0 0.0
    %2892 = vmatpush1.msra.mxu0 0.0
    %2893 = vmatprep.subr.mxu0 0.0
    %2894 = vmatpush1.msra.mxu0 0.0
    %2895 = vmatprep.subr.mxu0 0.0
    %2896 = vmatpush1.msra.mxu0 0.0
    %2897 = vmatprep.subr.mxu0 0.0
    %2898 = vmatpush1.msra.mxu0 0.0
    %2899 = vmatprep.subr.mxu0 0.0
    %2900 = vmatpush1.msra.mxu0 0.0
    %2901 = vmatprep.subr.mxu0 0.0
    %2902 = vmatpush1.msra.mxu0 0.0
    %2903 = vmatprep.subr.mxu0 0.0
    %2904 = vmatpush1.msra.mxu0 0.0
    %2905 = vmatprep.subr.mxu0 0.0
    %2906 = vmatpush1.msra.mxu0 0.0
    %2907 = vmatprep.subr.mxu0 0.0
    %2908 = vmatpush1.msra.mxu0 0.0
    %2909 = vmatprep.subr.mxu0 0.0
    %2910 = vmatpush1.msra.mxu0 0.0
    %2911 = vmatprep.subr.mxu0 0.0
    %2912 = vmatpush1.msra.mxu0 0.0
    %2913 = vmatprep.subr.mxu0 0.0
    %2914 = vmatpush1.msra.mxu0 0.0
    %2915 = vmatprep.subr.mxu0 0.0
    %2916 = vmatpush1.msra.mxu0 0.0
    %2917 = vmatprep.subr.mxu0 0.0
    %2918 = vmatpush1.msra.mxu0 0.0
    %2919 = vmatprep.subr.mxu0 0.0
    %2920 = vmatpush1.msra.mxu0 0.0
    %2921 = vmatprep.subr.mxu0 0.0
    %2922 = vmatpush1.msra.mxu0 0.0
    %2923 = vmatprep.subr.mxu0 0.0
    %2924 = vmatpush1.msra.mxu0 0.0
    %2925 = vmatprep.subr.mxu0 0.0
    %2926 = vmatpush1.msra.mxu0 0.0
    %2927 = vmatprep.mubr.f32.mxu0 0.0
    %2928 = vmatmul.mubr.f32.gmra.mrb[0].mxu0 %v2578
    %v2929 = vpop.f32.mrb[0].mxu0
    %v2930 = vadd.f32 %v2850, %v2929
    %v2931 = vpop.f32.mrb[0].mxu0
    %2932 = vmatprep.mubr.f32.mxu0 0.0
    %2933 = vmatmul.mubr.f32.gmra.mrb[0].mxu0 %v2581
    %v2934 = vpop.f32.mrb[0].mxu0
    %v2935 = vadd.f32 %v2855, %v2934
    %v2936 = vpop.f32.mrb[0].mxu0
    %2937 = vmatprep.mubr.f32.mxu0 0.0
    %2938 = vmatmul.mubr.f32.gmra.mrb[0].mxu0 %v2584
    %v2939 = vpop.f32.mrb[0].mxu0
    %v2940 = vadd.f32 %v2860, %v2939
    %v2941 = vpop.f32.mrb[0].mxu0
    %2942 = vdwg.mxu0
    %v2943 = vmax.f32 %v2733, %v2930
    %v2944 = vmax.f32 %v2738, %v2935
    %v2945 = vmax.f32 %v2743, %v2940
    %v2946 = vld [vmem:[%s6] sm:$0xff]
    %vm2947 = vcmask 162816
    %v2949 = vsel %vm2947, %v2946, 0
    %vm2951 = vcmask 1043456
    %v2953 = vsel %vm2951, %v2945, 0
    %2955 = vmatprep.subr.mxu0 0.0
    %2956 = vmatpush1.msra.mxu0 %v2943
    %2957 = vmatprep.subr.mxu0 0.0
    %2958 = vmatpush1.msra.mxu0 %v2944
    %2959 = vmatprep.subr.mxu0 0.0
    %2960 = vmatpush1.msra.mxu0 %v2953
    %2961 = vmatprep.subr.mxu0 0.0
    %2962 = vmatpush1.msra.mxu0 0.0
    %2963 = vmatprep.subr.mxu0 0.0
    %2964 = vmatpush1.msra.mxu0 0.0
    %2965 = vmatprep.subr.mxu0 0.0
    %2966 = vmatpush1.msra.mxu0 0.0
    %2967 = vmatprep.subr.mxu0 0.0
    %2968 = vmatpush1.msra.mxu0 0.0
    %2969 = vmatprep.subr.mxu0 0.0
    %2970 = vmatpush1.msra.mxu0 0.0
    %2971 = vmatprep.subr.mxu0 0.0
    %2972 = vmatpush1.msra.mxu0 0.0
    %2973 = vmatprep.subr.mxu0 0.0
    %2974 = vmatpush1.msra.mxu0 0.0
    %2975 = vmatprep.subr.mxu0 0.0
    %2976 = vmatpush1.msra.mxu0 0.0
    %2977 = vmatprep.subr.mxu0 0.0
    %2978 = vmatpush1.msra.mxu0 0.0
    %2979 = vmatprep.subr.mxu0 0.0
    %2980 = vmatpush1.msra.mxu0 0.0
    %2981 = vmatprep.subr.mxu0 0.0
    %2982 = vmatpush1.msra.mxu0 0.0
    %2983 = vmatprep.subr.mxu0 0.0
    %2984 = vmatpush1.msra.mxu0 0.0
    %2985 = vmatprep.subr.mxu0 0.0
    %2986 = vmatpush1.msra.mxu0 0.0
    %2987 = vmatprep.subr.mxu0 0.0
    %2988 = vmatpush1.msra.mxu0 0.0
    %2989 = vmatprep.subr.mxu0 0.0
    %2990 = vmatpush1.msra.mxu0 0.0
    %2991 = vmatprep.subr.mxu0 0.0
    %2992 = vmatpush1.msra.mxu0 0.0
    %2993 = vmatprep.subr.mxu0 0.0
    %2994 = vmatpush1.msra.mxu0 0.0
    %2995 = vmatprep.subr.mxu0 0.0
    %2996 = vmatpush1.msra.mxu0 0.0
    %2997 = vmatprep.subr.mxu0 0.0
    %2998 = vmatpush1.msra.mxu0 0.0
    %2999 = vmatprep.subr.mxu0 0.0
    %3000 = vmatpush1.msra.mxu0 0.0
    %3001 = vmatprep.subr.mxu0 0.0
    %3002 = vmatpush1.msra.mxu0 0.0
    %3003 = vmatprep.subr.mxu0 0.0
    %3004 = vmatpush1.msra.mxu0 0.0
    %3005 = vmatprep.subr.mxu0 0.0
    %3006 = vmatpush1.msra.mxu0 0.0
    %3007 = vmatprep.subr.mxu0 0.0
    %3008 = vmatpush1.msra.mxu0 0.0
    %3009 = vmatprep.subr.mxu0 0.0
    %3010 = vmatpush1.msra.mxu0 0.0
    %3011 = vmatprep.subr.mxu0 0.0
    %3012 = vmatpush1.msra.mxu0 0.0
    %3013 = vmatprep.subr.mxu0 0.0
    %3014 = vmatpush1.msra.mxu0 0.0
    %3015 = vmatprep.subr.mxu0 0.0
    %3016 = vmatpush1.msra.mxu0 0.0
    %3017 = vmatprep.subr.mxu0 0.0
    %3018 = vmatpush1.msra.mxu0 0.0
    %3019 = vmatprep.mubr.f32.mxu0 0.0
    %3020 = vmatmul.mubr.f32.gmra.mrb[0].mxu0 %v2949
    %v3021 = vpop.f32.mrb[0].mxu0
    %v3022 = vadd.f32 0.0, %v3021
    %v3023 = vpop.f32.mrb[0].mxu0
    %3024 = vdwg.mxu0
    %s3025 = scalar_lea.vmem %s6, 8
    %v3026 = vld [vmem:[%s3025] sm:$0xff]
    %v3028 = vsel %vm2947, %v3026, 0
    %3030 = vmatprep.subr.mxu0 0.0
    %3031 = vmatpush1.msra.mxu0 %v2943
    %3032 = vmatprep.subr.mxu0 0.0
    %3033 = vmatpush1.msra.mxu0 %v2944
    %3034 = vmatprep.subr.mxu0 0.0
    %3035 = vmatpush1.msra.mxu0 %v2953
    %3036 = vmatprep.subr.mxu0 0.0
    %3037 = vmatpush1.msra.mxu0 0.0
    %3038 = vmatprep.subr.mxu0 0.0
    %3039 = vmatpush1.msra.mxu0 0.0
    %3040 = vmatprep.subr.mxu0 0.0
    %3041 = vmatpush1.msra.mxu0 0.0
    %3042 = vmatprep.subr.mxu0 0.0
    %3043 = vmatpush1.msra.mxu0 0.0
    %3044 = vmatprep.subr.mxu0 0.0
    %3045 = vmatpush1.msra.mxu0 0.0
    %3046 = vmatprep.subr.mxu0 0.0
    %3047 = vmatpush1.msra.mxu0 0.0
    %3048 = vmatprep.subr.mxu0 0.0
    %3049 = vmatpush1.msra.mxu0 0.0
    %3050 = vmatprep.subr.mxu0 0.0
    %3051 = vmatpush1.msra.mxu0 0.0
    %3052 = vmatprep.subr.mxu0 0.0
    %3053 = vmatpush1.msra.mxu0 0.0
    %3054 = vmatprep.subr.mxu0 0.0
    %3055 = vmatpush1.msra.mxu0 0.0
    %3056 = vmatprep.subr.mxu0 0.0
    %3057 = vmatpush1.msra.mxu0 0.0
    %3058 = vmatprep.subr.mxu0 0.0
    %3059 = vmatpush1.msra.mxu0 0.0
    %3060 = vmatprep.subr.mxu0 0.0
    %3061 = vmatpush1.msra.mxu0 0.0
    %3062 = vmatprep.subr.mxu0 0.0
    %3063 = vmatpush1.msra.mxu0 0.0
    %3064 = vmatprep.subr.mxu0 0.0
    %3065 = vmatpush1.msra.mxu0 0.0
    %3066 = vmatprep.subr.mxu0 0.0
    %3067 = vmatpush1.msra.mxu0 0.0
    %3068 = vmatprep.subr.mxu0 0.0
    %3069 = vmatpush1.msra.mxu0 0.0
    %3070 = vmatprep.subr.mxu0 0.0
    %3071 = vmatpush1.msra.mxu0 0.0
    %3072 = vmatprep.subr.mxu0 0.0
    %3073 = vmatpush1.msra.mxu0 0.0
    %3074 = vmatprep.subr.mxu0 0.0
    %3075 = vmatpush1.msra.mxu0 0.0
    %3076 = vmatprep.subr.mxu0 0.0
    %3077 = vmatpush1.msra.mxu0 0.0
    %3078 = vmatprep.subr.mxu0 0.0
    %3079 = vmatpush1.msra.mxu0 0.0
    %3080 = vmatprep.subr.mxu0 0.0
    %3081 = vmatpush1.msra.mxu0 0.0
    %3082 = vmatprep.subr.mxu0 0.0
    %3083 = vmatpush1.msra.mxu0 0.0
    %3084 = vmatprep.subr.mxu0 0.0
    %3085 = vmatpush1.msra.mxu0 0.0
    %3086 = vmatprep.subr.mxu0 0.0
    %3087 = vmatpush1.msra.mxu0 0.0
    %3088 = vmatprep.subr.mxu0 0.0
    %3089 = vmatpush1.msra.mxu0 0.0
    %3090 = vmatprep.subr.mxu0 0.0
    %3091 = vmatpush1.msra.mxu0 0.0
    %3092 = vmatprep.subr.mxu0 0.0
    %3093 = vmatpush1.msra.mxu0 0.0
    %3094 = vmatprep.mubr.f32.mxu0 0.0
    %3095 = vmatmul.mubr.f32.gmra.mrb[0].mxu0 %v3028
    %v3096 = vpop.f32.mrb[0].mxu0
    %v3097 = vadd.f32 0.0, %v3096
    %v3098 = vpop.f32.mrb[0].mxu0
    %3099 = vdwg.mxu0
    %v3100 = vmax.f32 %v3022, %v3097
    %3101 = vst [vmem:[#allocation3] sm:$0xff] %v3100
    %v3102 = vld [vmem:[%s11 + $0x2] ss:$0 sm:$0xff]
    %v3103 = vld [vmem:[#allocation3] sm:$0x3f]
    %v3104 = vld [vmem:[#allocation6] sm:$0xff]
    %v3105 = vld [vmem:[#allocation6 + $0x8] sm:$0xff]
    %v3106 = vld [vmem:[#allocation6 + $0x10] sm:$0xff]
    %v3107 = vld [vmem:[#allocation6 + $0x18] sm:$0xff]
    %v3108 = vld [vmem:[#allocation6 + $0x20] sm:$0xff]
    %v3109 = vld [vmem:[#allocation6 + $0x28] sm:$0xff]
    %v3110 = vld [vmem:[#allocation6 + $0x30] sm:$0xff]
    %v3111 = vld [vmem:[#allocation6 + $0x38] sm:$0xff]
    %v3112 = vld [vmem:[#allocation6 + $0x40] sm:$0xff]
    %v3113 = vld [vmem:[#allocation6 + $0x48] sm:$0xff]
    %v3114 = vld [vmem:[#allocation6 + $0x50] sm:$0xff]
    %v3115 = vld [vmem:[#allocation6 + $0x58] sm:$0xff]
    %v3116 = vld [vmem:[#allocation6 + $0x60] sm:$0xff]
    %v3117 = vld [vmem:[#allocation6 + $0x68] sm:$0xff]
    %v3118 = vld [vmem:[#allocation6 + $0x70] sm:$0xff]
    %v3119 = vld [vmem:[#allocation6 + $0x78] sm:$0xff]
    %v3120 = vld [vmem:[#allocation3 + $0x1] sm:$0x3f]
    %s3121 = scalar_lea.vmem [#allocation6], 128
    %v3122 = vld [vmem:[%s3121] sm:$0xff]
    %v3123 = vld [vmem:[%s3121 + $0x8] sm:$0xff]
    %v3124 = vld [vmem:[%s3121 + $0x10] sm:$0xff]
    %v3125 = vld [vmem:[%s3121 + $0x18] sm:$0xff]
    %v3126 = vld [vmem:[%s3121 + $0x20] sm:$0xff]
    %v3127 = vld [vmem:[%s3121 + $0x28] sm:$0xff]
    %v3128 = vld [vmem:[%s3121 + $0x30] sm:$0xff]
    %v3129 = vld [vmem:[%s3121 + $0x38] sm:$0xff]
    %v3130 = vld [vmem:[%s3121 + $0x40] sm:$0xff]
    %v3131 = vld [vmem:[%s3121 + $0x48] sm:$0xff]
    %v3132 = vld [vmem:[%s3121 + $0x50] sm:$0xff]
    %v3133 = vld [vmem:[%s3121 + $0x58] sm:$0xff]
    %v3134 = vld [vmem:[%s3121 + $0x60] sm:$0xff]
    %v3135 = vld [vmem:[%s3121 + $0x68] sm:$0xff]
    %v3136 = vld [vmem:[%s3121 + $0x70] sm:$0xff]
    %v3137 = vld [vmem:[%s3121 + $0x78] sm:$0xff]
    %3138 = vmatprep.subr.mxu0 0.0
    %3139 = vmatpush1.msra.mxu0 %v3122
    %3140 = vmatprep.subr.mxu0 0.0
    %3141 = vmatpush1.msra.mxu0 %v3123
    %3142 = vmatprep.subr.mxu0 0.0
    %3143 = vmatpush1.msra.mxu0 %v3124
    %3144 = vmatprep.subr.mxu0 0.0
    %3145 = vmatpush1.msra.mxu0 %v3125
    %3146 = vmatprep.subr.mxu0 0.0
    %3147 = vmatpush1.msra.mxu0 %v3126
    %3148 = vmatprep.subr.mxu0 0.0
    %3149 = vmatpush1.msra.mxu0 %v3127
    %3150 = vmatprep.subr.mxu0 0.0
    %3151 = vmatpush1.msra.mxu0 %v3128
    %3152 = vmatprep.subr.mxu0 0.0
    %3153 = vmatpush1.msra.mxu0 %v3129
    %3154 = vmatprep.subr.mxu0 0.0
    %3155 = vmatpush1.msra.mxu0 %v3130
    %3156 = vmatprep.subr.mxu0 0.0
    %3157 = vmatpush1.msra.mxu0 %v3131
    %3158 = vmatprep.subr.mxu0 0.0
    %3159 = vmatpush1.msra.mxu0 %v3132
    %3160 = vmatprep.subr.mxu0 0.0
    %3161 = vmatpush1.msra.mxu0 %v3133
    %3162 = vmatprep.subr.mxu0 0.0
    %3163 = vmatpush1.msra.mxu0 %v3134
    %3164 = vmatprep.subr.mxu0 0.0
    %3165 = vmatpush1.msra.mxu0 %v3135
    %3166 = vmatprep.subr.mxu0 0.0
    %3167 = vmatpush1.msra.mxu0 %v3136
    %3168 = vmatprep.subr.mxu0 0.0
    %3169 = vmatpush1.msra.mxu0 %v3137
    %3170 = vmatprep.subr.mxu0 0.0
    %3171 = vmatpush1.msra.mxu0 0.0
    %3172 = vmatprep.subr.mxu0 0.0
    %3173 = vmatpush1.msra.mxu0 0.0
    %3174 = vmatprep.subr.mxu0 0.0
    %3175 = vmatpush1.msra.mxu0 0.0
    %3176 = vmatprep.subr.mxu0 0.0
    %3177 = vmatpush1.msra.mxu0 0.0
    %3178 = vmatprep.subr.mxu0 0.0
    %3179 = vmatpush1.msra.mxu0 0.0
    %3180 = vmatprep.subr.mxu0 0.0
    %3181 = vmatpush1.msra.mxu0 0.0
    %3182 = vmatprep.subr.mxu0 0.0
    %3183 = vmatpush1.msra.mxu0 0.0
    %3184 = vmatprep.subr.mxu0 0.0
    %3185 = vmatpush1.msra.mxu0 0.0
    %3186 = vmatprep.subr.mxu0 0.0
    %3187 = vmatpush1.msra.mxu0 0.0
    %3188 = vmatprep.subr.mxu0 0.0
    %3189 = vmatpush1.msra.mxu0 0.0
    %3190 = vmatprep.subr.mxu0 0.0
    %3191 = vmatpush1.msra.mxu0 0.0
    %3192 = vmatprep.subr.mxu0 0.0
    %3193 = vmatpush1.msra.mxu0 0.0
    %3194 = vmatprep.subr.mxu0 0.0
    %3195 = vmatpush1.msra.mxu0 0.0
    %3196 = vmatprep.subr.mxu0 0.0
    %3197 = vmatpush1.msra.mxu0 0.0
    %3198 = vmatprep.subr.mxu0 0.0
    %3199 = vmatpush1.msra.mxu0 0.0
    %3200 = vmatprep.subr.mxu0 0.0
    %3201 = vmatpush1.msra.mxu0 0.0
    %3202 = vmatprep.mubr.f32.mxu0 0.0
    %3203 = vmatmul.mubr.f32.gmra.mrb[0].mxu0 %v3120
    %v3204 = vpop.f32.mrb[0].mxu0
    %v3205 = vadd.f32 0.0, %v3204
    %v3206 = vpop.f32.mrb[0].mxu0
    %3207 = vdwg.mxu0
    %3208 = vmatprep.subr.mxu0 0.0
    %3209 = vmatpush1.msra.mxu0 %v3104
    %3210 = vmatprep.subr.mxu0 0.0
    %3211 = vmatpush1.msra.mxu0 %v3105
    %3212 = vmatprep.subr.mxu0 0.0
    %3213 = vmatpush1.msra.mxu0 %v3106
    %3214 = vmatprep.subr.mxu0 0.0
    %3215 = vmatpush1.msra.mxu0 %v3107
    %3216 = vmatprep.subr.mxu0 0.0
    %3217 = vmatpush1.msra.mxu0 %v3108
    %3218 = vmatprep.subr.mxu0 0.0
    %3219 = vmatpush1.msra.mxu0 %v3109
    %3220 = vmatprep.subr.mxu0 0.0
    %3221 = vmatpush1.msra.mxu0 %v3110
    %3222 = vmatprep.subr.mxu0 0.0
    %3223 = vmatpush1.msra.mxu0 %v3111
    %3224 = vmatprep.subr.mxu0 0.0
    %3225 = vmatpush1.msra.mxu0 %v3112
    %3226 = vmatprep.subr.mxu0 0.0
    %3227 = vmatpush1.msra.mxu0 %v3113
    %3228 = vmatprep.subr.mxu0 0.0
    %3229 = vmatpush1.msra.mxu0 %v3114
    %3230 = vmatprep.subr.mxu0 0.0
    %3231 = vmatpush1.msra.mxu0 %v3115
    %3232 = vmatprep.subr.mxu0 0.0
    %3233 = vmatpush1.msra.mxu0 %v3116
    %3234 = vmatprep.subr.mxu0 0.0
    %3235 = vmatpush1.msra.mxu0 %v3117
    %3236 = vmatprep.subr.mxu0 0.0
    %3237 = vmatpush1.msra.mxu0 %v3118
    %3238 = vmatprep.subr.mxu0 0.0
    %3239 = vmatpush1.msra.mxu0 %v3119
    %3240 = vmatprep.subr.mxu0 0.0
    %3241 = vmatpush1.msra.mxu0 0.0
    %3242 = vmatprep.subr.mxu0 0.0
    %3243 = vmatpush1.msra.mxu0 0.0
    %3244 = vmatprep.subr.mxu0 0.0
    %3245 = vmatpush1.msra.mxu0 0.0
    %3246 = vmatprep.subr.mxu0 0.0
    %3247 = vmatpush1.msra.mxu0 0.0
    %3248 = vmatprep.subr.mxu0 0.0
    %3249 = vmatpush1.msra.mxu0 0.0
    %3250 = vmatprep.subr.mxu0 0.0
    %3251 = vmatpush1.msra.mxu0 0.0
    %3252 = vmatprep.subr.mxu0 0.0
    %3253 = vmatpush1.msra.mxu0 0.0
    %3254 = vmatprep.subr.mxu0 0.0
    %3255 = vmatpush1.msra.mxu0 0.0
    %3256 = vmatprep.subr.mxu0 0.0
    %3257 = vmatpush1.msra.mxu0 0.0
    %3258 = vmatprep.subr.mxu0 0.0
    %3259 = vmatpush1.msra.mxu0 0.0
    %3260 = vmatprep.subr.mxu0 0.0
    %3261 = vmatpush1.msra.mxu0 0.0
    %3262 = vmatprep.subr.mxu0 0.0
    %3263 = vmatpush1.msra.mxu0 0.0
    %3264 = vmatprep.subr.mxu0 0.0
    %3265 = vmatpush1.msra.mxu0 0.0
    %3266 = vmatprep.subr.mxu0 0.0
    %3267 = vmatpush1.msra.mxu0 0.0
    %3268 = vmatprep.subr.mxu0 0.0
    %3269 = vmatpush1.msra.mxu0 0.0
    %3270 = vmatprep.subr.mxu0 0.0
    %3271 = vmatpush1.msra.mxu0 0.0
    %3272 = vmatprep.mubr.f32.mxu0 0.0
    %3273 = vmatmul.mubr.f32.gmra.mrb[0].mxu0 %v3103
    %v3274 = vpop.f32.mrb[0].mxu0
    %v3275 = vadd.f32 %v3205, %v3274
    %v3276 = vpop.f32.mrb[0].mxu0
    %3277 = vdwg.mxu0
    %v3278 = vld [vmem:[#allocation3 + $0x2] sm:$0x3f]
    %s3279 = scalar_lea.vmem [#allocation6], 256
    %v3280 = vld [vmem:[%s3279] sm:$0xff]
    %v3281 = vld [vmem:[%s3279 + $0x8] sm:$0xff]
    %v3282 = vld [vmem:[%s3279 + $0x10] sm:$0xff]
    %v3283 = vld [vmem:[%s3279 + $0x18] sm:$0xff]
    %v3284 = vld [vmem:[%s3279 + $0x20] sm:$0xff]
    %v3285 = vld [vmem:[%s3279 + $0x28] sm:$0xff]
    %v3286 = vld [vmem:[%s3279 + $0x30] sm:$0xff]
    %v3287 = vld [vmem:[%s3279 + $0x38] sm:$0xff]
    %v3288 = vld [vmem:[%s3279 + $0x40] sm:$0xff]
    %v3289 = vld [vmem:[%s3279 + $0x48] sm:$0xff]
    %v3290 = vld [vmem:[%s3279 + $0x50] sm:$0xff]
    %v3291 = vld [vmem:[%s3279 + $0x58] sm:$0xff]
    %v3292 = vld [vmem:[%s3279 + $0x60] sm:$0xff]
    %v3293 = vld [vmem:[%s3279 + $0x68] sm:$0xff]
    %v3294 = vld [vmem:[%s3279 + $0x70] sm:$0xff]
    %v3295 = vld [vmem:[%s3279 + $0x78] sm:$0xff]
    %3296 = vmatprep.subr.mxu0 0.0
    %3297 = vmatpush1.msra.mxu0 %v3280
    %3298 = vmatprep.subr.mxu0 0.0
    %3299 = vmatpush1.msra.mxu0 %v3281
    %3300 = vmatprep.subr.mxu0 0.0
    %3301 = vmatpush1.msra.mxu0 %v3282
    %3302 = vmatprep.subr.mxu0 0.0
    %3303 = vmatpush1.msra.mxu0 %v3283
    %3304 = vmatprep.subr.mxu0 0.0
    %3305 = vmatpush1.msra.mxu0 %v3284
    %3306 = vmatprep.subr.mxu0 0.0
    %3307 = vmatpush1.msra.mxu0 %v3285
    %3308 = vmatprep.subr.mxu0 0.0
    %3309 = vmatpush1.msra.mxu0 %v3286
    %3310 = vmatprep.subr.mxu0 0.0
    %3311 = vmatpush1.msra.mxu0 %v3287
    %3312 = vmatprep.subr.mxu0 0.0
    %3313 = vmatpush1.msra.mxu0 %v3288
    %3314 = vmatprep.subr.mxu0 0.0
    %3315 = vmatpush1.msra.mxu0 %v3289
    %3316 = vmatprep.subr.mxu0 0.0
    %3317 = vmatpush1.msra.mxu0 %v3290
    %3318 = vmatprep.subr.mxu0 0.0
    %3319 = vmatpush1.msra.mxu0 %v3291
    %3320 = vmatprep.subr.mxu0 0.0
    %3321 = vmatpush1.msra.mxu0 %v3292
    %3322 = vmatprep.subr.mxu0 0.0
    %3323 = vmatpush1.msra.mxu0 %v3293
    %3324 = vmatprep.subr.mxu0 0.0
    %3325 = vmatpush1.msra.mxu0 %v3294
    %3326 = vmatprep.subr.mxu0 0.0
    %3327 = vmatpush1.msra.mxu0 %v3295
    %3328 = vmatprep.subr.mxu0 0.0
    %3329 = vmatpush1.msra.mxu0 0.0
    %3330 = vmatprep.subr.mxu0 0.0
    %3331 = vmatpush1.msra.mxu0 0.0
    %3332 = vmatprep.subr.mxu0 0.0
    %3333 = vmatpush1.msra.mxu0 0.0
    %3334 = vmatprep.subr.mxu0 0.0
    %3335 = vmatpush1.msra.mxu0 0.0
    %3336 = vmatprep.subr.mxu0 0.0
    %3337 = vmatpush1.msra.mxu0 0.0
    %3338 = vmatprep.subr.mxu0 0.0
    %3339 = vmatpush1.msra.mxu0 0.0
    %3340 = vmatprep.subr.mxu0 0.0
    %3341 = vmatpush1.msra.mxu0 0.0
    %3342 = vmatprep.subr.mxu0 0.0
    %3343 = vmatpush1.msra.mxu0 0.0
    %3344 = vmatprep.subr.mxu0 0.0
    %3345 = vmatpush1.msra.mxu0 0.0
    %3346 = vmatprep.subr.mxu0 0.0
    %3347 = vmatpush1.msra.mxu0 0.0
    %3348 = vmatprep.subr.mxu0 0.0
    %3349 = vmatpush1.msra.mxu0 0.0
    %3350 = vmatprep.subr.mxu0 0.0
    %3351 = vmatpush1.msra.mxu0 0.0
    %3352 = vmatprep.subr.mxu0 0.0
    %3353 = vmatpush1.msra.mxu0 0.0
    %3354 = vmatprep.subr.mxu0 0.0
    %3355 = vmatpush1.msra.mxu0 0.0
    %3356 = vmatprep.subr.mxu0 0.0
    %3357 = vmatpush1.msra.mxu0 0.0
    %3358 = vmatprep.subr.mxu0 0.0
    %3359 = vmatpush1.msra.mxu0 0.0
    %3360 = vmatprep.mubr.f32.mxu0 0.0
    %3361 = vmatmul.mubr.f32.gmra.mrb[0].mxu0 %v3278
    %v3362 = vpop.f32.mrb[0].mxu0
    %v3363 = vadd.f32 0.0, %v3362
    %v3364 = vpop.f32.mrb[0].mxu0
    %3365 = vdwg.mxu0
    %v3366 = vadd.f32 %v3275, %v3363
    %v3367 = vadd.f32 %v3366, %v3102
    %v3368 = vld [vmem:[%s8] sm:$0x3]
    %vm3369 = vcmask 48128
    %v3371 = vsel %vm3369, %v3368, 0
    %v3374 = vsel %vm1535, %v3367, 0
    %3376 = vmatprep.subr.mxu0 0.0
    %3377 = vmatpush1.msra.mxu0 %v3374
    %3378 = vmatprep.subr.mxu0 0.0
    %3379 = vmatpush1.msra.mxu0 0.0
    %3380 = vmatprep.subr.mxu0 0.0
    %3381 = vmatpush1.msra.mxu0 0.0
    %3382 = vmatprep.subr.mxu0 0.0
    %3383 = vmatpush1.msra.mxu0 0.0
    %3384 = vmatprep.subr.mxu0 0.0
    %3385 = vmatpush1.msra.mxu0 0.0
    %3386 = vmatprep.subr.mxu0 0.0
    %3387 = vmatpush1.msra.mxu0 0.0
    %3388 = vmatprep.subr.mxu0 0.0
    %3389 = vmatpush1.msra.mxu0 0.0
    %3390 = vmatprep.subr.mxu0 0.0
    %3391 = vmatpush1.msra.mxu0 0.0
    %3392 = vmatprep.subr.mxu0 0.0
    %3393 = vmatpush1.msra.mxu0 0.0
    %3394 = vmatprep.subr.mxu0 0.0
    %3395 = vmatpush1.msra.mxu0 0.0
    %3396 = vmatprep.subr.mxu0 0.0
    %3397 = vmatpush1.msra.mxu0 0.0
    %3398 = vmatprep.subr.mxu0 0.0
    %3399 = vmatpush1.msra.mxu0 0.0
    %3400 = vmatprep.subr.mxu0 0.0
    %3401 = vmatpush1.msra.mxu0 0.0
    %3402 = vmatprep.subr.mxu0 0.0
    %3403 = vmatpush1.msra.mxu0 0.0
    %3404 = vmatprep.subr.mxu0 0.0
    %3405 = vmatpush1.msra.mxu0 0.0
    %3406 = vmatprep.subr.mxu0 0.0
    %3407 = vmatpush1.msra.mxu0 0.0
    %3408 = vmatprep.subr.mxu0 0.0
    %3409 = vmatpush1.msra.mxu0 0.0
    %3410 = vmatprep.subr.mxu0 0.0
    %3411 = vmatpush1.msra.mxu0 0.0
    %3412 = vmatprep.subr.mxu0 0.0
    %3413 = vmatpush1.msra.mxu0 0.0
    %3414 = vmatprep.subr.mxu0 0.0
    %3415 = vmatpush1.msra.mxu0 0.0
    %3416 = vmatprep.subr.mxu0 0.0
    %3417 = vmatpush1.msra.mxu0 0.0
    %3418 = vmatprep.subr.mxu0 0.0
    %3419 = vmatpush1.msra.mxu0 0.0
    %3420 = vmatprep.subr.mxu0 0.0
    %3421 = vmatpush1.msra.mxu0 0.0
    %3422 = vmatprep.subr.mxu0 0.0
    %3423 = vmatpush1.msra.mxu0 0.0
    %3424 = vmatprep.subr.mxu0 0.0
    %3425 = vmatpush1.msra.mxu0 0.0
    %3426 = vmatprep.subr.mxu0 0.0
    %3427 = vmatpush1.msra.mxu0 0.0
    %3428 = vmatprep.subr.mxu0 0.0
    %3429 = vmatpush1.msra.mxu0 0.0
    %3430 = vmatprep.subr.mxu0 0.0
    %3431 = vmatpush1.msra.mxu0 0.0
    %3432 = vmatprep.subr.mxu0 0.0
    %3433 = vmatpush1.msra.mxu0 0.0
    %3434 = vmatprep.subr.mxu0 0.0
    %3435 = vmatpush1.msra.mxu0 0.0
    %3436 = vmatprep.subr.mxu0 0.0
    %3437 = vmatpush1.msra.mxu0 0.0
    %3438 = vmatprep.subr.mxu0 0.0
    %3439 = vmatpush1.msra.mxu0 0.0
    %3440 = vmatprep.mubr.f32.mxu0 0.0
    %3441 = vmatmul.mubr.f32.gmra.mrb[0].mxu0 %v3371
    %v3442 = vpop.f32.mrb[0].mxu0
    %v3443 = vadd.f32 0.0, %v3442
    %v3444 = vpop.f32.mrb[0].mxu0
    %3445 = vdwg.mxu0
    %v3446 = vld [vmem:[%s9] sm:$0xff]
    %v3447 = vld [vmem:[%s9 + $0x8] sm:$0xff]
    %v3448 = vld [vmem:[%s9 + $0x10] sm:$0xff]
    %v3449 = vld [vmem:[%s9 + $0x18] sm:$0xff]
    %v3450 = vld [vmem:[%s9 + $0x20] sm:$0xff]
    %v3451 = vld [vmem:[%s9 + $0x28] sm:$0xff]
    %v3452 = vld [vmem:[%s9 + $0x30] sm:$0xff]
    %v3453 = vld [vmem:[%s9 + $0x38] sm:$0xff]
    %v3454 = vld [vmem:[%s9 + $0x40] sm:$0xff]
    %v3455 = vld [vmem:[%s9 + $0x48] sm:$0xff]
    %v3456 = vld [vmem:[%s9 + $0x50] sm:$0xff]
    %v3457 = vld [vmem:[%s9 + $0x58] sm:$0xff]
    %v3458 = vld [vmem:[%s9 + $0x60] sm:$0xff]
    %v3459 = vld [vmem:[%s9 + $0x68] sm:$0xff]
    %v3460 = vld [vmem:[%s9 + $0x70] sm:$0xff]
    %v3461 = vld [vmem:[%s9 + $0x78] sm:$0xff]
    %3462 = vmatprep.subr.mxu0 0.0
    %3463 = vmatpush1.msra.mxu0 %v3446
    %3464 = vmatprep.subr.mxu0 0.0
    %3465 = vmatpush1.msra.mxu0 %v3447
    %3466 = vmatprep.subr.mxu0 0.0
    %3467 = vmatpush1.msra.mxu0 %v3448
    %3468 = vmatprep.subr.mxu0 0.0
    %3469 = vmatpush1.msra.mxu0 %v3449
    %3470 = vmatprep.subr.mxu0 0.0
    %3471 = vmatpush1.msra.mxu0 %v3450
    %3472 = vmatprep.subr.mxu0 0.0
    %3473 = vmatpush1.msra.mxu0 %v3451
    %3474 = vmatprep.subr.mxu0 0.0
    %3475 = vmatpush1.msra.mxu0 %v3452
    %3476 = vmatprep.subr.mxu0 0.0
    %3477 = vmatpush1.msra.mxu0 %v3453
    %3478 = vmatprep.subr.mxu0 0.0
    %3479 = vmatpush1.msra.mxu0 %v3454
    %3480 = vmatprep.subr.mxu0 0.0
    %3481 = vmatpush1.msra.mxu0 %v3455
    %3482 = vmatprep.subr.mxu0 0.0
    %3483 = vmatpush1.msra.mxu0 %v3456
    %3484 = vmatprep.subr.mxu0 0.0
    %3485 = vmatpush1.msra.mxu0 %v3457
    %3486 = vmatprep.subr.mxu0 0.0
    %3487 = vmatpush1.msra.mxu0 %v3458
    %3488 = vmatprep.subr.mxu0 0.0
    %3489 = vmatpush1.msra.mxu0 %v3459
    %3490 = vmatprep.subr.mxu0 0.0
    %3491 = vmatpush1.msra.mxu0 %v3460
    %3492 = vmatprep.subr.mxu0 0.0
    %3493 = vmatpush1.msra.mxu0 %v3461
    %3494 = vmatprep.subr.mxu0 0.0
    %3495 = vmatpush1.msra.mxu0 0.0
    %3496 = vmatprep.subr.mxu0 0.0
    %3497 = vmatpush1.msra.mxu0 0.0
    %3498 = vmatprep.subr.mxu0 0.0
    %3499 = vmatpush1.msra.mxu0 0.0
    %3500 = vmatprep.subr.mxu0 0.0
    %3501 = vmatpush1.msra.mxu0 0.0
    %3502 = vmatprep.subr.mxu0 0.0
    %3503 = vmatpush1.msra.mxu0 0.0
    %3504 = vmatprep.subr.mxu0 0.0
    %3505 = vmatpush1.msra.mxu0 0.0
    %3506 = vmatprep.subr.mxu0 0.0
    %3507 = vmatpush1.msra.mxu0 0.0
    %3508 = vmatprep.subr.mxu0 0.0
    %3509 = vmatpush1.msra.mxu0 0.0
    %3510 = vmatprep.subr.mxu0 0.0
    %3511 = vmatpush1.msra.mxu0 0.0
    %3512 = vmatprep.subr.mxu0 0.0
    %3513 = vmatpush1.msra.mxu0 0.0
    %3514 = vmatprep.subr.mxu0 0.0
    %3515 = vmatpush1.msra.mxu0 0.0
    %3516 = vmatprep.subr.mxu0 0.0
    %3517 = vmatpush1.msra.mxu0 0.0
    %3518 = vmatprep.subr.mxu0 0.0
    %3519 = vmatpush1.msra.mxu0 0.0
    %3520 = vmatprep.subr.mxu0 0.0
    %3521 = vmatpush1.msra.mxu0 0.0
    %3522 = vmatprep.subr.mxu0 0.0
    %3523 = vmatpush1.msra.mxu0 0.0
    %3524 = vmatprep.subr.mxu0 0.0
    %3525 = vmatpush1.msra.mxu0 0.0
    %3526 = vmatprep.mubr.f32.mxu0 0.0
    %3527 = vmatmul.mubr.f32.gmra.mrb[0].mxu0 %v3443
    %v3528 = vpop.f32.mrb[0].mxu0
    %v3529 = vadd.f32 0.0, %v3528
    %v3530 = vpop.f32.mrb[0].mxu0
    %3531 = vdwg.mxu0
    %v3532 = vld [vmem:[%s11 + $0x3] ss:$0 sm:$0xff]
    %v3533 = vadd.f32 %v3529, %v3532
    %vm3534 = vcmask 254976
    %v3535 = vsel %vm3534, %v3533, 0.0
    %v3536 = vrot.slane %v3535, 4
    %v3537 = vadd.f32 %v3535, %v3536
    %v3538 = vrot.slane %v3537, 2
    %v3539 = vadd.f32 %v3537, %v3538
    %v3540 = vrot.slane %v3539, 1
    %v3541 = vadd.f32 %v3539, %v3540
    %v3542 = vrcp.pop 2.0
    %v3543 = vmul.f32 %v3541, %v3542
    %v3544 = vsub.f32 %v3533, %v3543
    %v3545 = vmul.f32 %v3544, %v3544
    %v3546 = vsel %vm3534, %v3545, 0.0
    %v3547 = vrot.slane %v3546, 4
    %v3548 = vadd.f32 %v3546, %v3547
    %v3549 = vrot.slane %v3548, 2
    %v3550 = vadd.f32 %v3548, %v3549
    %v3551 = vrot.slane %v3550, 1
    %v3552 = vadd.f32 %v3550, %v3551
    %v3553 = vmul.f32 %v3552, %v3542
    %v3554 = vadd.f32 %v3553, 1e-05
    %v3555 = vrsqrt.pop %v3554
    %v3556 = vmul.f32 %v3544, %v3555
    %v3557 = vld [vmem:[%s11 + $0x4] ss:$0 sm:$0xff]
    %v3558 = vmul.f32 %v3556, %v3557
    %v3559 = vld [vmem:[%s11 + $0x5] ss:$0 sm:$0xff]
    %v3560 = vadd.f32 %v3558, %v3559
    %v3561 = vmax.f32 %v3560, 0.0
    %v3562 = vld [vmem:[%s10] sm:$0xff]
    %v3563 = vld [vmem:[%s10 + $0x8] sm:$0xff]
    %v3564 = vld [vmem:[%s10 + $0x10] sm:$0xff]
    %v3565 = vld [vmem:[%s10 + $0x18] sm:$0xff]
    %v3566 = vld [vmem:[%s11 + $0x6] ss:$0 sm:$0xff]
    %v3568 = vsel %vm2576, %v3561, 0
    %3570 = vmatprep.subr.mxu0 0.0
    %3571 = vmatpush1.msra.mxu0 %v3562
    %3572 = vmatprep.subr.mxu0 0.0
    %3573 = vmatpush1.msra.mxu0 %v3563
    %3574 = vmatprep.subr.mxu0 0.0
    %3575 = vmatpush1.msra.mxu0 %v3564
    %3576 = vmatprep.subr.mxu0 0.0
    %3577 = vmatpush1.msra.mxu0 %v3565
    %3578 = vmatprep.subr.mxu0 0.0
    %3579 = vmatpush1.msra.mxu0 0.0
    %3580 = vmatprep.subr.mxu0 0.0
    %3581 = vmatpush1.msra.mxu0 0.0
    %3582 = vmatprep.subr.mxu0 0.0
    %3583 = vmatpush1.msra.mxu0 0.0
    %3584 = vmatprep.subr.mxu0 0.0
    %3585 = vmatpush1.msra.mxu0 0.0
    %3586 = vmatprep.subr.mxu0 0.0
    %3587 = vmatpush1.msra.mxu0 0.0
    %3588 = vmatprep.subr.mxu0 0.0
    %3589 = vmatpush1.msra.mxu0 0.0
    %3590 = vmatprep.subr.mxu0 0.0
    %3591 = vmatpush1.msra.mxu0 0.0
    %3592 = vmatprep.subr.mxu0 0.0
    %3593 = vmatpush1.msra.mxu0 0.0
    %3594 = vmatprep.subr.mxu0 0.0
    %3595 = vmatpush1.msra.mxu0 0.0
    %3596 = vmatprep.subr.mxu0 0.0
    %3597 = vmatpush1.msra.mxu0 0.0
    %3598 = vmatprep.subr.mxu0 0.0
    %3599 = vmatpush1.msra.mxu0 0.0
    %3600 = vmatprep.subr.mxu0 0.0
    %3601 = vmatpush1.msra.mxu0 0.0
    %3602 = vmatprep.subr.mxu0 0.0
    %3603 = vmatpush1.msra.mxu0 0.0
    %3604 = vmatprep.subr.mxu0 0.0
    %3605 = vmatpush1.msra.mxu0 0.0
    %3606 = vmatprep.subr.mxu0 0.0
    %3607 = vmatpush1.msra.mxu0 0.0
    %3608 = vmatprep.subr.mxu0 0.0
    %3609 = vmatpush1.msra.mxu0 0.0
    %3610 = vmatprep.subr.mxu0 0.0
    %3611 = vmatpush1.msra.mxu0 0.0
    %3612 = vmatprep.subr.mxu0 0.0
    %3613 = vmatpush1.msra.mxu0 0.0
    %3614 = vmatprep.subr.mxu0 0.0
    %3615 = vmatpush1.msra.mxu0 0.0
    %3616 = vmatprep.subr.mxu0 0.0
    %3617 = vmatpush1.msra.mxu0 0.0
    %3618 = vmatprep.subr.mxu0 0.0
    %3619 = vmatpush1.msra.mxu0 0.0
    %3620 = vmatprep.subr.mxu0 0.0
    %3621 = vmatpush1.msra.mxu0 0.0
    %3622 = vmatprep.subr.mxu0 0.0
    %3623 = vmatpush1.msra.mxu0 0.0
    %3624 = vmatprep.subr.mxu0 0.0
    %3625 = vmatpush1.msra.mxu0 0.0
    %3626 = vmatprep.subr.mxu0 0.0
    %3627 = vmatpush1.msra.mxu0 0.0
    %3628 = vmatprep.subr.mxu0 0.0
    %3629 = vmatpush1.msra.mxu0 0.0
    %3630 = vmatprep.subr.mxu0 0.0
    %3631 = vmatpush1.msra.mxu0 0.0
    %3632 = vmatprep.subr.mxu0 0.0
    %3633 = vmatpush1.msra.mxu0 0.0
    %3634 = vmatprep.mubr.f32.mxu0 0.0
    %3635 = vmatmul.mubr.f32.gmra.mrb[0].mxu0 %v3568
    %v3636 = vpop.f32.mrb[0].mxu0
    %v3637 = vadd.f32 %v3566, %v3636
    %v3638 = vpop.f32.mrb[0].mxu0
    %3639 = vdwg.mxu0
    %vm3640 = vcmask 17408
    %v3641 = vsel %vm3640, %v3637, -inf
    %3642 = vmax.xlane.f32.xlu0 %v3641
    %v3643 = vpop.xlane.xlu0 %3642
    %v3644 = vsub.f32 %v3637, %v3643
    %v3645 = vmul.f32 %v3644, 1.442695
    %v3646 = vpow.pop %v3645
    %v3647 = vsel %vm3640, %v3646, 0.0
    %3648 = vadd.xlane.f32.xlu0 %v3647
    %v3649 = vpop.xlane.xlu0 %3648
    %v3650 = vrcp.pop %v3649
    %v3651 = vmul.f32 %v3646, %v3650
    %v3652 = vmul.f32 %v3637, 1.442695
    %v3653 = vpow.pop %v3652
    %3655 = vrot.lane.b32.xlu0 %v3529, 108
    %v3656 = vpop.permute.xlu0 %3655
    %vm3658 = vcmask 23552
    %v3659 = vsel %vm3658, %v3651, %v3637
    %vm3660 = vcmask 72704
    %v3661 = vsel %vm3660, %v3659, %v3653
    %vm3662 = vcmask 97280
    %v3663 = vsel %vm3662, %v3661, %v3656
    %vm3664 = vcmask 621568
    %v3665 = vsel %vm3664, %v3663, 0.0
    %3666 = vst [vmem:[%s12] sm:$0x3] %v3665
    // Predicated region
    $region58: #{convolutional_mdn_forward.1} parent=1 // pred_check
      _
    $region59: #{convolutional_mdn_forward.1} parent=1 // pred_check_branch
      %3668 = sbr.rel (0) target = $region61
    $region60: #{convolutional_mdn_forward.1} parent=1 // pred_region
      _
    $region61: #{convolutional_mdn_forward.1} parent=1 // pred_fallthru
      _
    // Predicated region
    $region62: #{convolutional_mdn_forward.1} parent=1 // pred_check
      _
    $region63: #{convolutional_mdn_forward.1} parent=1 // pred_check_branch
      %3670 = sbr.rel (0) target = $region65
    $region64: #{convolutional_mdn_forward.1} parent=1 // pred_region
      _
    $region65: #{convolutional_mdn_forward.1} parent=1 // pred_fallthru
      _
    %3671 = vsyncpa [#allocation5], 1
    %3672 = vsyncpa [#allocation7], 1

</llo_original>
